<compile_context>
chip_gen: v6e
topology: v6e:2x2x1
jax: 0.10.0
libtpu: 0.0.40
codegen_flags: <defaults>
</compile_context>

<pallas_src>
import functools

import jax
import jax.numpy as jnp
from jax.experimental import pallas as pl
from jax.experimental.pallas import tpu as pltpu


def _round_up(x, m):
    return ((x + m - 1) // m) * m


_VMEM_LIMIT = 48 * 1024 * 1024  # > 32 MiB default scoped, < v7x 64 MiB physical


# -----------------------------------------------------------------------------
# Kernel 1: K-tiled matmul + bias (patch-embed im2col matmul, final `last` head)
# -----------------------------------------------------------------------------
def _matmul_bias_kernel(x_ref, w_ref, b_ref, o_ref, acc_ref):
    @pl.when(pl.program_id(2) == 0)
    def _init():
        acc_ref[...] = jnp.zeros_like(acc_ref)

    acc_ref[...] += jnp.dot(x_ref[...].astype(jnp.bfloat16), w_ref[...],
                            preferred_element_type=jnp.float32)

    @pl.when(pl.program_id(2) == pl.num_programs(2) - 1)
    def _finalize():
        o_ref[...] = (acc_ref[...] + b_ref[...].astype(jnp.float32)).astype(o_ref.dtype)


def pallas_matmul_bias(x, w, b):
    """x: (M, K) f32, w: (K, N) bf16, b: (1, N) f32 -> (M, N) f32."""
    M, K = x.shape
    N = w.shape[1]
    # Row tiling: keep the whole (8-aligned) row range in one tile when small,
    # only fall back to 128-row tiles (+pad) for large M.
    Mp = _round_up(M, 8)
    if Mp <= 512:
        tm = Mp
    else:
        tm = 128
        Mp = _round_up(M, tm)
    tn = 256 if (N > 256 and N % 256 == 0) else N
    tk = 512 if (K > 512 and K % 512 == 0) else K
    if Mp != M:
        x = jnp.pad(x, ((0, Mp - M), (0, 0)))
    out = pl.pallas_call(
        _matmul_bias_kernel,
        out_shape=jax.ShapeDtypeStruct((Mp, N), jnp.float32),
        grid=(Mp // tm, N // tn, K // tk),
        in_specs=[
            pl.BlockSpec((tm, tk), lambda i, j, k: (i, k)),
            pl.BlockSpec((tk, tn), lambda i, j, k: (k, j)),
            pl.BlockSpec((1, tn), lambda i, j, k: (0, j)),
        ],
        out_specs=pl.BlockSpec((tm, tn), lambda i, j, k: (i, j)),
        scratch_shapes=[pltpu.VMEM((tm, tn), jnp.float32)],
        compiler_params=pltpu.CompilerParams(
            dimension_semantics=("parallel", "parallel", "arbitrary"),
            vmem_limit_bytes=_VMEM_LIMIT),
    )(x, w, b)
    return out[:M] if Mp != M else out


# -----------------------------------------------------------------------------
# Shared in-kernel LayerNorm (f32 VPU math)
# -----------------------------------------------------------------------------
def _layernorm_f32(x, g_ref, b_ref, eps):
    mean = jnp.mean(x, axis=-1, keepdims=True)
    xc = x - mean
    var = jnp.mean(xc * xc, axis=-1, keepdims=True)
    y = xc * jax.lax.rsqrt(var + eps)
    return y * g_ref[...].astype(jnp.float32) + b_ref[...].astype(jnp.float32)


# -----------------------------------------------------------------------------
# Kernel 2: fused LN1 + QKV + multi-head attention + output proj + residual.
# Grid over batch ("parallel").  Per-head weights arrive pre-split as
# (H, D, hd) / (H, hd, D), so no lane slicing / concat happens in-kernel and
# the qkv intermediate never goes to HBM.
# -----------------------------------------------------------------------------
def _attn_block_kernel(x_ref, g_ref, b_ref, wq_ref, wk_ref, wv_ref,
                       bq_ref, bk_ref, bv_ref, wp_ref, bp_ref, o_ref, *,
                       num_heads, scale, eps):
    x = x_ref[0]                                        # (S, D) f32 residual
    y = _layernorm_f32(x, g_ref, b_ref, eps).astype(jnp.bfloat16)
    acc = x + bp_ref[...].astype(jnp.float32)           # residual + proj bias
    for h in range(num_heads):                           # static unroll, leading-axis indexing only
        q = jnp.dot(y, wq_ref[h], preferred_element_type=jnp.float32)
        q = q + bq_ref[h].astype(jnp.float32)            # (S, hd)
        k = jnp.dot(y, wk_ref[h], preferred_element_type=jnp.float32)
        k = k + bk_ref[h].astype(jnp.float32)
        v = jnp.dot(y, wv_ref[h], preferred_element_type=jnp.float32)
        v = v + bv_ref[h].astype(jnp.float32)
        # scores: contract on the shared head dim (no explicit k.T materialization)
        s = jax.lax.dot_general(q.astype(jnp.bfloat16), k.astype(jnp.bfloat16),
                                (((1,), (1,)), ((), ())),
                                preferred_element_type=jnp.float32) * scale
        s = s - jnp.max(s, axis=-1, keepdims=True)
        p = jnp.exp(s)
        p = p * pl.reciprocal(jnp.sum(p, axis=-1, keepdims=True), approx=True)
        o = jnp.dot(p.astype(jnp.bfloat16), v.astype(jnp.bfloat16),
                    preferred_element_type=jnp.float32)  # (S, hd)
        # accumulate the output projection per head (no concat)
        acc = acc + jnp.dot(o.astype(jnp.bfloat16), wp_ref[h],
                            preferred_element_type=jnp.float32)
    o_ref[0] = acc.astype(o_ref.dtype)


def pallas_attn_block(x, g, b, wq, wk, wv, bq, bk, bv, wp, bp, *,
                      num_heads, eps=1e-6):
    B, S, D = x.shape
    hd = D // num_heads
    scale = 1.0 / (hd ** 0.5)
    kernel = functools.partial(_attn_block_kernel, num_heads=num_heads,
                               scale=scale, eps=eps)
    return pl.pallas_call(
        kernel,
        out_shape=jax.ShapeDtypeStruct((B, S, D), x.dtype),
        grid=(B,),
        in_specs=[
            pl.BlockSpec((1, S, D), lambda i: (i, 0, 0)),
            pl.BlockSpec((1, D), lambda i: (0, 0)),
            pl.BlockSpec((1, D), lambda i: (0, 0)),
            pl.BlockSpec((num_heads, D, hd), lambda i: (0, 0, 0)),
            pl.BlockSpec((num_heads, D, hd), lambda i: (0, 0, 0)),
            pl.BlockSpec((num_heads, D, hd), lambda i: (0, 0, 0)),
            pl.BlockSpec((num_heads, 1, hd), lambda i: (0, 0, 0)),
            pl.BlockSpec((num_heads, 1, hd), lambda i: (0, 0, 0)),
            pl.BlockSpec((num_heads, 1, hd), lambda i: (0, 0, 0)),
            pl.BlockSpec((num_heads, hd, D), lambda i: (0, 0, 0)),
            pl.BlockSpec((1, D), lambda i: (0, 0)),
        ],
        out_specs=pl.BlockSpec((1, S, D), lambda i: (i, 0, 0)),
        compiler_params=pltpu.CompilerParams(
            dimension_semantics=("parallel",),
            vmem_limit_bytes=_VMEM_LIMIT),
    )(x, g, b, wq, wk, wv, bq, bk, bv, wp, bp)


# -----------------------------------------------------------------------------
# Kernel 3: fused LN2 + fc1 + GELU + fc2 + residual (grid over batch).
# The (S, 4*D) MLP intermediate stays in VMEM.
# -----------------------------------------------------------------------------
def _mlp_block_kernel(x_ref, g_ref, b_ref, w1_ref, b1_ref, w2_ref, b2_ref,
                      o_ref, *, eps):
    x = x_ref[0]                                        # (S, D) f32
    y = _layernorm_f32(x, g_ref, b_ref, eps)
    h = jnp.dot(y.astype(jnp.bfloat16), w1_ref[...],
                preferred_element_type=jnp.float32)
    h = h + b1_ref[...].astype(jnp.float32)
    # TODO(synk): torch.nn.GELU default is exact erf; tanh approx used for Mosaic lowering.
    h = jax.nn.gelu(h, approximate=True)
    out = jnp.dot(h.astype(jnp.bfloat16), w2_ref[...],
                  preferred_element_type=jnp.float32)
    out = out + b2_ref[...].astype(jnp.float32)
    o_ref[0] = (x + out).astype(o_ref.dtype)


def pallas_mlp_block(x, g, b, w1, b1, w2, b2, eps=1e-6):
    B, S, D = x.shape
    H = w1.shape[1]
    kernel = functools.partial(_mlp_block_kernel, eps=eps)
    return pl.pallas_call(
        kernel,
        out_shape=jax.ShapeDtypeStruct((B, S, D), x.dtype),
        grid=(B,),
        in_specs=[
            pl.BlockSpec((1, S, D), lambda i: (i, 0, 0)),
            pl.BlockSpec((1, D), lambda i: (0, 0)),
            pl.BlockSpec((1, D), lambda i: (0, 0)),
            pl.BlockSpec((D, H), lambda i: (0, 0)),
            pl.BlockSpec((1, H), lambda i: (0, 0)),
            pl.BlockSpec((H, D), lambda i: (0, 0)),
            pl.BlockSpec((1, D), lambda i: (0, 0)),
        ],
        out_specs=pl.BlockSpec((1, S, D), lambda i: (i, 0, 0)),
        compiler_params=pltpu.CompilerParams(
            dimension_semantics=("parallel",),
            vmem_limit_bytes=_VMEM_LIMIT),
    )(x, g, b, w1, b1, w2, b2)


# -----------------------------------------------------------------------------
# Synthetic ViT + "last" head parameters (deterministic init; weights bf16,
# attention weights stored per-head so the head split never happens in-kernel)
# -----------------------------------------------------------------------------
def init_params(key, *, in_chans, patch, embed_dim, depth, num_heads, mlp_ratio,
                num_patches, out_dim):
    wdt = jnp.bfloat16
    hd = embed_dim // num_heads

    def nrm(k, shape, scale=0.02):
        return (scale * jax.random.normal(k, shape)).astype(jnp.float32)

    keys = iter(jax.random.split(key, 8 + depth * 12))
    head_n = _round_up(out_dim, 128)  # lane-dense head output (sliced in wrapper)
    last_w = jnp.zeros((embed_dim, head_n), jnp.float32)
    last_w = last_w.at[:, :out_dim].set(nrm(next(keys), (embed_dim, out_dim)))
    params = {
        "patch_w": nrm(next(keys), (in_chans * patch * patch, embed_dim)).astype(wdt),
        "patch_b": jnp.zeros((1, embed_dim), jnp.float32),
        "cls_token": nrm(next(keys), (1, 1, embed_dim)),
        "pos_embed": nrm(next(keys), (1, num_patches + 1, embed_dim)),
        "last_w": last_w.astype(wdt),
        "last_b": jnp.zeros((1, head_n), jnp.float32),
    }
    hidden = int(embed_dim * mlp_ratio)

    def split_heads(w):  # (D, D) column-split -> (H, D, hd)
        return w.reshape(embed_dim, num_heads, hd).transpose(1, 0, 2)

    blocks = []
    for _ in range(depth):
        qkv_w = nrm(next(keys), (embed_dim, 3 * embed_dim))
        proj_w = nrm(next(keys), (embed_dim, embed_dim))
        blk = {
            "ln1_g": jnp.ones((1, embed_dim), jnp.float32),
            "ln1_b": jnp.zeros((1, embed_dim), jnp.float32),
            "wq": split_heads(qkv_w[:, :embed_dim]).astype(wdt),
            "wk": split_heads(qkv_w[:, embed_dim:2 * embed_dim]).astype(wdt),
            "wv": split_heads(qkv_w[:, 2 * embed_dim:]).astype(wdt),
            "bq": jnp.zeros((num_heads, 1, hd), jnp.float32),
            "bk": jnp.zeros((num_heads, 1, hd), jnp.float32),
            "bv": jnp.zeros((num_heads, 1, hd), jnp.float32),
            "wp": proj_w.reshape(num_heads, hd, embed_dim).astype(wdt),
            "bp": jnp.zeros((1, embed_dim), jnp.float32),
            "ln2_g": jnp.ones((1, embed_dim), jnp.float32),
            "ln2_b": jnp.zeros((1, embed_dim), jnp.float32),
            "fc1_w": nrm(next(keys), (embed_dim, hidden)).astype(wdt),
            "fc1_b": jnp.zeros((1, hidden), jnp.float32),
            "fc2_w": nrm(next(keys), (hidden, embed_dim)).astype(wdt),
            "fc2_b": jnp.zeros((1, embed_dim), jnp.float32),
        }
        blocks.append(blk)
    params["blocks"] = blocks
    return params


# -----------------------------------------------------------------------------
# Forward pass (thin JAX glue; hot paths in Pallas)
# -----------------------------------------------------------------------------
def patchify(x, patch):
    """NCHW -> (B, num_patches, C*patch*patch), matching Conv2d(k=p, s=p) im2col."""
    B, C, H, W = x.shape
    hp, wp = H // patch, W // patch
    x = x.reshape(B, C, hp, patch, wp, patch)
    x = x.transpose(0, 2, 4, 1, 3, 5)               # (B, hp, wp, C, p, p)
    return x.reshape(B, hp * wp, C * patch * patch)


def vit_block_forward(x, blk, num_heads):
    x = pallas_attn_block(x, blk["ln1_g"], blk["ln1_b"],
                          blk["wq"], blk["wk"], blk["wv"],
                          blk["bq"], blk["bk"], blk["bv"],
                          blk["wp"], blk["bp"], num_heads=num_heads)
    x = pallas_mlp_block(x, blk["ln2_g"], blk["ln2_b"],
                         blk["fc1_w"], blk["fc1_b"], blk["fc2_w"], blk["fc2_b"])
    return x


def custom_model_forward(x, params, *, patch, num_heads, block_num, out_dim):
    B = x.shape[0]
    D = params["patch_w"].shape[1]

    # Patch embed (Conv2d(k=p, s=p) as im2col matmul, K-tiled Pallas kernel).
    patches = patchify(x, patch)                     # (B, P, C*p*p)
    P = patches.shape[1]
    emb = pallas_matmul_bias(patches.reshape(B * P, -1),
                             params["patch_w"], params["patch_b"])
    emb = emb.reshape(B, P, D)

    # Prepend class token, add positional embedding (cheap XLA glue).
    cls = jnp.broadcast_to(params["cls_token"], (B, 1, D)).astype(emb.dtype)
    tokens = jnp.concatenate([cls, emb], axis=1) + params["pos_embed"]

    # Run ALL blocks (the PyTorch module runs the full ViT), capture hooked one.
    activations = None
    h = tokens
    for i, blk in enumerate(params["blocks"]):
        h = vit_block_forward(h, blk, num_heads)
        if i == block_num:
            activations = h[:, 1:, :]                # drop class token

    if activations is None:
        raise ValueError(f"No activations found for block {block_num}")

    # Final layer `last` (Linear), lane-dense padded output, sliced back.
    Sa, Da = activations.shape[1], activations.shape[2]
    out = pallas_matmul_bias(activations.reshape(B * Sa, Da),
                             params["last_w"], params["last_b"])
    return out[:, :out_dim].reshape(B, Sa, out_dim)


# -----------------------------------------------------------------------------
if __name__ == "__main__":
    # Small, shape-consistent config.
    B, C, H, W = 2, 4, 16, 16
    PATCH = 4
    EMBED_DIM = 32
    DEPTH = 3
    NUM_HEADS = 4
    MLP_RATIO = 4.0
    BLOCK_NUM = 1
    OUT_DIM = 10
    NUM_PATCHES = (H // PATCH) * (W // PATCH)

    root = jax.random.PRNGKey(0)
    kx, kp = jax.random.split(root)
    x = jax.random.normal(kx, (B, C, H, W), dtype=jnp.float32)
    params = init_params(kp, in_chans=C, patch=PATCH, embed_dim=EMBED_DIM,
                         depth=DEPTH, num_heads=NUM_HEADS, mlp_ratio=MLP_RATIO,
                         num_patches=NUM_PATCHES, out_dim=OUT_DIM)

    fwd = jax.jit(functools.partial(custom_model_forward, patch=PATCH,
                                    num_heads=NUM_HEADS, block_num=BLOCK_NUM,
                                    out_dim=OUT_DIM))
    out = fwd(x, params)
    jax.block_until_ready(out)
    assert out.shape == (B, NUM_PATCHES, OUT_DIM)
    assert bool(jnp.all(jnp.isfinite(out)))
    print("KERNEL_OK")
</pallas_src>

<mosaic_0001>
module attributes {stable_mosaic.version = 11 : i64} {
  func.func @_matmul_bias_kernel(%arg0: i32, %arg1: i32, %arg2: i32, %arg3: memref<32x64xf32, #tpu.memory_space<vmem>>, %arg4: memref<64x32xbf16, #tpu.memory_space<vmem>>, %arg5: memref<1x32xf32, #tpu.memory_space<vmem>>, %arg6: memref<32x32xf32, #tpu.memory_space<vmem>>, %arg7: memref<32x32xf32, #tpu.memory_space<vmem>>) attributes {dimension_semantics = [#tpu.dimension_semantics<parallel>, #tpu.dimension_semantics<parallel>, #tpu.dimension_semantics<arbitrary>], iteration_bounds = array<i64: 1, 1, 1>, scalar_prefetch = 0 : i64, scratch_operands = 1 : i64, tpu.core_type = #tpu.core_type<tc>, window_params = [{transform_indices = @transform_0, window_bounds = array<i64: 32, 64>}, {transform_indices = @transform_1, window_bounds = array<i64: 64, 32>}, {transform_indices = @transform_2, window_bounds = array<i64: 1, 32>}, {transform_indices = @transform_3, window_bounds = array<i64: 32, 32>}]} {
    %c0_i32 = arith.constant 0 : i32
    %0 = arith.cmpi eq, %arg2, %c0_i32 : i32
    %1 = arith.extui %0 : i1 to i32
    %c0_i32_0 = arith.constant 0 : i32
    %2 = arith.cmpi ne, %1, %c0_i32_0 : i32
    scf.if %2 {
      %cst_10 = arith.constant 0.000000e+00 : f32
      %13 = vector.broadcast %cst_10 : f32 to vector<32x32xf32>
      %c0_11 = arith.constant 0 : index
      %c0_12 = arith.constant 0 : index
      %14 = vector.load %arg7[%c0_11, %c0_12] : memref<32x32xf32, #tpu.memory_space<vmem>>, vector<32x32xf32>
      tpu.vector_store %arg7[%c0_11, %c0_12], %13 {strides = array<i32>} : memref<32x32xf32, #tpu.memory_space<vmem>>, vector<32x32xf32>,
    } else {
    }
    %c0 = arith.constant 0 : index
    %c0_1 = arith.constant 0 : index
    %3 = vector.load %arg7[%c0, %c0_1] : memref<32x32xf32, #tpu.memory_space<vmem>>, vector<32x32xf32>
    %c0_2 = arith.constant 0 : index
    %c0_3 = arith.constant 0 : index
    %4 = vector.load %arg3[%c0_2, %c0_3] : memref<32x64xf32, #tpu.memory_space<vmem>>, vector<32x64xf32>
    %5 = arith.truncf %4 : vector<32x64xf32> to vector<32x64xbf16>
    %c0_4 = arith.constant 0 : index
    %c0_5 = arith.constant 0 : index
    %6 = vector.load %arg4[%c0_4, %c0_5] : memref<64x32xbf16, #tpu.memory_space<vmem>>, vector<64x32xbf16>
    %cst = arith.constant dense<0.000000e+00> : vector<32x32xf32>
    %7 = tpu.matmul %5, %6, %cst {dimension_numbers = #tpu.dot_dimension_numbers<[1], [0], [0], [1], [0, 0, 1, 1], [], []>} : vector<32x64xbf16>, vector<64x32xbf16>, vector<32x32xf32> -> vector<32x32xf32>
    %8 = arith.addf %3, %7 : vector<32x32xf32>
    %c0_6 = arith.constant 0 : index
    %c0_7 = arith.constant 0 : index
    %9 = vector.load %arg7[%c0_6, %c0_7] : memref<32x32xf32, #tpu.memory_space<vmem>>, vector<32x32xf32>
    tpu.vector_store %arg7[%c0_6, %c0_7], %8 {strides = array<i32>} : memref<32x32xf32, #tpu.memory_space<vmem>>, vector<32x32xf32>,
    %c0_i32_8 = arith.constant 0 : i32
    %10 = arith.cmpi eq, %arg2, %c0_i32_8 : i32
    %11 = arith.extui %10 : i1 to i32
    %c0_i32_9 = arith.constant 0 : i32
    %12 = arith.cmpi ne, %11, %c0_i32_9 : i32
    scf.if %12 {
      %c0_10 = arith.constant 0 : index
      %c0_11 = arith.constant 0 : index
      %13 = vector.load %arg7[%c0_10, %c0_11] : memref<32x32xf32, #tpu.memory_space<vmem>>, vector<32x32xf32>
      %c0_12 = arith.constant 0 : index
      %c0_13 = arith.constant 0 : index
      %14 = vector.load %arg5[%c0_12, %c0_13] : memref<1x32xf32, #tpu.memory_space<vmem>>, vector<1x32xf32>
      %15 = vector.broadcast %14 : vector<1x32xf32> to vector<32x32xf32>
      %16 = arith.addf %13, %15 : vector<32x32xf32>
      %c0_14 = arith.constant 0 : index
      %c0_15 = arith.constant 0 : index
      %17 = vector.load %arg6[%c0_14, %c0_15] : memref<32x32xf32, #tpu.memory_space<vmem>>, vector<32x32xf32>
      tpu.vector_store %arg6[%c0_14, %c0_15], %16 {strides = array<i32>} : memref<32x32xf32, #tpu.memory_space<vmem>>, vector<32x32xf32>,
    } else {
    }
    return
  }
  func.func @transform_0(%arg0: i32, %arg1: i32, %arg2: i32) -> (i32, i32) {
    %c0_i32 = arith.constant 0 : i32
    return %arg0, %arg2 : i32, i32
  }
  func.func @transform_1(%arg0: i32, %arg1: i32, %arg2: i32) -> (i32, i32) {
    %c0_i32 = arith.constant 0 : i32
    return %arg2, %arg1 : i32, i32
  }
  func.func @transform_2(%arg0: i32, %arg1: i32, %arg2: i32) -> (i32, i32) {
    %c0_i32 = arith.constant 0 : i32
    %c0_i32_0 = arith.constant 0 : i32
    return %c0_i32, %arg1 : i32, i32
  }
  func.func @transform_3(%arg0: i32, %arg1: i32, %arg2: i32) -> (i32, i32) {
    %c0_i32 = arith.constant 0 : i32
    return %arg0, %arg1 : i32, i32
  }
}

module attributes {stable_mosaic.version = 11 : i64} {
  func.func @_attn_block_kernel(%arg0: i32, %arg1: memref<1x17x32xf32, #tpu.memory_space<vmem>>, %arg2: memref<1x32xf32, #tpu.memory_space<vmem>>, %arg3: memref<1x32xf32, #tpu.memory_space<vmem>>, %arg4: memref<4x32x8xbf16, #tpu.memory_space<vmem>>, %arg5: memref<4x32x8xbf16, #tpu.memory_space<vmem>>, %arg6: memref<4x32x8xbf16, #tpu.memory_space<vmem>>, %arg7: memref<4x1x8xf32, #tpu.memory_space<vmem>>, %arg8: memref<4x1x8xf32, #tpu.memory_space<vmem>>, %arg9: memref<4x1x8xf32, #tpu.memory_space<vmem>>, %arg10: memref<4x8x32xbf16, #tpu.memory_space<vmem>>, %arg11: memref<1x32xf32, #tpu.memory_space<vmem>>, %arg12: memref<1x17x32xf32, #tpu.memory_space<vmem>>) attributes {dimension_semantics = [#tpu.dimension_semantics<parallel>], iteration_bounds = array<i64: 2>, scalar_prefetch = 0 : i64, scratch_operands = 0 : i64, tpu.core_type = #tpu.core_type<tc>, window_params = [{transform_indices = @transform_0, window_bounds = array<i64: 1, 17, 32>}, {pipeline_mode = #tpu.pipeline_mode<synchronous>, transform_indices = @transform_1, window_bounds = array<i64: 1, 32>}, {pipeline_mode = #tpu.pipeline_mode<synchronous>, transform_indices = @transform_2, window_bounds = array<i64: 1, 32>}, {pipeline_mode = #tpu.pipeline_mode<synchronous>, transform_indices = @transform_3, window_bounds = array<i64: 4, 32, 8>}, {pipeline_mode = #tpu.pipeline_mode<synchronous>, transform_indices = @transform_4, window_bounds = array<i64: 4, 32, 8>}, {pipeline_mode = #tpu.pipeline_mode<synchronous>, transform_indices = @transform_5, window_bounds = array<i64: 4, 32, 8>}, {pipeline_mode = #tpu.pipeline_mode<synchronous>, transform_indices = @transform_6, window_bounds = array<i64: 4, 1, 8>}, {pipeline_mode = #tpu.pipeline_mode<synchronous>, transform_indices = @transform_7, window_bounds = array<i64: 4, 1, 8>}, {pipeline_mode = #tpu.pipeline_mode<synchronous>, transform_indices = @transform_8, window_bounds = array<i64: 4, 1, 8>}, {pipeline_mode = #tpu.pipeline_mode<synchronous>, transform_indices = @transform_9, window_bounds = array<i64: 4, 8, 32>}, {pipeline_mode = #tpu.pipeline_mode<synchronous>, transform_indices = @transform_10, window_bounds = array<i64: 1, 32>}, {transform_indices = @transform_11, window_bounds = array<i64: 1, 17, 32>}]} {
    %c0 = arith.constant 0 : index
    %c0_0 = arith.constant 0 : index
    %c0_1 = arith.constant 0 : index
    %0 = vector.load %arg1[%c0, %c0_0, %c0_1] : memref<1x17x32xf32, #tpu.memory_space<vmem>>, vector<1x17x32xf32>
    %1 = vector.shape_cast %0 : vector<1x17x32xf32> to vector<17x32xf32>
    %cst = arith.constant dense<0.000000e+00> : vector<17xf32>
    %2 = vector.multi_reduction <add>, %1, %cst [1] : vector<17x32xf32> to vector<17xf32>
    %3 = vector.shape_cast %2 : vector<17xf32> to vector<17x1xf32>
    %cst_2 = arith.constant 3.200000e+01 : f32
    %4 = vector.broadcast %cst_2 : f32 to vector<17x1xf32>
    %5 = arith.divf %3, %4 : vector<17x1xf32>
    %6 = vector.broadcast %5 : vector<17x1xf32> to vector<17x32xf32>
    %7 = arith.subf %1, %6 : vector<17x32xf32>
    %8 = arith.mulf %7, %7 : vector<17x32xf32>
    %cst_3 = arith.constant dense<0.000000e+00> : vector<17xf32>
    %9 = vector.multi_reduction <add>, %8, %cst_3 [1] : vector<17x32xf32> to vector<17xf32>
    %10 = vector.shape_cast %9 : vector<17xf32> to vector<17x1xf32>
    %cst_4 = arith.constant 3.200000e+01 : f32
    %11 = vector.broadcast %cst_4 : f32 to vector<17x1xf32>
    %12 = arith.divf %10, %11 : vector<17x1xf32>
    %cst_5 = arith.constant 9.99999997E-7 : f32
    %13 = vector.broadcast %cst_5 : f32 to vector<17x1xf32>
    %14 = arith.addf %12, %13 : vector<17x1xf32>
    %15 = math.rsqrt %14 : vector<17x1xf32>
    %16 = vector.broadcast %15 : vector<17x1xf32> to vector<17x32xf32>
    %17 = arith.mulf %7, %16 : vector<17x32xf32>
    %c0_6 = arith.constant 0 : index
    %c0_7 = arith.constant 0 : index
    %18 = vector.load %arg2[%c0_6, %c0_7] : memref<1x32xf32, #tpu.memory_space<vmem>>, vector<1x32xf32>
    %19 = vector.broadcast %18 : vector<1x32xf32> to vector<17x32xf32>
    %20 = arith.mulf %17, %19 : vector<17x32xf32>
    %c0_8 = arith.constant 0 : index
    %c0_9 = arith.constant 0 : index
    %21 = vector.load %arg3[%c0_8, %c0_9] : memref<1x32xf32, #tpu.memory_space<vmem>>, vector<1x32xf32>
    %22 = vector.broadcast %21 : vector<1x32xf32> to vector<17x32xf32>
    %23 = arith.addf %20, %22 : vector<17x32xf32>
    %24 = arith.truncf %23 : vector<17x32xf32> to vector<17x32xbf16>
    %c0_10 = arith.constant 0 : index
    %c0_11 = arith.constant 0 : index
    %25 = vector.load %arg11[%c0_10, %c0_11] : memref<1x32xf32, #tpu.memory_space<vmem>>, vector<1x32xf32>
    %26 = vector.broadcast %25 : vector<1x32xf32> to vector<17x32xf32>
    %27 = arith.addf %1, %26 : vector<17x32xf32>
    %c0_12 = arith.constant 0 : index
    %c0_13 = arith.constant 0 : index
    %c0_14 = arith.constant 0 : index
    %28 = vector.load %arg4[%c0_12, %c0_13, %c0_14] : memref<4x32x8xbf16, #tpu.memory_space<vmem>>, vector<1x32x8xbf16>
    %29 = vector.shape_cast %28 : vector<1x32x8xbf16> to vector<32x8xbf16>
    %cst_15 = arith.constant dense<0.000000e+00> : vector<17x8xf32>
    %30 = tpu.matmul %24, %29, %cst_15 {dimension_numbers = #tpu.dot_dimension_numbers<[1], [0], [0], [1], [0, 0, 1, 1], [], []>} : vector<17x32xbf16>, vector<32x8xbf16>, vector<17x8xf32> -> vector<17x8xf32>
    %c0_16 = arith.constant 0 : index
    %c0_17 = arith.constant 0 : index
    %c0_18 = arith.constant 0 : index
    %31 = vector.load %arg7[%c0_16, %c0_17, %c0_18] : memref<4x1x8xf32, #tpu.memory_space<vmem>>, vector<1x1x8xf32>
    %32 = vector.shape_cast %31 : vector<1x1x8xf32> to vector<1x8xf32>
    %33 = vector.broadcast %32 : vector<1x8xf32> to vector<17x8xf32>
    %34 = arith.addf %30, %33 : vector<17x8xf32>
    %c0_19 = arith.constant 0 : index
    %c0_20 = arith.constant 0 : index
    %c0_21 = arith.constant 0 : index
    %35 = vector.load %arg5[%c0_19, %c0_20, %c0_21] : memref<4x32x8xbf16, #tpu.memory_space<vmem>>, vector<1x32x8xbf16>
    %36 = vector.shape_cast %35 : vector<1x32x8xbf16> to vector<32x8xbf16>
    %cst_22 = arith.constant dense<0.000000e+00> : vector<17x8xf32>
    %37 = tpu.matmul %24, %36, %cst_22 {dimension_numbers = #tpu.dot_dimension_numbers<[1], [0], [0], [1], [0, 0, 1, 1], [], []>} : vector<17x32xbf16>, vector<32x8xbf16>, vector<17x8xf32> -> vector<17x8xf32>
    %c0_23 = arith.constant 0 : index
    %c0_24 = arith.constant 0 : index
    %c0_25 = arith.constant 0 : index
    %38 = vector.load %arg8[%c0_23, %c0_24, %c0_25] : memref<4x1x8xf32, #tpu.memory_space<vmem>>, vector<1x1x8xf32>
    %39 = vector.shape_cast %38 : vector<1x1x8xf32> to vector<1x8xf32>
    %40 = vector.broadcast %39 : vector<1x8xf32> to vector<17x8xf32>
    %41 = arith.addf %37, %40 : vector<17x8xf32>
    %c0_26 = arith.constant 0 : index
    %c0_27 = arith.constant 0 : index
    %c0_28 = arith.constant 0 : index
    %42 = vector.load %arg6[%c0_26, %c0_27, %c0_28] : memref<4x32x8xbf16, #tpu.memory_space<vmem>>, vector<1x32x8xbf16>
    %43 = vector.shape_cast %42 : vector<1x32x8xbf16> to vector<32x8xbf16>
    %cst_29 = arith.constant dense<0.000000e+00> : vector<17x8xf32>
    %44 = tpu.matmul %24, %43, %cst_29 {dimension_numbers = #tpu.dot_dimension_numbers<[1], [0], [0], [1], [0, 0, 1, 1], [], []>} : vector<17x32xbf16>, vector<32x8xbf16>, vector<17x8xf32> -> vector<17x8xf32>
    %c0_30 = arith.constant 0 : index
    %c0_31 = arith.constant 0 : index
    %c0_32 = arith.constant 0 : index
    %45 = vector.load %arg9[%c0_30, %c0_31, %c0_32] : memref<4x1x8xf32, #tpu.memory_space<vmem>>, vector<1x1x8xf32>
    %46 = vector.shape_cast %45 : vector<1x1x8xf32> to vector<1x8xf32>
    %47 = vector.broadcast %46 : vector<1x8xf32> to vector<17x8xf32>
    %48 = arith.addf %44, %47 : vector<17x8xf32>
    %49 = arith.truncf %34 : vector<17x8xf32> to vector<17x8xbf16>
    %50 = arith.truncf %41 : vector<17x8xf32> to vector<17x8xbf16>
    %cst_33 = arith.constant dense<0.000000e+00> : vector<17x17xf32>
    %51 = tpu.matmul %49, %50, %cst_33 {dimension_numbers = #tpu.dot_dimension_numbers<[1], [1], [0], [0], [0, 0, 1, 0], [], []>} : vector<17x8xbf16>, vector<17x8xbf16>, vector<17x17xf32> -> vector<17x17xf32>
    %cst_34 = arith.constant 0.353553385 : f32
    %52 = vector.broadcast %cst_34 : f32 to vector<17x17xf32>
    %53 = arith.mulf %51, %52 : vector<17x17xf32>
    %cst_35 = arith.constant dense<0xFF800000> : vector<17xf32>
    %54 = vector.multi_reduction <maximumf>, %53, %cst_35 [1] : vector<17x17xf32> to vector<17xf32>
    %55 = vector.shape_cast %54 : vector<17xf32> to vector<17x1xf32>
    %56 = vector.broadcast %55 : vector<17x1xf32> to vector<17x17xf32>
    %57 = arith.subf %53, %56 : vector<17x17xf32>
    %58 = math.exp %57 : vector<17x17xf32>
    %cst_36 = arith.constant dense<0.000000e+00> : vector<17xf32>
    %59 = vector.multi_reduction <add>, %58, %cst_36 [1] : vector<17x17xf32> to vector<17xf32>
    %60 = vector.shape_cast %59 : vector<17xf32> to vector<17x1xf32>
    %61 = tpu.reciprocal %60 {approx = true} : vector<17x1xf32> -> vector<17x1xf32>
    %62 = vector.broadcast %61 : vector<17x1xf32> to vector<17x17xf32>
    %63 = arith.mulf %58, %62 : vector<17x17xf32>
    %64 = arith.truncf %63 : vector<17x17xf32> to vector<17x17xbf16>
    %65 = arith.truncf %48 : vector<17x8xf32> to vector<17x8xbf16>
    %cst_37 = arith.constant dense<0.000000e+00> : vector<17x8xf32>
    %66 = tpu.matmul %64, %65, %cst_37 {dimension_numbers = #tpu.dot_dimension_numbers<[1], [0], [0], [1], [0, 0, 1, 1], [], []>} : vector<17x17xbf16>, vector<17x8xbf16>, vector<17x8xf32> -> vector<17x8xf32>
    %67 = arith.truncf %66 : vector<17x8xf32> to vector<17x8xbf16>
    %c0_38 = arith.constant 0 : index
    %c0_39 = arith.constant 0 : index
    %c0_40 = arith.constant 0 : index
    %68 = vector.load %arg10[%c0_38, %c0_39, %c0_40] : memref<4x8x32xbf16, #tpu.memory_space<vmem>>, vector<1x8x32xbf16>
    %69 = vector.shape_cast %68 : vector<1x8x32xbf16> to vector<8x32xbf16>
    %cst_41 = arith.constant dense<0.000000e+00> : vector<17x32xf32>
    %70 = tpu.matmul %67, %69, %cst_41 {dimension_numbers = #tpu.dot_dimension_numbers<[1], [0], [0], [1], [0, 0, 1, 1], [], []>} : vector<17x8xbf16>, vector<8x32xbf16>, vector<17x32xf32> -> vector<17x32xf32>
    %71 = arith.addf %27, %70 : vector<17x32xf32>
    %c1 = arith.constant 1 : index
    %c0_42 = arith.constant 0 : index
    %c0_43 = arith.constant 0 : index
    %72 = vector.load %arg4[%c1, %c0_42, %c0_43] : memref<4x32x8xbf16, #tpu.memory_space<vmem>>, vector<1x32x8xbf16>
    %73 = vector.shape_cast %72 : vector<1x32x8xbf16> to vector<32x8xbf16>
    %cst_44 = arith.constant dense<0.000000e+00> : vector<17x8xf32>
    %74 = tpu.matmul %24, %73, %cst_44 {dimension_numbers = #tpu.dot_dimension_numbers<[1], [0], [0], [1], [0, 0, 1, 1], [], []>} : vector<17x32xbf16>, vector<32x8xbf16>, vector<17x8xf32> -> vector<17x8xf32>
    %c1_45 = arith.constant 1 : index
    %c0_46 = arith.constant 0 : index
    %c0_47 = arith.constant 0 : index
    %75 = vector.load %arg7[%c1_45, %c0_46, %c0_47] : memref<4x1x8xf32, #tpu.memory_space<vmem>>, vector<1x1x8xf32>
    %76 = vector.shape_cast %75 : vector<1x1x8xf32> to vector<1x8xf32>
    %77 = vector.broadcast %76 : vector<1x8xf32> to vector<17x8xf32>
    %78 = arith.addf %74, %77 : vector<17x8xf32>
    %c1_48 = arith.constant 1 : index
    %c0_49 = arith.constant 0 : index
    %c0_50 = arith.constant 0 : index
    %79 = vector.load %arg5[%c1_48, %c0_49, %c0_50] : memref<4x32x8xbf16, #tpu.memory_space<vmem>>, vector<1x32x8xbf16>
    %80 = vector.shape_cast %79 : vector<1x32x8xbf16> to vector<32x8xbf16>
    %cst_51 = arith.constant dense<0.000000e+00> : vector<17x8xf32>
    %81 = tpu.matmul %24, %80, %cst_51 {dimension_numbers = #tpu.dot_dimension_numbers<[1], [0], [0], [1], [0, 0, 1, 1], [], []>} : vector<17x32xbf16>, vector<32x8xbf16>, vector<17x8xf32> -> vector<17x8xf32>
    %c1_52 = arith.constant 1 : index
    %c0_53 = arith.constant 0 : index
    %c0_54 = arith.constant 0 : index
    %82 = vector.load %arg8[%c1_52, %c0_53, %c0_54] : memref<4x1x8xf32, #tpu.memory_space<vmem>>, vector<1x1x8xf32>
    %83 = vector.shape_cast %82 : vector<1x1x8xf32> to vector<1x8xf32>
    %84 = vector.broadcast %83 : vector<1x8xf32> to vector<17x8xf32>
    %85 = arith.addf %81, %84 : vector<17x8xf32>
    %c1_55 = arith.constant 1 : index
    %c0_56 = arith.constant 0 : index
    %c0_57 = arith.constant 0 : index
    %86 = vector.load %arg6[%c1_55, %c0_56, %c0_57] : memref<4x32x8xbf16, #tpu.memory_space<vmem>>, vector<1x32x8xbf16>
    %87 = vector.shape_cast %86 : vector<1x32x8xbf16> to vector<32x8xbf16>
    %cst_58 = arith.constant dense<0.000000e+00> : vector<17x8xf32>
    %88 = tpu.matmul %24, %87, %cst_58 {dimension_numbers = #tpu.dot_dimension_numbers<[1], [0], [0], [1], [0, 0, 1, 1], [], []>} : vector<17x32xbf16>, vector<32x8xbf16>, vector<17x8xf32> -> vector<17x8xf32>
    %c1_59 = arith.constant 1 : index
    %c0_60 = arith.constant 0 : index
    %c0_61 = arith.constant 0 : index
    %89 = vector.load %arg9[%c1_59, %c0_60, %c0_61] : memref<4x1x8xf32, #tpu.memory_space<vmem>>, vector<1x1x8xf32>
    %90 = vector.shape_cast %89 : vector<1x1x8xf32> to vector<1x8xf32>
    %91 = vector.broadcast %90 : vector<1x8xf32> to vector<17x8xf32>
    %92 = arith.addf %88, %91 : vector<17x8xf32>
    %93 = arith.truncf %78 : vector<17x8xf32> to vector<17x8xbf16>
    %94 = arith.truncf %85 : vector<17x8xf32> to vector<17x8xbf16>
    %cst_62 = arith.constant dense<0.000000e+00> : vector<17x17xf32>
    %95 = tpu.matmul %93, %94, %cst_62 {dimension_numbers = #tpu.dot_dimension_numbers<[1], [1], [0], [0], [0, 0, 1, 0], [], []>} : vector<17x8xbf16>, vector<17x8xbf16>, vector<17x17xf32> -> vector<17x17xf32>
    %cst_63 = arith.constant 0.353553385 : f32
    %96 = vector.broadcast %cst_63 : f32 to vector<17x17xf32>
    %97 = arith.mulf %95, %96 : vector<17x17xf32>
    %cst_64 = arith.constant dense<0xFF800000> : vector<17xf32>
    %98 = vector.multi_reduction <maximumf>, %97, %cst_64 [1] : vector<17x17xf32> to vector<17xf32>
    %99 = vector.shape_cast %98 : vector<17xf32> to vector<17x1xf32>
    %100 = vector.broadcast %99 : vector<17x1xf32> to vector<17x17xf32>
    %101 = arith.subf %97, %100 : vector<17x17xf32>
    %102 = math.exp %101 : vector<17x17xf32>
    %cst_65 = arith.constant dense<0.000000e+00> : vector<17xf32>
    %103 = vector.multi_reduction <add>, %102, %cst_65 [1] : vector<17x17xf32> to vector<17xf32>
    %104 = vector.shape_cast %103 : vector<17xf32> to vector<17x1xf32>
    %105 = tpu.reciprocal %104 {approx = true} : vector<17x1xf32> -> vector<17x1xf32>
    %106 = vector.broadcast %105 : vector<17x1xf32> to vector<17x17xf32>
    %107 = arith.mulf %102, %106 : vector<17x17xf32>
    %108 = arith.truncf %107 : vector<17x17xf32> to vector<17x17xbf16>
    %109 = arith.truncf %92 : vector<17x8xf32> to vector<17x8xbf16>
    %cst_66 = arith.constant dense<0.000000e+00> : vector<17x8xf32>
    %110 = tpu.matmul %108, %109, %cst_66 {dimension_numbers = #tpu.dot_dimension_numbers<[1], [0], [0], [1], [0, 0, 1, 1], [], []>} : vector<17x17xbf16>, vector<17x8xbf16>, vector<17x8xf32> -> vector<17x8xf32>
    %111 = arith.truncf %110 : vector<17x8xf32> to vector<17x8xbf16>
    %c1_67 = arith.constant 1 : index
    %c0_68 = arith.constant 0 : index
    %c0_69 = arith.constant 0 : index
    %112 = vector.load %arg10[%c1_67, %c0_68, %c0_69] : memref<4x8x32xbf16, #tpu.memory_space<vmem>>, vector<1x8x32xbf16>
    %113 = vector.shape_cast %112 : vector<1x8x32xbf16> to vector<8x32xbf16>
    %cst_70 = arith.constant dense<0.000000e+00> : vector<17x32xf32>
    %114 = tpu.matmul %111, %113, %cst_70 {dimension_numbers = #tpu.dot_dimension_numbers<[1], [0], [0], [1], [0, 0, 1, 1], [], []>} : vector<17x8xbf16>, vector<8x32xbf16>, vector<17x32xf32> -> vector<17x32xf32>
    %115 = arith.addf %71, %114 : vector<17x32xf32>
    %c2 = arith.constant 2 : index
    %c0_71 = arith.constant 0 : index
    %c0_72 = arith.constant 0 : index
    %116 = vector.load %arg4[%c2, %c0_71, %c0_72] : memref<4x32x8xbf16, #tpu.memory_space<vmem>>, vector<1x32x8xbf16>
    %117 = vector.shape_cast %116 : vector<1x32x8xbf16> to vector<32x8xbf16>
    %cst_73 = arith.constant dense<0.000000e+00> : vector<17x8xf32>
    %118 = tpu.matmul %24, %117, %cst_73 {dimension_numbers = #tpu.dot_dimension_numbers<[1], [0], [0], [1], [0, 0, 1, 1], [], []>} : vector<17x32xbf16>, vector<32x8xbf16>, vector<17x8xf32> -> vector<17x8xf32>
    %c2_74 = arith.constant 2 : index
    %c0_75 = arith.constant 0 : index
    %c0_76 = arith.constant 0 : index
    %119 = vector.load %arg7[%c2_74, %c0_75, %c0_76] : memref<4x1x8xf32, #tpu.memory_space<vmem>>, vector<1x1x8xf32>
    %120 = vector.shape_cast %119 : vector<1x1x8xf32> to vector<1x8xf32>
    %121 = vector.broadcast %120 : vector<1x8xf32> to vector<17x8xf32>
    %122 = arith.addf %118, %121 : vector<17x8xf32>
    %c2_77 = arith.constant 2 : index
    %c0_78 = arith.constant 0 : index
    %c0_79 = arith.constant 0 : index
    %123 = vector.load %arg5[%c2_77, %c0_78, %c0_79] : memref<4x32x8xbf16, #tpu.memory_space<vmem>>, vector<1x32x8xbf16>
    %124 = vector.shape_cast %123 : vector<1x32x8xbf16> to vector<32x8xbf16>
    %cst_80 = arith.constant dense<0.000000e+00> : vector<17x8xf32>
    %125 = tpu.matmul %24, %124, %cst_80 {dimension_numbers = #tpu.dot_dimension_numbers<[1], [0], [0], [1], [0, 0, 1, 1], [], []>} : vector<17x32xbf16>, vector<32x8xbf16>, vector<17x8xf32> -> vector<17x8xf32>
    %c2_81 = arith.constant 2 : index
    %c0_82 = arith.constant 0 : index
    %c0_83 = arith.constant 0 : index
    %126 = vector.load %arg8[%c2_81, %c0_82, %c0_83] : memref<4x1x8xf32, #tpu.memory_space<vmem>>, vector<1x1x8xf32>
    %127 = vector.shape_cast %126 : vector<1x1x8xf32> to vector<1x8xf32>
    %128 = vector.broadcast %127 : vector<1x8xf32> to vector<17x8xf32>
    %129 = arith.addf %125, %128 : vector<17x8xf32>
    %c2_84 = arith.constant 2 : index
    %c0_85 = arith.constant 0 : index
    %c0_86 = arith.constant 0 : index
    %130 = vector.load %arg6[%c2_84, %c0_85, %c0_86] : memref<4x32x8xbf16, #tpu.memory_space<vmem>>, vector<1x32x8xbf16>
    %131 = vector.shape_cast %130 : vector<1x32x8xbf16> to vector<32x8xbf16>
    %cst_87 = arith.constant dense<0.000000e+00> : vector<17x8xf32>
    %132 = tpu.matmul %24, %131, %cst_87 {dimension_numbers = #tpu.dot_dimension_numbers<[1], [0], [0], [1], [0, 0, 1, 1], [], []>} : vector<17x32xbf16>, vector<32x8xbf16>, vector<17x8xf32> -> vector<17x8xf32>
    %c2_88 = arith.constant 2 : index
    %c0_89 = arith.constant 0 : index
    %c0_90 = arith.constant 0 : index
    %133 = vector.load %arg9[%c2_88, %c0_89, %c0_90] : memref<4x1x8xf32, #tpu.memory_space<vmem>>, vector<1x1x8xf32>
    %134 = vector.shape_cast %133 : vector<1x1x8xf32> to vector<1x8xf32>
    %135 = vector.broadcast %134 : vector<1x8xf32> to vector<17x8xf32>
    %136 = arith.addf %132, %135 : vector<17x8xf32>
    %137 = arith.truncf %122 : vector<17x8xf32> to vector<17x8xbf16>
    %138 = arith.truncf %129 : vector<17x8xf32> to vector<17x8xbf16>
    %cst_91 = arith.constant dense<0.000000e+00> : vector<17x17xf32>
    %139 = tpu.matmul %137, %138, %cst_91 {dimension_numbers = #tpu.dot_dimension_numbers<[1], [1], [0], [0], [0, 0, 1, 0], [], []>} : vector<17x8xbf16>, vector<17x8xbf16>, vector<17x17xf32> -> vector<17x17xf32>
    %cst_92 = arith.constant 0.353553385 : f32
    %140 = vector.broadcast %cst_92 : f32 to vector<17x17xf32>
    %141 = arith.mulf %139, %140 : vector<17x17xf32>
    %cst_93 = arith.constant dense<0xFF800000> : vector<17xf32>
    %142 = vector.multi_reduction <maximumf>, %141, %cst_93 [1] : vector<17x17xf32> to vector<17xf32>
    %143 = vector.shape_cast %142 : vector<17xf32> to vector<17x1xf32>
    %144 = vector.broadcast %143 : vector<17x1xf32> to vector<17x17xf32>
    %145 = arith.subf %141, %144 : vector<17x17xf32>
    %146 = math.exp %145 : vector<17x17xf32>
    %cst_94 = arith.constant dense<0.000000e+00> : vector<17xf32>
    %147 = vector.multi_reduction <add>, %146, %cst_94 [1] : vector<17x17xf32> to vector<17xf32>
    %148 = vector.shape_cast %147 : vector<17xf32> to vector<17x1xf32>
    %149 = tpu.reciprocal %148 {approx = true} : vector<17x1xf32> -> vector<17x1xf32>
    %150 = vector.broadcast %149 : vector<17x1xf32> to vector<17x17xf32>
    %151 = arith.mulf %146, %150 : vector<17x17xf32>
    %152 = arith.truncf %151 : vector<17x17xf32> to vector<17x17xbf16>
    %153 = arith.truncf %136 : vector<17x8xf32> to vector<17x8xbf16>
    %cst_95 = arith.constant dense<0.000000e+00> : vector<17x8xf32>
    %154 = tpu.matmul %152, %153, %cst_95 {dimension_numbers = #tpu.dot_dimension_numbers<[1], [0], [0], [1], [0, 0, 1, 1], [], []>} : vector<17x17xbf16>, vector<17x8xbf16>, vector<17x8xf32> -> vector<17x8xf32>
    %155 = arith.truncf %154 : vector<17x8xf32> to vector<17x8xbf16>
    %c2_96 = arith.constant 2 : index
    %c0_97 = arith.constant 0 : index
    %c0_98 = arith.constant 0 : index
    %156 = vector.load %arg10[%c2_96, %c0_97, %c0_98] : memref<4x8x32xbf16, #tpu.memory_space<vmem>>, vector<1x8x32xbf16>
    %157 = vector.shape_cast %156 : vector<1x8x32xbf16> to vector<8x32xbf16>
    %cst_99 = arith.constant dense<0.000000e+00> : vector<17x32xf32>
    %158 = tpu.matmul %155, %157, %cst_99 {dimension_numbers = #tpu.dot_dimension_numbers<[1], [0], [0], [1], [0, 0, 1, 1], [], []>} : vector<17x8xbf16>, vector<8x32xbf16>, vector<17x32xf32> -> vector<17x32xf32>
    %159 = arith.addf %115, %158 : vector<17x32xf32>
    %c3 = arith.constant 3 : index
    %c0_100 = arith.constant 0 : index
    %c0_101 = arith.constant 0 : index
    %160 = vector.load %arg4[%c3, %c0_100, %c0_101] : memref<4x32x8xbf16, #tpu.memory_space<vmem>>, vector<1x32x8xbf16>
    %161 = vector.shape_cast %160 : vector<1x32x8xbf16> to vector<32x8xbf16>
    %cst_102 = arith.constant dense<0.000000e+00> : vector<17x8xf32>
    %162 = tpu.matmul %24, %161, %cst_102 {dimension_numbers = #tpu.dot_dimension_numbers<[1], [0], [0], [1], [0, 0, 1, 1], [], []>} : vector<17x32xbf16>, vector<32x8xbf16>, vector<17x8xf32> -> vector<17x8xf32>
    %c3_103 = arith.constant 3 : index
    %c0_104 = arith.constant 0 : index
    %c0_105 = arith.constant 0 : index
    %163 = vector.load %arg7[%c3_103, %c0_104, %c0_105] : memref<4x1x8xf32, #tpu.memory_space<vmem>>, vector<1x1x8xf32>
    %164 = vector.shape_cast %163 : vector<1x1x8xf32> to vector<1x8xf32>
    %165 = vector.broadcast %164 : vector<1x8xf32> to vector<17x8xf32>
    %166 = arith.addf %162, %165 : vector<17x8xf32>
    %c3_106 = arith.constant 3 : index
    %c0_107 = arith.constant 0 : index
    %c0_108 = arith.constant 0 : index
    %167 = vector.load %arg5[%c3_106, %c0_107, %c0_108] : memref<4x32x8xbf16, #tpu.memory_space<vmem>>, vector<1x32x8xbf16>
    %168 = vector.shape_cast %167 : vector<1x32x8xbf16> to vector<32x8xbf16>
    %cst_109 = arith.constant dense<0.000000e+00> : vector<17x8xf32>
    %169 = tpu.matmul %24, %168, %cst_109 {dimension_numbers = #tpu.dot_dimension_numbers<[1], [0], [0], [1], [0, 0, 1, 1], [], []>} : vector<17x32xbf16>, vector<32x8xbf16>, vector<17x8xf32> -> vector<17x8xf32>
    %c3_110 = arith.constant 3 : index
    %c0_111 = arith.constant 0 : index
    %c0_112 = arith.constant 0 : index
    %170 = vector.load %arg8[%c3_110, %c0_111, %c0_112] : memref<4x1x8xf32, #tpu.memory_space<vmem>>, vector<1x1x8xf32>
    %171 = vector.shape_cast %170 : vector<1x1x8xf32> to vector<1x8xf32>
    %172 = vector.broadcast %171 : vector<1x8xf32> to vector<17x8xf32>
    %173 = arith.addf %169, %172 : vector<17x8xf32>
    %c3_113 = arith.constant 3 : index
    %c0_114 = arith.constant 0 : index
    %c0_115 = arith.constant 0 : index
    %174 = vector.load %arg6[%c3_113, %c0_114, %c0_115] : memref<4x32x8xbf16, #tpu.memory_space<vmem>>, vector<1x32x8xbf16>
    %175 = vector.shape_cast %174 : vector<1x32x8xbf16> to vector<32x8xbf16>
    %cst_116 = arith.constant dense<0.000000e+00> : vector<17x8xf32>
    %176 = tpu.matmul %24, %175, %cst_116 {dimension_numbers = #tpu.dot_dimension_numbers<[1], [0], [0], [1], [0, 0, 1, 1], [], []>} : vector<17x32xbf16>, vector<32x8xbf16>, vector<17x8xf32> -> vector<17x8xf32>
    %c3_117 = arith.constant 3 : index
    %c0_118 = arith.constant 0 : index
    %c0_119 = arith.constant 0 : index
    %177 = vector.load %arg9[%c3_117, %c0_118, %c0_119] : memref<4x1x8xf32, #tpu.memory_space<vmem>>, vector<1x1x8xf32>
    %178 = vector.shape_cast %177 : vector<1x1x8xf32> to vector<1x8xf32>
    %179 = vector.broadcast %178 : vector<1x8xf32> to vector<17x8xf32>
    %180 = arith.addf %176, %179 : vector<17x8xf32>
    %181 = arith.truncf %166 : vector<17x8xf32> to vector<17x8xbf16>
    %182 = arith.truncf %173 : vector<17x8xf32> to vector<17x8xbf16>
    %cst_120 = arith.constant dense<0.000000e+00> : vector<17x17xf32>
    %183 = tpu.matmul %181, %182, %cst_120 {dimension_numbers = #tpu.dot_dimension_numbers<[1], [1], [0], [0], [0, 0, 1, 0], [], []>} : vector<17x8xbf16>, vector<17x8xbf16>, vector<17x17xf32> -> vector<17x17xf32>
    %cst_121 = arith.constant 0.353553385 : f32
    %184 = vector.broadcast %cst_121 : f32 to vector<17x17xf32>
    %185 = arith.mulf %183, %184 : vector<17x17xf32>
    %cst_122 = arith.constant dense<0xFF800000> : vector<17xf32>
    %186 = vector.multi_reduction <maximumf>, %185, %cst_122 [1] : vector<17x17xf32> to vector<17xf32>
    %187 = vector.shape_cast %186 : vector<17xf32> to vector<17x1xf32>
    %188 = vector.broadcast %187 : vector<17x1xf32> to vector<17x17xf32>
    %189 = arith.subf %185, %188 : vector<17x17xf32>
    %190 = math.exp %189 : vector<17x17xf32>
    %cst_123 = arith.constant dense<0.000000e+00> : vector<17xf32>
    %191 = vector.multi_reduction <add>, %190, %cst_123 [1] : vector<17x17xf32> to vector<17xf32>
    %192 = vector.shape_cast %191 : vector<17xf32> to vector<17x1xf32>
    %193 = tpu.reciprocal %192 {approx = true} : vector<17x1xf32> -> vector<17x1xf32>
    %194 = vector.broadcast %193 : vector<17x1xf32> to vector<17x17xf32>
    %195 = arith.mulf %190, %194 : vector<17x17xf32>
    %196 = arith.truncf %195 : vector<17x17xf32> to vector<17x17xbf16>
    %197 = arith.truncf %180 : vector<17x8xf32> to vector<17x8xbf16>
    %cst_124 = arith.constant dense<0.000000e+00> : vector<17x8xf32>
    %198 = tpu.matmul %196, %197, %cst_124 {dimension_numbers = #tpu.dot_dimension_numbers<[1], [0], [0], [1], [0, 0, 1, 1], [], []>} : vector<17x17xbf16>, vector<17x8xbf16>, vector<17x8xf32> -> vector<17x8xf32>
    %199 = arith.truncf %198 : vector<17x8xf32> to vector<17x8xbf16>
    %c3_125 = arith.constant 3 : index
    %c0_126 = arith.constant 0 : index
    %c0_127 = arith.constant 0 : index
    %200 = vector.load %arg10[%c3_125, %c0_126, %c0_127] : memref<4x8x32xbf16, #tpu.memory_space<vmem>>, vector<1x8x32xbf16>
    %201 = vector.shape_cast %200 : vector<1x8x32xbf16> to vector<8x32xbf16>
    %cst_128 = arith.constant dense<0.000000e+00> : vector<17x32xf32>
    %202 = tpu.matmul %199, %201, %cst_128 {dimension_numbers = #tpu.dot_dimension_numbers<[1], [0], [0], [1], [0, 0, 1, 1], [], []>} : vector<17x8xbf16>, vector<8x32xbf16>, vector<17x32xf32> -> vector<17x32xf32>
    %203 = arith.addf %159, %202 : vector<17x32xf32>
    %c0_129 = arith.constant 0 : index
    %c0_130 = arith.constant 0 : index
    %c0_131 = arith.constant 0 : index
    %204 = vector.load %arg12[%c0_129, %c0_130, %c0_131] : memref<1x17x32xf32, #tpu.memory_space<vmem>>, vector<1x17x32xf32>
    %205 = vector.shape_cast %204 : vector<1x17x32xf32> to vector<17x32xf32>
    %206 = vector.shape_cast %203 : vector<17x32xf32> to vector<1x17x32xf32>
    tpu.vector_store %arg12[%c0_129, %c0_130, %c0_131], %206 {strides = array<i32>} : memref<1x17x32xf32, #tpu.memory_space<vmem>>, vector<1x17x32xf32>,
    return
  }
  func.func @transform_0(%arg0: i32) -> (i32, i32, i32) {
    %c0_i32 = arith.constant 0 : i32
    %c0_i32_0 = arith.constant 0 : i32
    %c0_i32_1 = arith.constant 0 : i32
    return %arg0, %c0_i32, %c0_i32_0 : i32, i32, i32
  }
  func.func @transform_1(%arg0: i32) -> (i32, i32) {
    %c0_i32 = arith.constant 0 : i32
    %c0_i32_0 = arith.constant 0 : i32
    %c0_i32_1 = arith.constant 0 : i32
    return %c0_i32, %c0_i32_0 : i32, i32
  }
  func.func @transform_2(%arg0: i32) -> (i32, i32) {
    %c0_i32 = arith.constant 0 : i32
    %c0_i32_0 = arith.constant 0 : i32
    %c0_i32_1 = arith.constant 0 : i32
    return %c0_i32, %c0_i32_0 : i32, i32
  }
  func.func @transform_3(%arg0: i32) -> (i32, i32, i32) {
    %c0_i32 = arith.constant 0 : i32
    %c0_i32_0 = arith.constant 0 : i32
    %c0_i32_1 = arith.constant 0 : i32
    %c0_i32_2 = arith.constant 0 : i32
    return %c0_i32, %c0_i32_0, %c0_i32_1 : i32, i32, i32
  }
  func.func @transform_4(%arg0: i32) -> (i32, i32, i32) {
    %c0_i32 = arith.constant 0 : i32
    %c0_i32_0 = arith.constant 0 : i32
    %c0_i32_1 = arith.constant 0 : i32
    %c0_i32_2 = arith.constant 0 : i32
    return %c0_i32, %c0_i32_0, %c0_i32_1 : i32, i32, i32
  }
  func.func @transform_5(%arg0: i32) -> (i32, i32, i32) {
    %c0_i32 = arith.constant 0 : i32
    %c0_i32_0 = arith.constant 0 : i32
    %c0_i32_1 = arith.constant 0 : i32
    %c0_i32_2 = arith.constant 0 : i32
    return %c0_i32, %c0_i32_0, %c0_i32_1 : i32, i32, i32
  }
  func.func @transform_6(%arg0: i32) -> (i32, i32, i32) {
    %c0_i32 = arith.constant 0 : i32
    %c0_i32_0 = arith.constant 0 : i32
    %c0_i32_1 = arith.constant 0 : i32
    %c0_i32_2 = arith.constant 0 : i32
    return %c0_i32, %c0_i32_0, %c0_i32_1 : i32, i32, i32
  }
  func.func @transform_7(%arg0: i32) -> (i32, i32, i32) {
    %c0_i32 = arith.constant 0 : i32
    %c0_i32_0 = arith.constant 0 : i32
    %c0_i32_1 = arith.constant 0 : i32
    %c0_i32_2 = arith.constant 0 : i32
    return %c0_i32, %c0_i32_0, %c0_i32_1 : i32, i32, i32
  }
  func.func @transform_8(%arg0: i32) -> (i32, i32, i32) {
    %c0_i32 = arith.constant 0 : i32
    %c0_i32_0 = arith.constant 0 : i32
    %c0_i32_1 = arith.constant 0 : i32
    %c0_i32_2 = arith.constant 0 : i32
    return %c0_i32, %c0_i32_0, %c0_i32_1 : i32, i32, i32
  }
  func.func @transform_9(%arg0: i32) -> (i32, i32, i32) {
    %c0_i32 = arith.constant 0 : i32
    %c0_i32_0 = arith.constant 0 : i32
    %c0_i32_1 = arith.constant 0 : i32
    %c0_i32_2 = arith.constant 0 : i32
    return %c0_i32, %c0_i32_0, %c0_i32_1 : i32, i32, i32
  }
  func.func @transform_10(%arg0: i32) -> (i32, i32) {
    %c0_i32 = arith.constant 0 : i32
    %c0_i32_0 = arith.constant 0 : i32
    %c0_i32_1 = arith.constant 0 : i32
    return %c0_i32, %c0_i32_0 : i32, i32
  }
  func.func @transform_11(%arg0: i32) -> (i32, i32, i32) {
    %c0_i32 = arith.constant 0 : i32
    %c0_i32_0 = arith.constant 0 : i32
    %c0_i32_1 = arith.constant 0 : i32
    return %arg0, %c0_i32, %c0_i32_0 : i32, i32, i32
  }
}

module attributes {stable_mosaic.version = 11 : i64} {
  func.func @_mlp_block_kernel(%arg0: i32, %arg1: memref<1x17x32xf32, #tpu.memory_space<vmem>>, %arg2: memref<1x32xf32, #tpu.memory_space<vmem>>, %arg3: memref<1x32xf32, #tpu.memory_space<vmem>>, %arg4: memref<32x128xbf16, #tpu.memory_space<vmem>>, %arg5: memref<1x128xf32, #tpu.memory_space<vmem>>, %arg6: memref<128x32xbf16, #tpu.memory_space<vmem>>, %arg7: memref<1x32xf32, #tpu.memory_space<vmem>>, %arg8: memref<1x17x32xf32, #tpu.memory_space<vmem>>) attributes {dimension_semantics = [#tpu.dimension_semantics<parallel>], iteration_bounds = array<i64: 2>, scalar_prefetch = 0 : i64, scratch_operands = 0 : i64, tpu.core_type = #tpu.core_type<tc>, window_params = [{transform_indices = @transform_0, window_bounds = array<i64: 1, 17, 32>}, {pipeline_mode = #tpu.pipeline_mode<synchronous>, transform_indices = @transform_1, window_bounds = array<i64: 1, 32>}, {pipeline_mode = #tpu.pipeline_mode<synchronous>, transform_indices = @transform_2, window_bounds = array<i64: 1, 32>}, {pipeline_mode = #tpu.pipeline_mode<synchronous>, transform_indices = @transform_3, window_bounds = array<i64: 32, 128>}, {pipeline_mode = #tpu.pipeline_mode<synchronous>, transform_indices = @transform_4, window_bounds = array<i64: 1, 128>}, {pipeline_mode = #tpu.pipeline_mode<synchronous>, transform_indices = @transform_5, window_bounds = array<i64: 128, 32>}, {pipeline_mode = #tpu.pipeline_mode<synchronous>, transform_indices = @transform_6, window_bounds = array<i64: 1, 32>}, {transform_indices = @transform_7, window_bounds = array<i64: 1, 17, 32>}]} {
    %c0 = arith.constant 0 : index
    %c0_0 = arith.constant 0 : index
    %c0_1 = arith.constant 0 : index
    %0 = vector.load %arg1[%c0, %c0_0, %c0_1] : memref<1x17x32xf32, #tpu.memory_space<vmem>>, vector<1x17x32xf32>
    %1 = vector.shape_cast %0 : vector<1x17x32xf32> to vector<17x32xf32>
    %cst = arith.constant dense<0.000000e+00> : vector<17xf32>
    %2 = vector.multi_reduction <add>, %1, %cst [1] : vector<17x32xf32> to vector<17xf32>
    %3 = vector.shape_cast %2 : vector<17xf32> to vector<17x1xf32>
    %cst_2 = arith.constant 3.200000e+01 : f32
    %4 = vector.broadcast %cst_2 : f32 to vector<17x1xf32>
    %5 = arith.divf %3, %4 : vector<17x1xf32>
    %6 = vector.broadcast %5 : vector<17x1xf32> to vector<17x32xf32>
    %7 = arith.subf %1, %6 : vector<17x32xf32>
    %8 = arith.mulf %7, %7 : vector<17x32xf32>
    %cst_3 = arith.constant dense<0.000000e+00> : vector<17xf32>
    %9 = vector.multi_reduction <add>, %8, %cst_3 [1] : vector<17x32xf32> to vector<17xf32>
    %10 = vector.shape_cast %9 : vector<17xf32> to vector<17x1xf32>
    %cst_4 = arith.constant 3.200000e+01 : f32
    %11 = vector.broadcast %cst_4 : f32 to vector<17x1xf32>
    %12 = arith.divf %10, %11 : vector<17x1xf32>
    %cst_5 = arith.constant 9.99999997E-7 : f32
    %13 = vector.broadcast %cst_5 : f32 to vector<17x1xf32>
    %14 = arith.addf %12, %13 : vector<17x1xf32>
    %15 = math.rsqrt %14 : vector<17x1xf32>
    %16 = vector.broadcast %15 : vector<17x1xf32> to vector<17x32xf32>
    %17 = arith.mulf %7, %16 : vector<17x32xf32>
    %c0_6 = arith.constant 0 : index
    %c0_7 = arith.constant 0 : index
    %18 = vector.load %arg2[%c0_6, %c0_7] : memref<1x32xf32, #tpu.memory_space<vmem>>, vector<1x32xf32>
    %19 = vector.broadcast %18 : vector<1x32xf32> to vector<17x32xf32>
    %20 = arith.mulf %17, %19 : vector<17x32xf32>
    %c0_8 = arith.constant 0 : index
    %c0_9 = arith.constant 0 : index
    %21 = vector.load %arg3[%c0_8, %c0_9] : memref<1x32xf32, #tpu.memory_space<vmem>>, vector<1x32xf32>
    %22 = vector.broadcast %21 : vector<1x32xf32> to vector<17x32xf32>
    %23 = arith.addf %20, %22 : vector<17x32xf32>
    %24 = arith.truncf %23 : vector<17x32xf32> to vector<17x32xbf16>
    %c0_10 = arith.constant 0 : index
    %c0_11 = arith.constant 0 : index
    %25 = vector.load %arg4[%c0_10, %c0_11] : memref<32x128xbf16, #tpu.memory_space<vmem>>, vector<32x128xbf16>
    %cst_12 = arith.constant dense<0.000000e+00> : vector<17x128xf32>
    %26 = tpu.matmul %24, %25, %cst_12 {dimension_numbers = #tpu.dot_dimension_numbers<[1], [0], [0], [1], [0, 0, 1, 1], [], []>} : vector<17x32xbf16>, vector<32x128xbf16>, vector<17x128xf32> -> vector<17x128xf32>
    %c0_13 = arith.constant 0 : index
    %c0_14 = arith.constant 0 : index
    %27 = vector.load %arg5[%c0_13, %c0_14] : memref<1x128xf32, #tpu.memory_space<vmem>>, vector<1x128xf32>
    %28 = vector.broadcast %27 : vector<1x128xf32> to vector<17x128xf32>
    %29 = arith.addf %26, %28 : vector<17x128xf32>
    %30 = arith.mulf %29, %29 : vector<17x128xf32>
    %31 = arith.mulf %29, %30 : vector<17x128xf32>
    %cst_15 = arith.constant 4.471500e-02 : f32
    %32 = vector.broadcast %cst_15 : f32 to vector<17x128xf32>
    %33 = arith.mulf %32, %31 : vector<17x128xf32>
    %34 = arith.addf %29, %33 : vector<17x128xf32>
    %cst_16 = arith.constant 0.797884583 : f32
    %35 = vector.broadcast %cst_16 : f32 to vector<17x128xf32>
    %36 = arith.mulf %35, %34 : vector<17x128xf32>
    %37 = math.tanh %36 : vector<17x128xf32>
    %cst_17 = arith.constant 1.000000e+00 : f32
    %38 = vector.broadcast %cst_17 : f32 to vector<17x128xf32>
    %39 = arith.addf %38, %37 : vector<17x128xf32>
    %cst_18 = arith.constant 5.000000e-01 : f32
    %40 = vector.broadcast %cst_18 : f32 to vector<17x128xf32>
    %41 = arith.mulf %40, %39 : vector<17x128xf32>
    %42 = arith.mulf %29, %41 : vector<17x128xf32>
    %43 = arith.truncf %42 : vector<17x128xf32> to vector<17x128xbf16>
    %c0_19 = arith.constant 0 : index
    %c0_20 = arith.constant 0 : index
    %44 = vector.load %arg6[%c0_19, %c0_20] : memref<128x32xbf16, #tpu.memory_space<vmem>>, vector<128x32xbf16>
    %cst_21 = arith.constant dense<0.000000e+00> : vector<17x32xf32>
    %45 = tpu.matmul %43, %44, %cst_21 {dimension_numbers = #tpu.dot_dimension_numbers<[1], [0], [0], [1], [0, 0, 1, 1], [], []>} : vector<17x128xbf16>, vector<128x32xbf16>, vector<17x32xf32> -> vector<17x32xf32>
    %c0_22 = arith.constant 0 : index
    %c0_23 = arith.constant 0 : index
    %46 = vector.load %arg7[%c0_22, %c0_23] : memref<1x32xf32, #tpu.memory_space<vmem>>, vector<1x32xf32>
    %47 = vector.broadcast %46 : vector<1x32xf32> to vector<17x32xf32>
    %48 = arith.addf %45, %47 : vector<17x32xf32>
    %49 = arith.addf %1, %48 : vector<17x32xf32>
    %c0_24 = arith.constant 0 : index
    %c0_25 = arith.constant 0 : index
    %c0_26 = arith.constant 0 : index
    %50 = vector.load %arg8[%c0_24, %c0_25, %c0_26] : memref<1x17x32xf32, #tpu.memory_space<vmem>>, vector<1x17x32xf32>
    %51 = vector.shape_cast %50 : vector<1x17x32xf32> to vector<17x32xf32>
    %52 = vector.shape_cast %49 : vector<17x32xf32> to vector<1x17x32xf32>
    tpu.vector_store %arg8[%c0_24, %c0_25, %c0_26], %52 {strides = array<i32>} : memref<1x17x32xf32, #tpu.memory_space<vmem>>, vector<1x17x32xf32>,
    return
  }
  func.func @transform_0(%arg0: i32) -> (i32, i32, i32) {
    %c0_i32 = arith.constant 0 : i32
    %c0_i32_0 = arith.constant 0 : i32
    %c0_i32_1 = arith.constant 0 : i32
    return %arg0, %c0_i32, %c0_i32_0 : i32, i32, i32
  }
  func.func @transform_1(%arg0: i32) -> (i32, i32) {
    %c0_i32 = arith.constant 0 : i32
    %c0_i32_0 = arith.constant 0 : i32
    %c0_i32_1 = arith.constant 0 : i32
    return %c0_i32, %c0_i32_0 : i32, i32
  }
  func.func @transform_2(%arg0: i32) -> (i32, i32) {
    %c0_i32 = arith.constant 0 : i32
    %c0_i32_0 = arith.constant 0 : i32
    %c0_i32_1 = arith.constant 0 : i32
    return %c0_i32, %c0_i32_0 : i32, i32
  }
  func.func @transform_3(%arg0: i32) -> (i32, i32) {
    %c0_i32 = arith.constant 0 : i32
    %c0_i32_0 = arith.constant 0 : i32
    %c0_i32_1 = arith.constant 0 : i32
    return %c0_i32, %c0_i32_0 : i32, i32
  }
  func.func @transform_4(%arg0: i32) -> (i32, i32) {
    %c0_i32 = arith.constant 0 : i32
    %c0_i32_0 = arith.constant 0 : i32
    %c0_i32_1 = arith.constant 0 : i32
    return %c0_i32, %c0_i32_0 : i32, i32
  }
  func.func @transform_5(%arg0: i32) -> (i32, i32) {
    %c0_i32 = arith.constant 0 : i32
    %c0_i32_0 = arith.constant 0 : i32
    %c0_i32_1 = arith.constant 0 : i32
    return %c0_i32, %c0_i32_0 : i32, i32
  }
  func.func @transform_6(%arg0: i32) -> (i32, i32) {
    %c0_i32 = arith.constant 0 : i32
    %c0_i32_0 = arith.constant 0 : i32
    %c0_i32_1 = arith.constant 0 : i32
    return %c0_i32, %c0_i32_0 : i32, i32
  }
  func.func @transform_7(%arg0: i32) -> (i32, i32, i32) {
    %c0_i32 = arith.constant 0 : i32
    %c0_i32_0 = arith.constant 0 : i32
    %c0_i32_1 = arith.constant 0 : i32
    return %arg0, %c0_i32, %c0_i32_0 : i32, i32, i32
  }
}

module attributes {stable_mosaic.version = 11 : i64} {
  func.func @_matmul_bias_kernel(%arg0: i32, %arg1: i32, %arg2: i32, %arg3: memref<32x32xf32, #tpu.memory_space<vmem>>, %arg4: memref<32x128xbf16, #tpu.memory_space<vmem>>, %arg5: memref<1x128xf32, #tpu.memory_space<vmem>>, %arg6: memref<32x128xf32, #tpu.memory_space<vmem>>, %arg7: memref<32x128xf32, #tpu.memory_space<vmem>>) attributes {dimension_semantics = [#tpu.dimension_semantics<parallel>, #tpu.dimension_semantics<parallel>, #tpu.dimension_semantics<arbitrary>], iteration_bounds = array<i64: 1, 1, 1>, scalar_prefetch = 0 : i64, scratch_operands = 1 : i64, tpu.core_type = #tpu.core_type<tc>, window_params = [{transform_indices = @transform_0, window_bounds = array<i64: 32, 32>}, {transform_indices = @transform_1, window_bounds = array<i64: 32, 128>}, {transform_indices = @transform_2, window_bounds = array<i64: 1, 128>}, {transform_indices = @transform_3, window_bounds = array<i64: 32, 128>}]} {
    %c0_i32 = arith.constant 0 : i32
    %0 = arith.cmpi eq, %arg2, %c0_i32 : i32
    %1 = arith.extui %0 : i1 to i32
    %c0_i32_0 = arith.constant 0 : i32
    %2 = arith.cmpi ne, %1, %c0_i32_0 : i32
    scf.if %2 {
      %cst_10 = arith.constant 0.000000e+00 : f32
      %13 = vector.broadcast %cst_10 : f32 to vector<32x128xf32>
      %c0_11 = arith.constant 0 : index
      %c0_12 = arith.constant 0 : index
      %14 = vector.load %arg7[%c0_11, %c0_12] : memref<32x128xf32, #tpu.memory_space<vmem>>, vector<32x128xf32>
      tpu.vector_store %arg7[%c0_11, %c0_12], %13 {strides = array<i32>} : memref<32x128xf32, #tpu.memory_space<vmem>>, vector<32x128xf32>,
    } else {
    }
    %c0 = arith.constant 0 : index
    %c0_1 = arith.constant 0 : index
    %3 = vector.load %arg7[%c0, %c0_1] : memref<32x128xf32, #tpu.memory_space<vmem>>, vector<32x128xf32>
    %c0_2 = arith.constant 0 : index
    %c0_3 = arith.constant 0 : index
    %4 = vector.load %arg3[%c0_2, %c0_3] : memref<32x32xf32, #tpu.memory_space<vmem>>, vector<32x32xf32>
    %5 = arith.truncf %4 : vector<32x32xf32> to vector<32x32xbf16>
    %c0_4 = arith.constant 0 : index
    %c0_5 = arith.constant 0 : index
    %6 = vector.load %arg4[%c0_4, %c0_5] : memref<32x128xbf16, #tpu.memory_space<vmem>>, vector<32x128xbf16>
    %cst = arith.constant dense<0.000000e+00> : vector<32x128xf32>
    %7 = tpu.matmul %5, %6, %cst {dimension_numbers = #tpu.dot_dimension_numbers<[1], [0], [0], [1], [0, 0, 1, 1], [], []>} : vector<32x32xbf16>, vector<32x128xbf16>, vector<32x128xf32> -> vector<32x128xf32>
    %8 = arith.addf %3, %7 : vector<32x128xf32>
    %c0_6 = arith.constant 0 : index
    %c0_7 = arith.constant 0 : index
    %9 = vector.load %arg7[%c0_6, %c0_7] : memref<32x128xf32, #tpu.memory_space<vmem>>, vector<32x128xf32>
    tpu.vector_store %arg7[%c0_6, %c0_7], %8 {strides = array<i32>} : memref<32x128xf32, #tpu.memory_space<vmem>>, vector<32x128xf32>,
    %c0_i32_8 = arith.constant 0 : i32
    %10 = arith.cmpi eq, %arg2, %c0_i32_8 : i32
    %11 = arith.extui %10 : i1 to i32
    %c0_i32_9 = arith.constant 0 : i32
    %12 = arith.cmpi ne, %11, %c0_i32_9 : i32
    scf.if %12 {
      %c0_10 = arith.constant 0 : index
      %c0_11 = arith.constant 0 : index
      %13 = vector.load %arg7[%c0_10, %c0_11] : memref<32x128xf32, #tpu.memory_space<vmem>>, vector<32x128xf32>
      %c0_12 = arith.constant 0 : index
      %c0_13 = arith.constant 0 : index
      %14 = vector.load %arg5[%c0_12, %c0_13] : memref<1x128xf32, #tpu.memory_space<vmem>>, vector<1x128xf32>
      %15 = vector.broadcast %14 : vector<1x128xf32> to vector<32x128xf32>
      %16 = arith.addf %13, %15 : vector<32x128xf32>
      %c0_14 = arith.constant 0 : index
      %c0_15 = arith.constant 0 : index
      %17 = vector.load %arg6[%c0_14, %c0_15] : memref<32x128xf32, #tpu.memory_space<vmem>>, vector<32x128xf32>
      tpu.vector_store %arg6[%c0_14, %c0_15], %16 {strides = array<i32>} : memref<32x128xf32, #tpu.memory_space<vmem>>, vector<32x128xf32>,
    } else {
    }
    return
  }
  func.func @transform_0(%arg0: i32, %arg1: i32, %arg2: i32) -> (i32, i32) {
    %c0_i32 = arith.constant 0 : i32
    return %arg0, %arg2 : i32, i32
  }
  func.func @transform_1(%arg0: i32, %arg1: i32, %arg2: i32) -> (i32, i32) {
    %c0_i32 = arith.constant 0 : i32
    return %arg2, %arg1 : i32, i32
  }
  func.func @transform_2(%arg0: i32, %arg1: i32, %arg2: i32) -> (i32, i32) {
    %c0_i32 = arith.constant 0 : i32
    %c0_i32_0 = arith.constant 0 : i32
    return %c0_i32, %arg1 : i32, i32
  }
  func.func @transform_3(%arg0: i32, %arg1: i32, %arg2: i32) -> (i32, i32) {
    %c0_i32 = arith.constant 0 : i32
    return %arg0, %arg1 : i32, i32
  }
}

</mosaic_0001>

<llo_original>
// kernel: custom_model_forward.6
$region0: #{custom_model_forward.6}
  #allocation0 [shape = 'u32[]', space=smem, size = 0x4, offset = 0x4, fixed_abs, tag = 'smem constant byte address 0x4 - core index']
  #allocation1 [shape = 'u32[144,128]{1,0:T(1,128)}', space=vmem, size = 0x12000, scoped, tag = 'internal scratch']
  #allocation2 [shape = 'f32[32,32]{1,0:T(8,128)}', space=vmem, size = 0x4000, scoped, tag = 'scratch operand']
  %s0 = inlined_call_operand.vmem [shape: f32[32,64], index: 0, kind: input, shape index: {}]
  %s1 = inlined_call_operand.vmem [shape: bf16[64,32], index: 1, kind: input, shape index: {}]
  %s2 = inlined_call_operand.vmem [shape: f32[1,32], index: 2, kind: input, shape index: {}]
  %s3 = inlined_call_operand.vmem [shape: f32[32,32], index: 3, kind: output, shape index: {}]
  %s4 = sld [smem:[#allocation0]]
  $region30: #{custom_model_forward.6} parent=0
    _
  %s6 = ssub.s32 1, %s4
  %s7 = scalar_select 0, %s6, %s4
  // Predicated region
  $region2: #{custom_model_forward.6} parent=0 // pred_check
    _
  $region3: #{custom_model_forward.6} parent=0 // pred_check_branch
    %9 = sbr.rel (0) target = $region5
  $region4: #{custom_model_forward.6} parent=0 // pred_region
    _
  $region5: #{custom_model_forward.6} parent=0 // pred_fallthru
    _
  // Predicated region
  $region6: #{custom_model_forward.6} parent=0 // pred_check
    _
  $region7: #{custom_model_forward.6} parent=0 // pred_check_branch
    %11 = sbr.rel (0) target = $region9
  $region8: #{custom_model_forward.6} parent=0 // pred_region
    _
  $region9: #{custom_model_forward.6} parent=0 // pred_fallthru
    _
  // Predicated region
  $region10: #{custom_model_forward.6} parent=0 // pred_check
    _
  $region11: #{custom_model_forward.6} parent=0 // pred_check_branch
    %13 = sbr.rel (0) target = $region13
  $region12: #{custom_model_forward.6} parent=0 // pred_region
    _
  $region13: #{custom_model_forward.6} parent=0 // pred_fallthru
    _
  %p15 = scmp.eq.s32.totalorder 0, 0
  // Predicated region
  $region14: #{custom_model_forward.6} parent=0 // pred_check
    %p16 = pneg %p15
  $region15: #{custom_model_forward.6} parent=0 // pred_check_branch
    %18 = sbr.rel (%p16) target = $region17
  $region16: #{custom_model_forward.6} parent=0 // pred_region
    %vm19 = vcmask 261120
    %20 = vst.msk [vmem:[#allocation2] sm:$0xff] %vm19, 0.0
    %21 = vst.msk [vmem:[#allocation2 + $0x8] sm:$0xff] %vm19, 0.0
    %22 = vst.msk [vmem:[#allocation2 + $0x10] sm:$0xff] %vm19, 0.0
    %23 = vst.msk [vmem:[#allocation2 + $0x18] sm:$0xff] %vm19, 0.0
  $region17: #{custom_model_forward.6} parent=0 // pred_fallthru
    _
  %v24 = vld [vmem:[#allocation2] sm:$0xff]
  %v25 = vld [vmem:[#allocation2 + $0x8] sm:$0xff]
  %v26 = vld [vmem:[#allocation2 + $0x10] sm:$0xff]
  %v27 = vld [vmem:[#allocation2 + $0x18] sm:$0xff]
  %v28 = vld [vmem:[%s0] sm:$0xff]
  %v29 = vld [vmem:[%s0 + $0x8] sm:$0xff]
  %v30 = vld [vmem:[%s0 + $0x10] sm:$0xff]
  %v31 = vld [vmem:[%s0 + $0x18] sm:$0xff]
  %v32 = vpack.c.bf16 %v29, %v28
  %v33 = vpack.c.bf16 %v31, %v30
  %v34 = vld [vmem:[%s1] sm:$0xf]
  %v35 = vld [vmem:[%s1 + $0x4] sm:$0xf]
  %v36 = vld [vmem:[%s1 + $0x8] sm:$0xf]
  %v37 = vld [vmem:[%s1 + $0xc] sm:$0xf]
  %v38 = vld [vmem:[%s1 + $0x10] sm:$0xf]
  %v39 = vld [vmem:[%s1 + $0x14] sm:$0xf]
  %v40 = vld [vmem:[%s1 + $0x18] sm:$0xf]
  %v41 = vld [vmem:[%s1 + $0x1c] sm:$0xf]
  %v50 = vunpack.c.l.b16 %v34
  %v51 = vunpack.c.l.b16 %v35
  %v52 = vunpack.c.l.b16 %v36
  %v53 = vunpack.c.l.b16 %v37
  %v54 = vunpack.c.l.b16 %v38
  %v55 = vunpack.c.l.b16 %v39
  %v56 = vunpack.c.l.b16 %v40
  %v57 = vunpack.c.l.b16 %v41
  %v58 = vpack.c.b16 %v51, %v50
  %v59 = vpack.c.b16 %v53, %v52
  %v60 = vpack.c.b16 %v55, %v54
  %v61 = vpack.c.b16 %v57, %v56
  %vm66 = vcmask 523264
  %v68 = vsel %vm66, %v32, 0
  %v71 = vsel %vm66, %v33, 0
  %73 = vmatprep.subr.bf16.mxu0 0
  %74 = vmatpush1.bf16.msra.mxu0 0
  %75 = vmatprep.subr.bf16.mxu0 0
  %76 = vmatpush1.bf16.msra.mxu0 0
  %77 = vmatprep.subr.bf16.mxu0 0
  %78 = vmatpush1.bf16.msra.mxu0 0
  %79 = vmatprep.subr.bf16.mxu0 0
  %80 = vmatpush1.bf16.msra.mxu0 0
  %81 = vmatprep.subr.bf16.mxu0 0
  %82 = vmatpush1.bf16.msra.mxu0 %v61
  %83 = vmatprep.subr.bf16.mxu0 0
  %84 = vmatpush1.bf16.msra.mxu0 %v60
  %85 = vmatprep.subr.bf16.mxu0 0
  %86 = vmatpush1.bf16.msra.mxu0 %v59
  %87 = vmatprep.subr.bf16.mxu0 0
  %88 = vmatpush1.bf16.msra.mxu0 %v58
  %89 = vmatprep.subr.bf16.mxu0 0
  %90 = vmatpush2.bf16.msra.mxu0 0
  %91 = vmatprep.subr.bf16.mxu0 0
  %92 = vmatpush2.bf16.msra.mxu0 0
  %93 = vmatprep.subr.bf16.mxu0 0
  %94 = vmatpush2.bf16.msra.mxu0 0
  %95 = vmatprep.subr.bf16.mxu0 0
  %96 = vmatpush2.bf16.msra.mxu0 0
  %97 = vmatprep.subr.bf16.mxu0 0
  %98 = vmatpush2.bf16.msra.mxu0 0
  %99 = vmatprep.subr.bf16.mxu0 0
  %100 = vmatpush2.bf16.msra.mxu0 0
  %101 = vmatprep.subr.bf16.mxu0 0
  %102 = vmatpush2.bf16.msra.mxu0 0
  %103 = vmatprep.subr.bf16.mxu0 0
  %104 = vmatpush2.bf16.msra.mxu0 0
  %105 = vmatprep.mubr.bf16.mxu0 0
  %106 = vmatmul.mubr.bf16.gmra.mxu0 %v68
  %v107 = vpop.f32.mrf.mxu0
  %v108 = vadd.f32 0.0, %v107
  %v109 = vpop.f32.mrf.mxu0
  %v110 = vpop.f32.mrf.mxu0
  %v111 = vadd.f32 0.0, %v110
  %v112 = vpop.f32.mrf.mxu0
  %113 = vmatprep.mubr.bf16.mxu0 0
  %114 = vmatmul.mubr.bf16.gmra.mxu0 %v71
  %v115 = vpop.f32.mrf.mxu0
  %v116 = vadd.f32 0.0, %v115
  %v117 = vpop.f32.mrf.mxu0
  %v118 = vpop.f32.mrf.mxu0
  %v119 = vadd.f32 0.0, %v118
  %v120 = vpop.f32.mrf.mxu0
  %121 = vdwg.mxu0
  %v122 = vadd.f32 %v24, %v108
  %v123 = vadd.f32 %v25, %v111
  %v124 = vadd.f32 %v26, %v116
  %v125 = vadd.f32 %v27, %v119
  %vm126 = vcmask 261120
  %127 = vst.msk [vmem:[#allocation2] sm:$0xff] %vm126, %v122
  %128 = vst.msk [vmem:[#allocation2 + $0x8] sm:$0xff] %vm126, %v123
  %129 = vst.msk [vmem:[#allocation2 + $0x10] sm:$0xff] %vm126, %v124
  %130 = vst.msk [vmem:[#allocation2 + $0x18] sm:$0xff] %vm126, %v125
  // Predicated region
  $region18: #{custom_model_forward.6} parent=0 // pred_check
    %p131 = pneg %p15
  $region19: #{custom_model_forward.6} parent=0 // pred_check_branch
    %133 = sbr.rel (%p131) target = $region21
  $region20: #{custom_model_forward.6} parent=0 // pred_region
    %v134 = vld [vmem:[#allocation2] sm:$0xff]
    %v135 = vld [vmem:[#allocation2 + $0x8] sm:$0xff]
    %v136 = vld [vmem:[#allocation2 + $0x10] sm:$0xff]
    %v137 = vld [vmem:[#allocation2 + $0x18] sm:$0xff]
    %v138 = vld [vmem:[%s2] sm:$0x1]
    %v140 = vlaneseq
    %v141 = vshrl.u32 %v140, 7
    %v142 = vsub.s32 0, %v141
    %v143 = vrot.slane %v138, %v142
    %v145 = vadd.f32 %v134, %v143
    %v146 = vadd.f32 %v135, %v143
    %v147 = vadd.f32 %v136, %v143
    %v148 = vadd.f32 %v137, %v143
    %149 = vst.msk [vmem:[%s3] sm:$0xff] %vm126, %v145
    %150 = vst.msk [vmem:[%s3 + $0x8] sm:$0xff] %vm126, %v146
    %151 = vst.msk [vmem:[%s3 + $0x10] sm:$0xff] %vm126, %v147
    %152 = vst.msk [vmem:[%s3 + $0x18] sm:$0xff] %vm126, %v148
  $region21: #{custom_model_forward.6} parent=0 // pred_fallthru
    _
  // Predicated region
  $region22: #{custom_model_forward.6} parent=0 // pred_check
    _
  $region23: #{custom_model_forward.6} parent=0 // pred_check_branch
    %154 = sbr.rel (0) target = $region25
  $region24: #{custom_model_forward.6} parent=0 // pred_region
    _
  $region25: #{custom_model_forward.6} parent=0 // pred_fallthru
    _
  // Predicated region
  $region26: #{custom_model_forward.6} parent=0 // pred_check
    _
  $region27: #{custom_model_forward.6} parent=0 // pred_check_branch
    %156 = sbr.rel (0) target = $region29
  $region28: #{custom_model_forward.6} parent=0 // pred_region
    _
  $region29: #{custom_model_forward.6} parent=0 // pred_fallthru
    _

// kernel: custom_model_forward.8
$region0: #{custom_model_forward.8}
  #allocation0 [shape = 'u32[]', space=smem, size = 0x4, offset = 0x4, fixed_abs, tag = 'smem constant byte address 0x4 - core index']
  #allocation1 [shape = 'u32[144,128]{1,0:T(1,128)}', space=vmem, size = 0x12000, scoped, tag = 'internal scratch']
  %s0 = inlined_call_operand.vmem [shape: f32[2,17,32], index: 0, kind: input, shape index: {}]
  %s1 = inlined_call_operand.vmem [shape: f32[1,32], index: 1, kind: input, shape index: {}]
  %s2 = inlined_call_operand.vmem [shape: f32[1,32], index: 2, kind: input, shape index: {}]
  %s3 = inlined_call_operand.vmem [shape: bf16[32,128], index: 3, kind: input, shape index: {}]
  %s4 = inlined_call_operand.vmem [shape: f32[1,128], index: 4, kind: input, shape index: {}]
  %s5 = inlined_call_operand.vmem [shape: bf16[128,32], index: 5, kind: input, shape index: {}]
  %s6 = inlined_call_operand.vmem [shape: f32[1,32], index: 6, kind: input, shape index: {}]
  %s7 = inlined_call_operand.vmem [shape: f32[2,17,32], index: 7, kind: output, shape index: {}]
  %s8 = sld [smem:[#allocation0]]
  $region61: #{custom_model_forward.8} parent=0
    _
  %s10 = ssub.s32 1, %s8
  %s11 = scalar_select 0, %s10, %s8
  loop: start=0, step=1, limit=4
  $region2: #{custom_model_forward.8} parent=0 // loop_pre_header
    _
  $region3: #{custom_model_forward.8} parent=0 // loop_header
    %s13 = sphi 0, %s17
    %p14 = scmp.ge.s32.totalorder %s13, 4
    %s23 = sphi 0, %s25
    %s26 = sphi 0, %s23
    %s27 = sphi 0, %s26
    %s43 = sphi 0, %s27
    %s47 = sphi 0, %s47
    %s49 = sphi 0, %s47
    %s50 = sphi 0, %s49
    %s64 = sphi 0, %s50
    %s68 = sphi 0, %s68
    %s70 = sphi 0, %s68
    %s71 = sphi 0, %s70
    %s85 = sphi 0, %s71
    %s89 = sphi 0, %s89
    %s91 = sphi 0, %s89
    %s92 = sphi 0, %s91
    %s106 = sphi 0, %s92
    %s110 = sphi 0, %s110
    %s112 = sphi 0, %s110
    %s113 = sphi 0, %s112
    %s127 = sphi 0, %s113
    %s131 = sphi 0, %s131
    %s133 = sphi 0, %s131
    %s134 = sphi 0, %s133
    %s148 = sphi 0, %s134
    %s152 = sphi 0, %s152
    %s154 = sphi 0, %s152
    %s155 = sphi 0, %s154
    %s169 = sphi 0, %s155
    %s175 = sphi 0, %s177
    %s178 = sphi 0, %s175
    %s179 = sphi 0, %s178
    %s195 = sphi 0, %s179
  $region4: #{custom_model_forward.8} parent=0 // loop_header_branch
    %16 = sbr.rel (%p14) target = $region8
  $region5: #{custom_model_forward.8} parent=0 // loop_body
    %s18 = ssub.s32 %s13, 1
    %s19 = ssub.s32 %s13, 2
    %s20 = sadd.s32 %s13, 1
    %s21 = ssub.s32 %s13, %s20
    %p22 = scmp.eq.s32.totalorder %s21, 0
    %s24 = sadd.s32 %s23, 1
    %s25 = scalar_select %p22, %s23, %s24
    %p28 = pneg %p22
    %p29 = scmp.eq.s32.totalorder %s13, 1
    %p30 = por %p28, %p29
    %p31 = scmp.ne.s32.totalorder %s23, %s26
    %p32 = scmp.eq.s32.totalorder %s13, 0
    %p33 = por %p31, %p32
    %p34 = scmp.ne.s32.totalorder %s23, %s26
    %p35 = scmp.eq.s32.totalorder %s18, 1
    %p36 = por %p34, %p35
    %p37 = scmp.ne.s32.totalorder %s26, %s27
    %p38 = scmp.eq.s32.totalorder %s18, 0
    %p39 = por %p37, %p38
    %p40 = scmp.ne.s32.totalorder %s26, %s27
    %p41 = scmp.eq.s32.totalorder %s19, 1
    %p42 = por %p40, %p41
    %p44 = scmp.ne.s32.totalorder %s27, %s43
    %p45 = scmp.eq.s32.totalorder %s19, 0
    %p46 = por %p44, %p45
    %s48 = sadd.s32 %s47, 1
    %p51 = scmp.eq.s32.totalorder %s13, 1
    %p52 = scmp.ne.s32.totalorder %s47, %s49
    %p53 = scmp.eq.s32.totalorder %s13, 0
    %p54 = por %p52, %p53
    %p55 = scmp.ne.s32.totalorder %s47, %s49
    %p56 = scmp.eq.s32.totalorder %s18, 1
    %p57 = por %p55, %p56
    %p58 = scmp.ne.s32.totalorder %s49, %s50
    %p59 = scmp.eq.s32.totalorder %s18, 0
    %p60 = por %p58, %p59
    %p61 = scmp.ne.s32.totalorder %s49, %s50
    %p62 = scmp.eq.s32.totalorder %s19, 1
    %p63 = por %p61, %p62
    %p65 = scmp.ne.s32.totalorder %s50, %s64
    %p66 = scmp.eq.s32.totalorder %s19, 0
    %p67 = por %p65, %p66
    %s69 = sadd.s32 %s68, 1
    %p72 = scmp.eq.s32.totalorder %s13, 1
    %p73 = scmp.ne.s32.totalorder %s68, %s70
    %p74 = scmp.eq.s32.totalorder %s13, 0
    %p75 = por %p73, %p74
    %p76 = scmp.ne.s32.totalorder %s68, %s70
    %p77 = scmp.eq.s32.totalorder %s18, 1
    %p78 = por %p76, %p77
    %p79 = scmp.ne.s32.totalorder %s70, %s71
    %p80 = scmp.eq.s32.totalorder %s18, 0
    %p81 = por %p79, %p80
    %p82 = scmp.ne.s32.totalorder %s70, %s71
    %p83 = scmp.eq.s32.totalorder %s19, 1
    %p84 = por %p82, %p83
    %p86 = scmp.ne.s32.totalorder %s71, %s85
    %p87 = scmp.eq.s32.totalorder %s19, 0
    %p88 = por %p86, %p87
    %s90 = sadd.s32 %s89, 1
    %p93 = scmp.eq.s32.totalorder %s13, 1
    %p94 = scmp.ne.s32.totalorder %s89, %s91
    %p95 = scmp.eq.s32.totalorder %s13, 0
    %p96 = por %p94, %p95
    %p97 = scmp.ne.s32.totalorder %s89, %s91
    %p98 = scmp.eq.s32.totalorder %s18, 1
    %p99 = por %p97, %p98
    %p100 = scmp.ne.s32.totalorder %s91, %s92
    %p101 = scmp.eq.s32.totalorder %s18, 0
    %p102 = por %p100, %p101
    %p103 = scmp.ne.s32.totalorder %s91, %s92
    %p104 = scmp.eq.s32.totalorder %s19, 1
    %p105 = por %p103, %p104
    %p107 = scmp.ne.s32.totalorder %s92, %s106
    %p108 = scmp.eq.s32.totalorder %s19, 0
    %p109 = por %p107, %p108
    %s111 = sadd.s32 %s110, 1
    %p114 = scmp.eq.s32.totalorder %s13, 1
    %p115 = scmp.ne.s32.totalorder %s110, %s112
    %p116 = scmp.eq.s32.totalorder %s13, 0
    %p117 = por %p115, %p116
    %p118 = scmp.ne.s32.totalorder %s110, %s112
    %p119 = scmp.eq.s32.totalorder %s18, 1
    %p120 = por %p118, %p119
    %p121 = scmp.ne.s32.totalorder %s112, %s113
    %p122 = scmp.eq.s32.totalorder %s18, 0
    %p123 = por %p121, %p122
    %p124 = scmp.ne.s32.totalorder %s112, %s113
    %p125 = scmp.eq.s32.totalorder %s19, 1
    %p126 = por %p124, %p125
    %p128 = scmp.ne.s32.totalorder %s113, %s127
    %p129 = scmp.eq.s32.totalorder %s19, 0
    %p130 = por %p128, %p129
    %s132 = sadd.s32 %s131, 1
    %p135 = scmp.eq.s32.totalorder %s13, 1
    %p136 = scmp.ne.s32.totalorder %s131, %s133
    %p137 = scmp.eq.s32.totalorder %s13, 0
    %p138 = por %p136, %p137
    %p139 = scmp.ne.s32.totalorder %s131, %s133
    %p140 = scmp.eq.s32.totalorder %s18, 1
    %p141 = por %p139, %p140
    %p142 = scmp.ne.s32.totalorder %s133, %s134
    %p143 = scmp.eq.s32.totalorder %s18, 0
    %p144 = por %p142, %p143
    %p145 = scmp.ne.s32.totalorder %s133, %s134
    %p146 = scmp.eq.s32.totalorder %s19, 1
    %p147 = por %p145, %p146
    %p149 = scmp.ne.s32.totalorder %s134, %s148
    %p150 = scmp.eq.s32.totalorder %s19, 0
    %p151 = por %p149, %p150
    %s153 = sadd.s32 %s152, 1
    %p156 = scmp.eq.s32.totalorder %s13, 1
    %p157 = scmp.ne.s32.totalorder %s152, %s154
    %p158 = scmp.eq.s32.totalorder %s13, 0
    %p159 = por %p157, %p158
    %p160 = scmp.ne.s32.totalorder %s152, %s154
    %p161 = scmp.eq.s32.totalorder %s18, 1
    %p162 = por %p160, %p161
    %p163 = scmp.ne.s32.totalorder %s154, %s155
    %p164 = scmp.eq.s32.totalorder %s18, 0
    %p165 = por %p163, %p164
    %p166 = scmp.ne.s32.totalorder %s154, %s155
    %p167 = scmp.eq.s32.totalorder %s19, 1
    %p168 = por %p166, %p167
    %p170 = scmp.ne.s32.totalorder %s155, %s169
    %p171 = scmp.eq.s32.totalorder %s19, 0
    %p172 = por %p170, %p171
    %s173 = ssub.s32 %s13, %s20
    %p174 = scmp.eq.s32.totalorder %s173, 0
    %s176 = sadd.s32 %s175, 1
    %s177 = scalar_select %p174, %s175, %s176
    %p180 = pneg %p174
    %p181 = scmp.eq.s32.totalorder %s13, 1
    %p182 = por %p180, %p181
    %p183 = scmp.ne.s32.totalorder %s175, %s178
    %p184 = scmp.eq.s32.totalorder %s13, 0
    %p185 = por %p183, %p184
    %p186 = scmp.ne.s32.totalorder %s175, %s178
    %p187 = scmp.eq.s32.totalorder %s18, 1
    %p188 = por %p186, %p187
    %p189 = scmp.ne.s32.totalorder %s178, %s179
    %p190 = scmp.eq.s32.totalorder %s18, 0
    %p191 = por %p189, %p190
    %p192 = scmp.ne.s32.totalorder %s178, %s179
    %p193 = scmp.eq.s32.totalorder %s19, 1
    %p194 = por %p192, %p193
    %p196 = scmp.ne.s32.totalorder %s179, %s195
    %p197 = scmp.eq.s32.totalorder %s19, 0
    %p198 = por %p196, %p197
    %p199 = scmp.le.s32.totalorder 1, %s13
    %p200 = scmp.lt.s32.totalorder %s13, 3
    %p201 = pnand %p199, %p200
    %p202 = pneg %p201
    // Predicated region
    $region9: #{custom_model_forward.8} parent=5 // pred_check
      _
    $region10: #{custom_model_forward.8} parent=5 // pred_check_branch
      %204 = sbr.rel (%p201) target = $region12
    $region11: #{custom_model_forward.8} parent=5 // pred_region
      %s205 = ssub.s32 %s13, 1
      // Predicated region
      $region13: #{custom_model_forward.8} parent=11 // pred_check
        %p206 = pneg %p60
      $region14: #{custom_model_forward.8} parent=11 // pred_check_branch
        %208 = sbr.rel (%p206) target = $region16
      $region15: #{custom_model_forward.8} parent=11 // pred_region
        _
      $region16: #{custom_model_forward.8} parent=11 // pred_fallthru
        _
      // Predicated region
      $region17: #{custom_model_forward.8} parent=11 // pred_check
        %p209 = pneg %p81
      $region18: #{custom_model_forward.8} parent=11 // pred_check_branch
        %211 = sbr.rel (%p209) target = $region20
      $region19: #{custom_model_forward.8} parent=11 // pred_region
        _
      $region20: #{custom_model_forward.8} parent=11 // pred_fallthru
        _
      // Predicated region
      $region21: #{custom_model_forward.8} parent=11 // pred_check
        %p212 = pneg %p102
      $region22: #{custom_model_forward.8} parent=11 // pred_check_branch
        %214 = sbr.rel (%p212) target = $region24
      $region23: #{custom_model_forward.8} parent=11 // pred_region
        _
      $region24: #{custom_model_forward.8} parent=11 // pred_fallthru
        _
      // Predicated region
      $region25: #{custom_model_forward.8} parent=11 // pred_check
        %p215 = pneg %p123
      $region26: #{custom_model_forward.8} parent=11 // pred_check_branch
        %217 = sbr.rel (%p215) target = $region28
      $region27: #{custom_model_forward.8} parent=11 // pred_region
        _
      $region28: #{custom_model_forward.8} parent=11 // pred_fallthru
        _
      // Predicated region
      $region29: #{custom_model_forward.8} parent=11 // pred_check
        %p218 = pneg %p144
      $region30: #{custom_model_forward.8} parent=11 // pred_check_branch
        %220 = sbr.rel (%p218) target = $region32
      $region31: #{custom_model_forward.8} parent=11 // pred_region
        _
      $region32: #{custom_model_forward.8} parent=11 // pred_fallthru
        _
      // Predicated region
      $region33: #{custom_model_forward.8} parent=11 // pred_check
        %p221 = pneg %p165
      $region34: #{custom_model_forward.8} parent=11 // pred_check_branch
        %223 = sbr.rel (%p221) target = $region36
      $region35: #{custom_model_forward.8} parent=11 // pred_region
        _
      $region36: #{custom_model_forward.8} parent=11 // pred_fallthru
        _
    $region12: #{custom_model_forward.8} parent=5 // pred_fallthru
      _
    %p224 = scmp.lt.s32.totalorder %s13, 2
    // Predicated region
    $region37: #{custom_model_forward.8} parent=5 // pred_check
      %p225 = pneg %p224
    $region38: #{custom_model_forward.8} parent=5 // pred_check_branch
      %227 = sbr.rel (%p225) target = $region40
    $region39: #{custom_model_forward.8} parent=5 // pred_region
      // Predicated region
      $region41: #{custom_model_forward.8} parent=39 // pred_check
        %p228 = pneg %p33
      $region42: #{custom_model_forward.8} parent=39 // pred_check_branch
        %230 = sbr.rel (%p228) target = $region44
      $region43: #{custom_model_forward.8} parent=39 // pred_region
        %p231 = scmp.lt.s32.totalorder %s13, 1
        %s232 = scalar_select %p231, %s13, 1
        %s233 = smul.addr %s232, 3
        %s234 = smul.addr %s233, 8
        %s235 = scalar_lea.vmem %s0, %s234
      $region44: #{custom_model_forward.8} parent=39 // pred_fallthru
        _
    $region40: #{custom_model_forward.8} parent=5 // pred_fallthru
      _
    %p236 = scmp.le.s32.totalorder 1, %s13
    %p237 = scmp.lt.s32.totalorder %s13, 3
    %p238 = pnand %p236, %p237
    %p239 = pneg %p238
    // Predicated region
    $region45: #{custom_model_forward.8} parent=5 // pred_check
      _
    $region46: #{custom_model_forward.8} parent=5 // pred_check_branch
      %241 = sbr.rel (%p238) target = $region48
    $region47: #{custom_model_forward.8} parent=5 // pred_region
      %s242 = ssub.s32 %s13, 1
      %p243 = scmp.lt.s32.totalorder %s18, 1
      %s244 = scalar_select %p243, %s18, 1
      %s245 = smul.addr %s244, 3
      %s246 = smul.addr %s245, 8
      %s247 = scalar_lea.vmem %s0, %s246
      %p248 = pneg %p39
      %p249 = pneg %p36
      %p250 = pneg %p60
      %p251 = pneg %p57
      %p252 = pneg %p81
      %p253 = pneg %p78
      %p254 = pneg %p102
      %p255 = pneg %p99
      %p256 = pneg %p123
      %p257 = pneg %p120
      %p258 = pneg %p144
      %p259 = pneg %p141
      %p260 = pneg %p165
      %p261 = pneg %p162
      %p262 = pneg %p191
      %p263 = pneg %p188
      %p264 = scmp.lt.s32.totalorder %s18, 1
      %s265 = scalar_select %p264, %s18, 1
      %s266 = smul.addr %s265, 3
      %s267 = smul.addr %s266, 8
      %s268 = scalar_lea.vmem %s7, %s267
      %p269 = scmp.lt.s32.totalorder %s18, 1
      %s270 = scalar_select %p269, %s18, 1
      %s271 = smul.addr %s270, 3
      %s272 = smul.addr %s271, 8
      %s273 = scalar_lea.vmem %s0, %s272
      %p274 = scmp.lt.s32.totalorder %s18, 1
      %s275 = scalar_select %p274, %s18, 1
      %s276 = smul.addr %s275, 3
      %s277 = smul.addr %s276, 8
      %s278 = scalar_lea.vmem %s7, %s277
      %v280 = vld [vmem:[%s273] sm:$0xff]
      %v281 = vld [vmem:[%s273 + $0x8] sm:$0xff]
      %v282 = vld [vmem:[%s273 + $0x10] sm:$0x1]
      %vm283 = vcmask 261120
      %v284 = vsel %vm283, %v280, 0.0
      %285 = vadd.xlane.f32.xlu0 %v284
      %v286 = vpop.xlane.xlu0 %285
      %v287 = vsel %vm283, %v281, 0.0
      %288 = vadd.xlane.f32.xlu0 %v287
      %v289 = vpop.xlane.xlu0 %288
      %vm290 = vcmask 253952
      %v291 = vsel %vm290, %v282, 0.0
      %292 = vadd.xlane.f32.xlu0 %v291
      %v293 = vpop.xlane.xlu0 %292
      %v294 = vrcp.pop 32.0
      %v295 = vmul.f32 %v286, %v294
      %v296 = vmul.f32 %v289, %v294
      %v297 = vmul.f32 %v293, %v294
      %v298 = vsub.f32 %v280, %v295
      %v299 = vsub.f32 %v281, %v296
      %v300 = vsub.f32 %v282, %v297
      %v301 = vmul.f32 %v298, %v298
      %v302 = vmul.f32 %v299, %v299
      %v303 = vmul.f32 %v300, %v300
      %v304 = vsel %vm283, %v301, 0.0
      %305 = vadd.xlane.f32.xlu0 %v304
      %v306 = vpop.xlane.xlu0 %305
      %v307 = vsel %vm283, %v302, 0.0
      %308 = vadd.xlane.f32.xlu0 %v307
      %v309 = vpop.xlane.xlu0 %308
      %v310 = vsel %vm290, %v303, 0.0
      %311 = vadd.xlane.f32.xlu0 %v310
      %v312 = vpop.xlane.xlu0 %311
      %v313 = vmul.f32 %v306, %v294
      %v314 = vmul.f32 %v309, %v294
      %v315 = vmul.f32 %v312, %v294
      %v316 = vadd.f32 %v313, 1e-06
      %v317 = vadd.f32 %v314, 1e-06
      %v318 = vadd.f32 %v315, 1e-06
      %v319 = vrsqrt.pop %v316
      %v320 = vrsqrt.pop %v317
      %v321 = vrsqrt.pop %v318
      %v322 = vmul.f32 %v298, %v319
      %v323 = vmul.f32 %v299, %v320
      %v324 = vmul.f32 %v300, %v321
      %v325 = vld [vmem:[%s1] sm:$0x1]
      %v327 = vlaneseq
      %v328 = vshrl.u32 %v327, 7
      %v329 = vsub.s32 0, %v328
      %v330 = vrot.slane %v325, %v329
      %v332 = vmul.f32 %v322, %v330
      %v333 = vmul.f32 %v323, %v330
      %v334 = vmul.f32 %v324, %v330
      %v335 = vld [vmem:[%s2] sm:$0x1]
      %v337 = vlaneseq
      %v338 = vshrl.u32 %v337, 7
      %v339 = vsub.s32 0, %v338
      %v340 = vrot.slane %v335, %v339
      %v342 = vadd.f32 %v332, %v340
      %v343 = vadd.f32 %v333, %v340
      %v344 = vadd.f32 %v334, %v340
      %v345 = vpack.c.bf16 %v343, %v342
      %v346 = vpack.c.bf16 %v344, %v344
      %v347 = vld [vmem:[%s3] sm:$0xf]
      %v348 = vld [vmem:[%s3 + $0x4] sm:$0xf]
      %v349 = vld [vmem:[%s3 + $0x8] sm:$0xf]
      %v350 = vld [vmem:[%s3 + $0xc] sm:$0xf]
      %v351 = vld [vmem:[%s4] sm:$0x1]
      %v353 = vlaneseq
      %v354 = vshrl.u32 %v353, 7
      %v355 = vsub.s32 0, %v354
      %v356 = vrot.slane %v351, %v355
      %v362 = vunpack.c.l.b16 %v347
      %v363 = vunpack.c.l.b16 %v348
      %v364 = vunpack.c.l.b16 %v349
      %v365 = vunpack.c.l.b16 %v350
      %v366 = vpack.c.b16 %v363, %v362
      %v367 = vpack.c.b16 %v365, %v364
      %v371 = vsel %vm283, %v345, 0
      %v374 = vsel %vm283, %v346, 0
      %376 = vmatprep.subr.bf16.mxu0 0
      %377 = vmatpush1.bf16.msra.mxu0 0
      %378 = vmatprep.subr.bf16.mxu0 0
      %379 = vmatpush1.bf16.msra.mxu0 0
      %380 = vmatprep.subr.bf16.mxu0 0
      %381 = vmatpush1.bf16.msra.mxu0 0
      %382 = vmatprep.subr.bf16.mxu0 0
      %383 = vmatpush1.bf16.msra.mxu0 0
      %384 = vmatprep.subr.bf16.mxu0 0
      %385 = vmatpush1.bf16.msra.mxu0 0
      %386 = vmatprep.subr.bf16.mxu0 0
      %387 = vmatpush1.bf16.msra.mxu0 0
      %388 = vmatprep.subr.bf16.mxu0 0
      %389 = vmatpush1.bf16.msra.mxu0 %v367
      %390 = vmatprep.subr.bf16.mxu0 0
      %391 = vmatpush1.bf16.msra.mxu0 %v366
      %392 = vmatprep.subr.bf16.mxu0 0
      %393 = vmatpush2.bf16.msra.mxu0 0
      %394 = vmatprep.subr.bf16.mxu0 0
      %395 = vmatpush2.bf16.msra.mxu0 0
      %396 = vmatprep.subr.bf16.mxu0 0
      %397 = vmatpush2.bf16.msra.mxu0 0
      %398 = vmatprep.subr.bf16.mxu0 0
      %399 = vmatpush2.bf16.msra.mxu0 0
      %400 = vmatprep.subr.bf16.mxu0 0
      %401 = vmatpush2.bf16.msra.mxu0 0
      %402 = vmatprep.subr.bf16.mxu0 0
      %403 = vmatpush2.bf16.msra.mxu0 0
      %404 = vmatprep.subr.bf16.mxu0 0
      %405 = vmatpush2.bf16.msra.mxu0 0
      %406 = vmatprep.subr.bf16.mxu0 0
      %407 = vmatpush2.bf16.msra.mxu0 0
      %408 = vmatprep.mubr.bf16.mxu0 0
      %409 = vmatmul.mubr.bf16.gmra.mxu0 %v371
      %v410 = vpop.f32.mrf.mxu0
      %v411 = vadd.f32 %v356, %v410
      %v412 = vpop.f32.mrf.mxu0
      %v413 = vpop.f32.mrf.mxu0
      %v414 = vadd.f32 %v356, %v413
      %v415 = vpop.f32.mrf.mxu0
      %416 = vmatprep.mubr.bf16.mxu0 0
      %417 = vmatmul.mubr.bf16.gmra.mxu0 %v374
      %v418 = vpop.f32.mrf.mxu0
      %v419 = vadd.f32 %v356, %v418
      %v420 = vpop.f32.mrf.mxu0
      %v421 = vpop.f32.mrf.mxu0
      %v422 = vpop.f32.mrf.mxu0
      %423 = vdwg.mxu0
      %v424 = vmul.f32 %v411, %v411
      %v425 = vmul.f32 %v414, %v414
      %v426 = vmul.f32 %v419, %v419
      %v427 = vmul.f32 %v411, %v424
      %v428 = vmul.f32 %v414, %v425
      %v429 = vmul.f32 %v419, %v426
      %v430 = vmul.f32 %v427, 0.044715
      %v431 = vmul.f32 %v428, 0.044715
      %v432 = vmul.f32 %v429, 0.044715
      %v433 = vadd.f32 %v411, %v430
      %v434 = vadd.f32 %v414, %v431
      %v435 = vadd.f32 %v419, %v432
      %v436 = vmul.f32 %v433, 0.7978846
      %v437 = vmul.f32 %v434, 0.7978846
      %v438 = vmul.f32 %v435, 0.7978846
      %v439 = vtanh.pop %v436
      %v440 = vtanh.pop %v437
      %v441 = vtanh.pop %v438
      %v442 = vadd.f32 %v439, 1.0
      %v443 = vadd.f32 %v440, 1.0
      %v444 = vadd.f32 %v441, 1.0
      %v445 = vmul.f32 %v442, 0.5
      %v446 = vmul.f32 %v443, 0.5
      %v447 = vmul.f32 %v444, 0.5
      %v448 = vmul.f32 %v411, %v445
      %v449 = vmul.f32 %v414, %v446
      %v450 = vmul.f32 %v419, %v447
      %v451 = vpack.c.bf16 %v449, %v448
      %v452 = vpack.c.bf16 %v450, %v450
      %v453 = vld [vmem:[%s5] sm:$0xf]
      %v454 = vld [vmem:[%s5 + $0x4] sm:$0xf]
      %v455 = vld [vmem:[%s5 + $0x8] sm:$0xf]
      %v456 = vld [vmem:[%s5 + $0xc] sm:$0xf]
      %v457 = vld [vmem:[%s5 + $0x10] sm:$0xf]
      %v458 = vld [vmem:[%s5 + $0x14] sm:$0xf]
      %v459 = vld [vmem:[%s5 + $0x18] sm:$0xf]
      %v460 = vld [vmem:[%s5 + $0x1c] sm:$0xf]
      %v461 = vld [vmem:[%s5 + $0x20] sm:$0xf]
      %v462 = vld [vmem:[%s5 + $0x24] sm:$0xf]
      %v463 = vld [vmem:[%s5 + $0x28] sm:$0xf]
      %v464 = vld [vmem:[%s5 + $0x2c] sm:$0xf]
      %v465 = vld [vmem:[%s5 + $0x30] sm:$0xf]
      %v466 = vld [vmem:[%s5 + $0x34] sm:$0xf]
      %v467 = vld [vmem:[%s5 + $0x38] sm:$0xf]
      %v468 = vld [vmem:[%s5 + $0x3c] sm:$0xf]
      %v469 = vld [vmem:[%s6] sm:$0x1]
      %v471 = vlaneseq
      %v472 = vshrl.u32 %v471, 7
      %v473 = vsub.s32 0, %v472
      %v474 = vrot.slane %v469, %v473
      %v492 = vunpack.c.l.b16 %v453
      %v493 = vunpack.c.l.b16 %v454
      %v494 = vunpack.c.l.b16 %v455
      %v495 = vunpack.c.l.b16 %v456
      %v496 = vunpack.c.l.b16 %v457
      %v497 = vunpack.c.l.b16 %v458
      %v498 = vunpack.c.l.b16 %v459
      %v499 = vunpack.c.l.b16 %v460
      %v500 = vunpack.c.l.b16 %v461
      %v501 = vunpack.c.l.b16 %v462
      %v502 = vunpack.c.l.b16 %v463
      %v503 = vunpack.c.l.b16 %v464
      %v504 = vunpack.c.l.b16 %v465
      %v505 = vunpack.c.l.b16 %v466
      %v506 = vunpack.c.l.b16 %v467
      %v507 = vunpack.c.l.b16 %v468
      %v508 = vpack.c.b16 %v493, %v492
      %v509 = vpack.c.b16 %v495, %v494
      %v510 = vpack.c.b16 %v497, %v496
      %v511 = vpack.c.b16 %v499, %v498
      %v512 = vpack.c.b16 %v501, %v500
      %v513 = vpack.c.b16 %v503, %v502
      %v514 = vpack.c.b16 %v505, %v504
      %v515 = vpack.c.b16 %v507, %v506
      %524 = vmatprep.subr.bf16.mxu0 0
      %525 = vmatpush1.bf16.msra.mxu0 %v515
      %526 = vmatprep.subr.bf16.mxu0 0
      %527 = vmatpush1.bf16.msra.mxu0 %v514
      %528 = vmatprep.subr.bf16.mxu0 0
      %529 = vmatpush1.bf16.msra.mxu0 %v513
      %530 = vmatprep.subr.bf16.mxu0 0
      %531 = vmatpush1.bf16.msra.mxu0 %v512
      %532 = vmatprep.subr.bf16.mxu0 0
      %533 = vmatpush1.bf16.msra.mxu0 %v511
      %534 = vmatprep.subr.bf16.mxu0 0
      %535 = vmatpush1.bf16.msra.mxu0 %v510
      %536 = vmatprep.subr.bf16.mxu0 0
      %537 = vmatpush1.bf16.msra.mxu0 %v509
      %538 = vmatprep.subr.bf16.mxu0 0
      %539 = vmatpush1.bf16.msra.mxu0 %v508
      %540 = vmatprep.subr.bf16.mxu0 0
      %541 = vmatpush2.bf16.msra.mxu0 0
      %542 = vmatprep.subr.bf16.mxu0 0
      %543 = vmatpush2.bf16.msra.mxu0 0
      %544 = vmatprep.subr.bf16.mxu0 0
      %545 = vmatpush2.bf16.msra.mxu0 0
      %546 = vmatprep.subr.bf16.mxu0 0
      %547 = vmatpush2.bf16.msra.mxu0 0
      %548 = vmatprep.subr.bf16.mxu0 0
      %549 = vmatpush2.bf16.msra.mxu0 0
      %550 = vmatprep.subr.bf16.mxu0 0
      %551 = vmatpush2.bf16.msra.mxu0 0
      %552 = vmatprep.subr.bf16.mxu0 0
      %553 = vmatpush2.bf16.msra.mxu0 0
      %554 = vmatprep.subr.bf16.mxu0 0
      %555 = vmatpush2.bf16.msra.mxu0 0
      %556 = vmatprep.mubr.bf16.mxu0 0
      %557 = vmatmul.mubr.bf16.gmra.mxu0 %v451
      %v558 = vpop.f32.mrf.mxu0
      %v559 = vadd.f32 %v474, %v558
      %v560 = vpop.f32.mrf.mxu0
      %v561 = vpop.f32.mrf.mxu0
      %v562 = vadd.f32 %v474, %v561
      %v563 = vpop.f32.mrf.mxu0
      %564 = vmatprep.mubr.bf16.mxu0 0
      %565 = vmatmul.mubr.bf16.gmra.mxu0 %v452
      %v566 = vpop.f32.mrf.mxu0
      %v567 = vadd.f32 %v474, %v566
      %v568 = vpop.f32.mrf.mxu0
      %v569 = vpop.f32.mrf.mxu0
      %v570 = vpop.f32.mrf.mxu0
      %571 = vdwg.mxu0
      %v572 = vadd.f32 %v280, %v559
      %v573 = vadd.f32 %v281, %v562
      %v574 = vadd.f32 %v282, %v567
      %575 = vst.msk [vmem:[%s278] sm:$0xff] %vm283, %v572
      %576 = vst.msk [vmem:[%s278 + $0x8] sm:$0xff] %vm283, %v573
      %577 = vst.msk [vmem:[%s278 + $0x10] sm:$0x1] %vm290, %v574
      %p578 = scmp.lt.s32.totalorder %s18, 1
      %s579 = scalar_select %p578, %s18, 1
      %s580 = smul.addr %s579, 3
      %s581 = smul.addr %s580, 8
      %s582 = scalar_lea.vmem %s7, %s581
      // Predicated region
      $region49: #{custom_model_forward.8} parent=47 // pred_check
        %p583 = pneg %p188
      $region50: #{custom_model_forward.8} parent=47 // pred_check_branch
        %585 = sbr.rel (%p583) target = $region52
      $region51: #{custom_model_forward.8} parent=47 // pred_region
        _
      $region52: #{custom_model_forward.8} parent=47 // pred_fallthru
        _
    $region48: #{custom_model_forward.8} parent=5 // pred_fallthru
      _
    %p586 = scmp.le.s32.totalorder 2, %s13
    // Predicated region
    $region53: #{custom_model_forward.8} parent=5 // pred_check
      %p587 = pneg %p586
    $region54: #{custom_model_forward.8} parent=5 // pred_check_branch
      %589 = sbr.rel (%p587) target = $region56
    $region55: #{custom_model_forward.8} parent=5 // pred_region
      %s590 = ssub.s32 %s13, 2
      // Predicated region
      $region57: #{custom_model_forward.8} parent=55 // pred_check
        %p591 = pneg %p194
      $region58: #{custom_model_forward.8} parent=55 // pred_check_branch
        %593 = sbr.rel (%p591) target = $region60
      $region59: #{custom_model_forward.8} parent=55 // pred_region
        %p594 = scmp.lt.s32.totalorder %s19, 1
        %s595 = scalar_select %p594, %s19, 1
        %s596 = smul.addr %s595, 3
        %s597 = smul.addr %s596, 8
        %s598 = scalar_lea.vmem %s7, %s597
      $region60: #{custom_model_forward.8} parent=55 // pred_fallthru
        _
    $region56: #{custom_model_forward.8} parent=5 // pred_fallthru
      _
  $region6: #{custom_model_forward.8} parent=0 // loop_footer
    %s17 = sadd.s32 1, %s13
  $region7: #{custom_model_forward.8} parent=0 // loop_footer_branch
    %12 = sbr.rel target = $region3
  $region8: #{custom_model_forward.8} parent=0 // loop_exit
    _

// kernel: custom_model_forward.7
$region0: #{custom_model_forward.7}
  #allocation0 [shape = 'u32[]', space=smem, size = 0x4, offset = 0x4, fixed_abs, tag = 'smem constant byte address 0x4 - core index']
  #allocation1 [shape = 'u32[144,128]{1,0:T(1,128)}', space=vmem, size = 0x12000, scoped, tag = 'internal scratch']
  %s0 = inlined_call_operand.vmem [shape: f32[2,17,32], index: 0, kind: input, shape index: {}]
  %s1 = inlined_call_operand.vmem [shape: f32[1,32], index: 1, kind: input, shape index: {}]
  %s2 = inlined_call_operand.vmem [shape: f32[1,32], index: 2, kind: input, shape index: {}]
  %s3 = inlined_call_operand.vmem [shape: bf16[4,32,8], index: 3, kind: input, shape index: {}]
  %s4 = inlined_call_operand.vmem [shape: bf16[4,32,8], index: 4, kind: input, shape index: {}]
  %s5 = inlined_call_operand.vmem [shape: bf16[4,32,8], index: 5, kind: input, shape index: {}]
  %s6 = inlined_call_operand.vmem [shape: f32[4,1,8], index: 6, kind: input, shape index: {}]
  %s7 = inlined_call_operand.vmem [shape: f32[4,1,8], index: 7, kind: input, shape index: {}]
  %s8 = inlined_call_operand.vmem [shape: f32[4,1,8], index: 8, kind: input, shape index: {}]
  %s9 = inlined_call_operand.vmem [shape: bf16[4,8,32], index: 9, kind: input, shape index: {}]
  %s10 = inlined_call_operand.vmem [shape: f32[1,32], index: 10, kind: input, shape index: {}]
  %s11 = inlined_call_operand.vmem [shape: f32[2,17,32], index: 11, kind: output, shape index: {}]
  %s12 = sld [smem:[#allocation0]]
  $region77: #{custom_model_forward.7} parent=0
    _
  %s14 = ssub.s32 1, %s12
  %s15 = scalar_select 0, %s14, %s12
  loop: start=0, step=1, limit=4
  $region2: #{custom_model_forward.7} parent=0 // loop_pre_header
    _
  $region3: #{custom_model_forward.7} parent=0 // loop_header
    %s17 = sphi 0, %s21
    %p18 = scmp.ge.s32.totalorder %s17, 4
    %s27 = sphi 0, %s29
    %s30 = sphi 0, %s27
    %s31 = sphi 0, %s30
    %s47 = sphi 0, %s31
    %s51 = sphi 0, %s51
    %s53 = sphi 0, %s51
    %s54 = sphi 0, %s53
    %s68 = sphi 0, %s54
    %s72 = sphi 0, %s72
    %s74 = sphi 0, %s72
    %s75 = sphi 0, %s74
    %s89 = sphi 0, %s75
    %s93 = sphi 0, %s93
    %s95 = sphi 0, %s93
    %s96 = sphi 0, %s95
    %s110 = sphi 0, %s96
    %s114 = sphi 0, %s114
    %s116 = sphi 0, %s114
    %s117 = sphi 0, %s116
    %s131 = sphi 0, %s117
    %s135 = sphi 0, %s135
    %s137 = sphi 0, %s135
    %s138 = sphi 0, %s137
    %s152 = sphi 0, %s138
    %s156 = sphi 0, %s156
    %s158 = sphi 0, %s156
    %s159 = sphi 0, %s158
    %s173 = sphi 0, %s159
    %s177 = sphi 0, %s177
    %s179 = sphi 0, %s177
    %s180 = sphi 0, %s179
    %s194 = sphi 0, %s180
    %s198 = sphi 0, %s198
    %s200 = sphi 0, %s198
    %s201 = sphi 0, %s200
    %s215 = sphi 0, %s201
    %s219 = sphi 0, %s219
    %s221 = sphi 0, %s219
    %s222 = sphi 0, %s221
    %s236 = sphi 0, %s222
    %s240 = sphi 0, %s240
    %s242 = sphi 0, %s240
    %s243 = sphi 0, %s242
    %s257 = sphi 0, %s243
    %s263 = sphi 0, %s265
    %s266 = sphi 0, %s263
    %s267 = sphi 0, %s266
    %s283 = sphi 0, %s267
  $region4: #{custom_model_forward.7} parent=0 // loop_header_branch
    %20 = sbr.rel (%p18) target = $region8
  $region5: #{custom_model_forward.7} parent=0 // loop_body
    %s22 = ssub.s32 %s17, 1
    %s23 = ssub.s32 %s17, 2
    %s24 = sadd.s32 %s17, 1
    %s25 = ssub.s32 %s17, %s24
    %p26 = scmp.eq.s32.totalorder %s25, 0
    %s28 = sadd.s32 %s27, 1
    %s29 = scalar_select %p26, %s27, %s28
    %p32 = pneg %p26
    %p33 = scmp.eq.s32.totalorder %s17, 1
    %p34 = por %p32, %p33
    %p35 = scmp.ne.s32.totalorder %s27, %s30
    %p36 = scmp.eq.s32.totalorder %s17, 0
    %p37 = por %p35, %p36
    %p38 = scmp.ne.s32.totalorder %s27, %s30
    %p39 = scmp.eq.s32.totalorder %s22, 1
    %p40 = por %p38, %p39
    %p41 = scmp.ne.s32.totalorder %s30, %s31
    %p42 = scmp.eq.s32.totalorder %s22, 0
    %p43 = por %p41, %p42
    %p44 = scmp.ne.s32.totalorder %s30, %s31
    %p45 = scmp.eq.s32.totalorder %s23, 1
    %p46 = por %p44, %p45
    %p48 = scmp.ne.s32.totalorder %s31, %s47
    %p49 = scmp.eq.s32.totalorder %s23, 0
    %p50 = por %p48, %p49
    %s52 = sadd.s32 %s51, 1
    %p55 = scmp.eq.s32.totalorder %s17, 1
    %p56 = scmp.ne.s32.totalorder %s51, %s53
    %p57 = scmp.eq.s32.totalorder %s17, 0
    %p58 = por %p56, %p57
    %p59 = scmp.ne.s32.totalorder %s51, %s53
    %p60 = scmp.eq.s32.totalorder %s22, 1
    %p61 = por %p59, %p60
    %p62 = scmp.ne.s32.totalorder %s53, %s54
    %p63 = scmp.eq.s32.totalorder %s22, 0
    %p64 = por %p62, %p63
    %p65 = scmp.ne.s32.totalorder %s53, %s54
    %p66 = scmp.eq.s32.totalorder %s23, 1
    %p67 = por %p65, %p66
    %p69 = scmp.ne.s32.totalorder %s54, %s68
    %p70 = scmp.eq.s32.totalorder %s23, 0
    %p71 = por %p69, %p70
    %s73 = sadd.s32 %s72, 1
    %p76 = scmp.eq.s32.totalorder %s17, 1
    %p77 = scmp.ne.s32.totalorder %s72, %s74
    %p78 = scmp.eq.s32.totalorder %s17, 0
    %p79 = por %p77, %p78
    %p80 = scmp.ne.s32.totalorder %s72, %s74
    %p81 = scmp.eq.s32.totalorder %s22, 1
    %p82 = por %p80, %p81
    %p83 = scmp.ne.s32.totalorder %s74, %s75
    %p84 = scmp.eq.s32.totalorder %s22, 0
    %p85 = por %p83, %p84
    %p86 = scmp.ne.s32.totalorder %s74, %s75
    %p87 = scmp.eq.s32.totalorder %s23, 1
    %p88 = por %p86, %p87
    %p90 = scmp.ne.s32.totalorder %s75, %s89
    %p91 = scmp.eq.s32.totalorder %s23, 0
    %p92 = por %p90, %p91
    %s94 = sadd.s32 %s93, 1
    %p97 = scmp.eq.s32.totalorder %s17, 1
    %p98 = scmp.ne.s32.totalorder %s93, %s95
    %p99 = scmp.eq.s32.totalorder %s17, 0
    %p100 = por %p98, %p99
    %p101 = scmp.ne.s32.totalorder %s93, %s95
    %p102 = scmp.eq.s32.totalorder %s22, 1
    %p103 = por %p101, %p102
    %p104 = scmp.ne.s32.totalorder %s95, %s96
    %p105 = scmp.eq.s32.totalorder %s22, 0
    %p106 = por %p104, %p105
    %p107 = scmp.ne.s32.totalorder %s95, %s96
    %p108 = scmp.eq.s32.totalorder %s23, 1
    %p109 = por %p107, %p108
    %p111 = scmp.ne.s32.totalorder %s96, %s110
    %p112 = scmp.eq.s32.totalorder %s23, 0
    %p113 = por %p111, %p112
    %s115 = sadd.s32 %s114, 1
    %p118 = scmp.eq.s32.totalorder %s17, 1
    %p119 = scmp.ne.s32.totalorder %s114, %s116
    %p120 = scmp.eq.s32.totalorder %s17, 0
    %p121 = por %p119, %p120
    %p122 = scmp.ne.s32.totalorder %s114, %s116
    %p123 = scmp.eq.s32.totalorder %s22, 1
    %p124 = por %p122, %p123
    %p125 = scmp.ne.s32.totalorder %s116, %s117
    %p126 = scmp.eq.s32.totalorder %s22, 0
    %p127 = por %p125, %p126
    %p128 = scmp.ne.s32.totalorder %s116, %s117
    %p129 = scmp.eq.s32.totalorder %s23, 1
    %p130 = por %p128, %p129
    %p132 = scmp.ne.s32.totalorder %s117, %s131
    %p133 = scmp.eq.s32.totalorder %s23, 0
    %p134 = por %p132, %p133
    %s136 = sadd.s32 %s135, 1
    %p139 = scmp.eq.s32.totalorder %s17, 1
    %p140 = scmp.ne.s32.totalorder %s135, %s137
    %p141 = scmp.eq.s32.totalorder %s17, 0
    %p142 = por %p140, %p141
    %p143 = scmp.ne.s32.totalorder %s135, %s137
    %p144 = scmp.eq.s32.totalorder %s22, 1
    %p145 = por %p143, %p144
    %p146 = scmp.ne.s32.totalorder %s137, %s138
    %p147 = scmp.eq.s32.totalorder %s22, 0
    %p148 = por %p146, %p147
    %p149 = scmp.ne.s32.totalorder %s137, %s138
    %p150 = scmp.eq.s32.totalorder %s23, 1
    %p151 = por %p149, %p150
    %p153 = scmp.ne.s32.totalorder %s138, %s152
    %p154 = scmp.eq.s32.totalorder %s23, 0
    %p155 = por %p153, %p154
    %s157 = sadd.s32 %s156, 1
    %p160 = scmp.eq.s32.totalorder %s17, 1
    %p161 = scmp.ne.s32.totalorder %s156, %s158
    %p162 = scmp.eq.s32.totalorder %s17, 0
    %p163 = por %p161, %p162
    %p164 = scmp.ne.s32.totalorder %s156, %s158
    %p165 = scmp.eq.s32.totalorder %s22, 1
    %p166 = por %p164, %p165
    %p167 = scmp.ne.s32.totalorder %s158, %s159
    %p168 = scmp.eq.s32.totalorder %s22, 0
    %p169 = por %p167, %p168
    %p170 = scmp.ne.s32.totalorder %s158, %s159
    %p171 = scmp.eq.s32.totalorder %s23, 1
    %p172 = por %p170, %p171
    %p174 = scmp.ne.s32.totalorder %s159, %s173
    %p175 = scmp.eq.s32.totalorder %s23, 0
    %p176 = por %p174, %p175
    %s178 = sadd.s32 %s177, 1
    %p181 = scmp.eq.s32.totalorder %s17, 1
    %p182 = scmp.ne.s32.totalorder %s177, %s179
    %p183 = scmp.eq.s32.totalorder %s17, 0
    %p184 = por %p182, %p183
    %p185 = scmp.ne.s32.totalorder %s177, %s179
    %p186 = scmp.eq.s32.totalorder %s22, 1
    %p187 = por %p185, %p186
    %p188 = scmp.ne.s32.totalorder %s179, %s180
    %p189 = scmp.eq.s32.totalorder %s22, 0
    %p190 = por %p188, %p189
    %p191 = scmp.ne.s32.totalorder %s179, %s180
    %p192 = scmp.eq.s32.totalorder %s23, 1
    %p193 = por %p191, %p192
    %p195 = scmp.ne.s32.totalorder %s180, %s194
    %p196 = scmp.eq.s32.totalorder %s23, 0
    %p197 = por %p195, %p196
    %s199 = sadd.s32 %s198, 1
    %p202 = scmp.eq.s32.totalorder %s17, 1
    %p203 = scmp.ne.s32.totalorder %s198, %s200
    %p204 = scmp.eq.s32.totalorder %s17, 0
    %p205 = por %p203, %p204
    %p206 = scmp.ne.s32.totalorder %s198, %s200
    %p207 = scmp.eq.s32.totalorder %s22, 1
    %p208 = por %p206, %p207
    %p209 = scmp.ne.s32.totalorder %s200, %s201
    %p210 = scmp.eq.s32.totalorder %s22, 0
    %p211 = por %p209, %p210
    %p212 = scmp.ne.s32.totalorder %s200, %s201
    %p213 = scmp.eq.s32.totalorder %s23, 1
    %p214 = por %p212, %p213
    %p216 = scmp.ne.s32.totalorder %s201, %s215
    %p217 = scmp.eq.s32.totalorder %s23, 0
    %p218 = por %p216, %p217
    %s220 = sadd.s32 %s219, 1
    %p223 = scmp.eq.s32.totalorder %s17, 1
    %p224 = scmp.ne.s32.totalorder %s219, %s221
    %p225 = scmp.eq.s32.totalorder %s17, 0
    %p226 = por %p224, %p225
    %p227 = scmp.ne.s32.totalorder %s219, %s221
    %p228 = scmp.eq.s32.totalorder %s22, 1
    %p229 = por %p227, %p228
    %p230 = scmp.ne.s32.totalorder %s221, %s222
    %p231 = scmp.eq.s32.totalorder %s22, 0
    %p232 = por %p230, %p231
    %p233 = scmp.ne.s32.totalorder %s221, %s222
    %p234 = scmp.eq.s32.totalorder %s23, 1
    %p235 = por %p233, %p234
    %p237 = scmp.ne.s32.totalorder %s222, %s236
    %p238 = scmp.eq.s32.totalorder %s23, 0
    %p239 = por %p237, %p238
    %s241 = sadd.s32 %s240, 1
    %p244 = scmp.eq.s32.totalorder %s17, 1
    %p245 = scmp.ne.s32.totalorder %s240, %s242
    %p246 = scmp.eq.s32.totalorder %s17, 0
    %p247 = por %p245, %p246
    %p248 = scmp.ne.s32.totalorder %s240, %s242
    %p249 = scmp.eq.s32.totalorder %s22, 1
    %p250 = por %p248, %p249
    %p251 = scmp.ne.s32.totalorder %s242, %s243
    %p252 = scmp.eq.s32.totalorder %s22, 0
    %p253 = por %p251, %p252
    %p254 = scmp.ne.s32.totalorder %s242, %s243
    %p255 = scmp.eq.s32.totalorder %s23, 1
    %p256 = por %p254, %p255
    %p258 = scmp.ne.s32.totalorder %s243, %s257
    %p259 = scmp.eq.s32.totalorder %s23, 0
    %p260 = por %p258, %p259
    %s261 = ssub.s32 %s17, %s24
    %p262 = scmp.eq.s32.totalorder %s261, 0
    %s264 = sadd.s32 %s263, 1
    %s265 = scalar_select %p262, %s263, %s264
    %p268 = pneg %p262
    %p269 = scmp.eq.s32.totalorder %s17, 1
    %p270 = por %p268, %p269
    %p271 = scmp.ne.s32.totalorder %s263, %s266
    %p272 = scmp.eq.s32.totalorder %s17, 0
    %p273 = por %p271, %p272
    %p274 = scmp.ne.s32.totalorder %s263, %s266
    %p275 = scmp.eq.s32.totalorder %s22, 1
    %p276 = por %p274, %p275
    %p277 = scmp.ne.s32.totalorder %s266, %s267
    %p278 = scmp.eq.s32.totalorder %s22, 0
    %p279 = por %p277, %p278
    %p280 = scmp.ne.s32.totalorder %s266, %s267
    %p281 = scmp.eq.s32.totalorder %s23, 1
    %p282 = por %p280, %p281
    %p284 = scmp.ne.s32.totalorder %s267, %s283
    %p285 = scmp.eq.s32.totalorder %s23, 0
    %p286 = por %p284, %p285
    %p287 = scmp.le.s32.totalorder 1, %s17
    %p288 = scmp.lt.s32.totalorder %s17, 3
    %p289 = pnand %p287, %p288
    %p290 = pneg %p289
    // Predicated region
    $region9: #{custom_model_forward.7} parent=5 // pred_check
      _
    $region10: #{custom_model_forward.7} parent=5 // pred_check_branch
      %292 = sbr.rel (%p289) target = $region12
    $region11: #{custom_model_forward.7} parent=5 // pred_region
      %s293 = ssub.s32 %s17, 1
      // Predicated region
      $region13: #{custom_model_forward.7} parent=11 // pred_check
        %p294 = pneg %p64
      $region14: #{custom_model_forward.7} parent=11 // pred_check_branch
        %296 = sbr.rel (%p294) target = $region16
      $region15: #{custom_model_forward.7} parent=11 // pred_region
        _
      $region16: #{custom_model_forward.7} parent=11 // pred_fallthru
        _
      // Predicated region
      $region17: #{custom_model_forward.7} parent=11 // pred_check
        %p297 = pneg %p85
      $region18: #{custom_model_forward.7} parent=11 // pred_check_branch
        %299 = sbr.rel (%p297) target = $region20
      $region19: #{custom_model_forward.7} parent=11 // pred_region
        _
      $region20: #{custom_model_forward.7} parent=11 // pred_fallthru
        _
      // Predicated region
      $region21: #{custom_model_forward.7} parent=11 // pred_check
        %p300 = pneg %p106
      $region22: #{custom_model_forward.7} parent=11 // pred_check_branch
        %302 = sbr.rel (%p300) target = $region24
      $region23: #{custom_model_forward.7} parent=11 // pred_region
        _
      $region24: #{custom_model_forward.7} parent=11 // pred_fallthru
        _
      // Predicated region
      $region25: #{custom_model_forward.7} parent=11 // pred_check
        %p303 = pneg %p127
      $region26: #{custom_model_forward.7} parent=11 // pred_check_branch
        %305 = sbr.rel (%p303) target = $region28
      $region27: #{custom_model_forward.7} parent=11 // pred_region
        _
      $region28: #{custom_model_forward.7} parent=11 // pred_fallthru
        _
      // Predicated region
      $region29: #{custom_model_forward.7} parent=11 // pred_check
        %p306 = pneg %p148
      $region30: #{custom_model_forward.7} parent=11 // pred_check_branch
        %308 = sbr.rel (%p306) target = $region32
      $region31: #{custom_model_forward.7} parent=11 // pred_region
        _
      $region32: #{custom_model_forward.7} parent=11 // pred_fallthru
        _
      // Predicated region
      $region33: #{custom_model_forward.7} parent=11 // pred_check
        %p309 = pneg %p169
      $region34: #{custom_model_forward.7} parent=11 // pred_check_branch
        %311 = sbr.rel (%p309) target = $region36
      $region35: #{custom_model_forward.7} parent=11 // pred_region
        _
      $region36: #{custom_model_forward.7} parent=11 // pred_fallthru
        _
      // Predicated region
      $region37: #{custom_model_forward.7} parent=11 // pred_check
        %p312 = pneg %p190
      $region38: #{custom_model_forward.7} parent=11 // pred_check_branch
        %314 = sbr.rel (%p312) target = $region40
      $region39: #{custom_model_forward.7} parent=11 // pred_region
        _
      $region40: #{custom_model_forward.7} parent=11 // pred_fallthru
        _
      // Predicated region
      $region41: #{custom_model_forward.7} parent=11 // pred_check
        %p315 = pneg %p211
      $region42: #{custom_model_forward.7} parent=11 // pred_check_branch
        %317 = sbr.rel (%p315) target = $region44
      $region43: #{custom_model_forward.7} parent=11 // pred_region
        _
      $region44: #{custom_model_forward.7} parent=11 // pred_fallthru
        _
      // Predicated region
      $region45: #{custom_model_forward.7} parent=11 // pred_check
        %p318 = pneg %p232
      $region46: #{custom_model_forward.7} parent=11 // pred_check_branch
        %320 = sbr.rel (%p318) target = $region48
      $region47: #{custom_model_forward.7} parent=11 // pred_region
        _
      $region48: #{custom_model_forward.7} parent=11 // pred_fallthru
        _
      // Predicated region
      $region49: #{custom_model_forward.7} parent=11 // pred_check
        %p321 = pneg %p253
      $region50: #{custom_model_forward.7} parent=11 // pred_check_branch
        %323 = sbr.rel (%p321) target = $region52
      $region51: #{custom_model_forward.7} parent=11 // pred_region
        _
      $region52: #{custom_model_forward.7} parent=11 // pred_fallthru
        _
    $region12: #{custom_model_forward.7} parent=5 // pred_fallthru
      _
    %p324 = scmp.lt.s32.totalorder %s17, 2
    // Predicated region
    $region53: #{custom_model_forward.7} parent=5 // pred_check
      %p325 = pneg %p324
    $region54: #{custom_model_forward.7} parent=5 // pred_check_branch
      %327 = sbr.rel (%p325) target = $region56
    $region55: #{custom_model_forward.7} parent=5 // pred_region
      // Predicated region
      $region57: #{custom_model_forward.7} parent=55 // pred_check
        %p328 = pneg %p37
      $region58: #{custom_model_forward.7} parent=55 // pred_check_branch
        %330 = sbr.rel (%p328) target = $region60
      $region59: #{custom_model_forward.7} parent=55 // pred_region
        %p331 = scmp.lt.s32.totalorder %s17, 1
        %s332 = scalar_select %p331, %s17, 1
        %s333 = smul.addr %s332, 3
        %s334 = smul.addr %s333, 8
        %s335 = scalar_lea.vmem %s0, %s334
      $region60: #{custom_model_forward.7} parent=55 // pred_fallthru
        _
    $region56: #{custom_model_forward.7} parent=5 // pred_fallthru
      _
    %p336 = scmp.le.s32.totalorder 1, %s17
    %p337 = scmp.lt.s32.totalorder %s17, 3
    %p338 = pnand %p336, %p337
    %p339 = pneg %p338
    // Predicated region
    $region61: #{custom_model_forward.7} parent=5 // pred_check
      _
    $region62: #{custom_model_forward.7} parent=5 // pred_check_branch
      %341 = sbr.rel (%p338) target = $region64
    $region63: #{custom_model_forward.7} parent=5 // pred_region
      %s342 = ssub.s32 %s17, 1
      %p343 = scmp.lt.s32.totalorder %s22, 1
      %s344 = scalar_select %p343, %s22, 1
      %s345 = smul.addr %s344, 3
      %s346 = smul.addr %s345, 8
      %s347 = scalar_lea.vmem %s0, %s346
      %p348 = pneg %p43
      %p349 = pneg %p40
      %p350 = pneg %p64
      %p351 = pneg %p61
      %p352 = pneg %p85
      %p353 = pneg %p82
      %p354 = pneg %p106
      %p355 = pneg %p103
      %p356 = pneg %p127
      %p357 = pneg %p124
      %p358 = pneg %p148
      %p359 = pneg %p145
      %p360 = pneg %p169
      %p361 = pneg %p166
      %p362 = pneg %p190
      %p363 = pneg %p187
      %p364 = pneg %p211
      %p365 = pneg %p208
      %p366 = pneg %p232
      %p367 = pneg %p229
      %p368 = pneg %p253
      %p369 = pneg %p250
      %p370 = pneg %p279
      %p371 = pneg %p276
      %p372 = scmp.lt.s32.totalorder %s22, 1
      %s373 = scalar_select %p372, %s22, 1
      %s374 = smul.addr %s373, 3
      %s375 = smul.addr %s374, 8
      %s376 = scalar_lea.vmem %s11, %s375
      %p377 = scmp.lt.s32.totalorder %s22, 1
      %s378 = scalar_select %p377, %s22, 1
      %s379 = smul.addr %s378, 3
      %s380 = smul.addr %s379, 8
      %s381 = scalar_lea.vmem %s0, %s380
      %p382 = scmp.lt.s32.totalorder %s22, 1
      %s383 = scalar_select %p382, %s22, 1
      %s384 = smul.addr %s383, 3
      %s385 = smul.addr %s384, 8
      %s386 = scalar_lea.vmem %s11, %s385
      %v388 = vld [vmem:[%s381] sm:$0xff]
      %v389 = vld [vmem:[%s381 + $0x8] sm:$0xff]
      %v390 = vld [vmem:[%s381 + $0x10] sm:$0x1]
      %vm391 = vcmask 261120
      %v392 = vsel %vm391, %v388, 0.0
      %393 = vadd.xlane.f32.xlu0 %v392
      %v394 = vpop.xlane.xlu0 %393
      %v395 = vsel %vm391, %v389, 0.0
      %396 = vadd.xlane.f32.xlu0 %v395
      %v397 = vpop.xlane.xlu0 %396
      %vm398 = vcmask 253952
      %v399 = vsel %vm398, %v390, 0.0
      %400 = vadd.xlane.f32.xlu0 %v399
      %v401 = vpop.xlane.xlu0 %400
      %v402 = vrcp.pop 32.0
      %v403 = vmul.f32 %v394, %v402
      %v404 = vmul.f32 %v397, %v402
      %v405 = vmul.f32 %v401, %v402
      %v406 = vsub.f32 %v388, %v403
      %v407 = vsub.f32 %v389, %v404
      %v408 = vsub.f32 %v390, %v405
      %v409 = vmul.f32 %v406, %v406
      %v410 = vmul.f32 %v407, %v407
      %v411 = vmul.f32 %v408, %v408
      %v412 = vsel %vm391, %v409, 0.0
      %413 = vadd.xlane.f32.xlu0 %v412
      %v414 = vpop.xlane.xlu0 %413
      %v415 = vsel %vm391, %v410, 0.0
      %416 = vadd.xlane.f32.xlu0 %v415
      %v417 = vpop.xlane.xlu0 %416
      %v418 = vsel %vm398, %v411, 0.0
      %419 = vadd.xlane.f32.xlu0 %v418
      %v420 = vpop.xlane.xlu0 %419
      %v421 = vmul.f32 %v414, %v402
      %v422 = vmul.f32 %v417, %v402
      %v423 = vmul.f32 %v420, %v402
      %v424 = vadd.f32 %v421, 1e-06
      %v425 = vadd.f32 %v422, 1e-06
      %v426 = vadd.f32 %v423, 1e-06
      %v427 = vrsqrt.pop %v424
      %v428 = vrsqrt.pop %v425
      %v429 = vrsqrt.pop %v426
      %v430 = vmul.f32 %v406, %v427
      %v431 = vmul.f32 %v407, %v428
      %v432 = vmul.f32 %v408, %v429
      %v433 = vld [vmem:[%s1] sm:$0x1]
      %v435 = vlaneseq
      %v436 = vshrl.u32 %v435, 7
      %v437 = vsub.s32 0, %v436
      %v438 = vrot.slane %v433, %v437
      %v440 = vmul.f32 %v430, %v438
      %v441 = vmul.f32 %v431, %v438
      %v442 = vmul.f32 %v432, %v438
      %v443 = vld [vmem:[%s2] sm:$0x1]
      %v445 = vlaneseq
      %v446 = vshrl.u32 %v445, 7
      %v447 = vsub.s32 0, %v446
      %v448 = vrot.slane %v443, %v447
      %v450 = vadd.f32 %v440, %v448
      %v451 = vadd.f32 %v441, %v448
      %v452 = vadd.f32 %v442, %v448
      %v453 = vpack.c.bf16 %v451, %v450
      %v454 = vpack.c.bf16 %v452, %v452
      %v455 = vld [vmem:[%s10] sm:$0x1]
      %v457 = vlaneseq
      %v458 = vshrl.u32 %v457, 7
      %v459 = vsub.s32 0, %v458
      %v460 = vrot.slane %v455, %v459
      %v462 = vadd.f32 %v388, %v460
      %v463 = vadd.f32 %v389, %v460
      %v464 = vadd.f32 %v390, %v460
      %v465 = vld [vmem:[%s3] sm:$0xf]
      %v466 = vld [vmem:[%s3 + $0x4] sm:$0xf]
      %v467 = vld [vmem:[%s3 + $0x8] sm:$0xf]
      %v468 = vld [vmem:[%s3 + $0xc] sm:$0xf]
      %v469 = vld [vmem:[%s6] sm:$0x1]
      %v471 = vlaneseq
      %v472 = vshrl.u32 %v471, 7
      %v473 = vsub.s32 0, %v472
      %v474 = vrot.slane %v469, %v473
      %v480 = vunpack.c.l.b16 %v465
      %v481 = vunpack.c.l.b16 %v466
      %v482 = vunpack.c.l.b16 %v467
      %v483 = vunpack.c.l.b16 %v468
      %v484 = vpack.c.b16 %v481, %v480
      %v485 = vpack.c.b16 %v483, %v482
      %v489 = vsel %vm391, %v453, 0
      %v492 = vsel %vm391, %v454, 0
      %494 = vmatprep.subr.bf16.mxu0 0
      %495 = vmatpush1.bf16.msra.mxu0 0
      %496 = vmatprep.subr.bf16.mxu0 0
      %497 = vmatpush1.bf16.msra.mxu0 0
      %498 = vmatprep.subr.bf16.mxu0 0
      %499 = vmatpush1.bf16.msra.mxu0 0
      %500 = vmatprep.subr.bf16.mxu0 0
      %501 = vmatpush1.bf16.msra.mxu0 0
      %502 = vmatprep.subr.bf16.mxu0 0
      %503 = vmatpush1.bf16.msra.mxu0 0
      %504 = vmatprep.subr.bf16.mxu0 0
      %505 = vmatpush1.bf16.msra.mxu0 0
      %506 = vmatprep.subr.bf16.mxu0 0
      %507 = vmatpush1.bf16.msra.mxu0 %v485
      %508 = vmatprep.subr.bf16.mxu0 0
      %509 = vmatpush1.bf16.msra.mxu0 %v484
      %510 = vmatprep.subr.bf16.mxu0 0
      %511 = vmatpush2.bf16.msra.mxu0 0
      %512 = vmatprep.subr.bf16.mxu0 0
      %513 = vmatpush2.bf16.msra.mxu0 0
      %514 = vmatprep.subr.bf16.mxu0 0
      %515 = vmatpush2.bf16.msra.mxu0 0
      %516 = vmatprep.subr.bf16.mxu0 0
      %517 = vmatpush2.bf16.msra.mxu0 0
      %518 = vmatprep.subr.bf16.mxu0 0
      %519 = vmatpush2.bf16.msra.mxu0 0
      %520 = vmatprep.subr.bf16.mxu0 0
      %521 = vmatpush2.bf16.msra.mxu0 0
      %522 = vmatprep.subr.bf16.mxu0 0
      %523 = vmatpush2.bf16.msra.mxu0 0
      %524 = vmatprep.subr.bf16.mxu0 0
      %525 = vmatpush2.bf16.msra.mxu0 0
      %526 = vmatprep.mubr.bf16.mxu0 0
      %527 = vmatmul.mubr.bf16.gmra.mxu0 %v489
      %v528 = vpop.f32.mrf.mxu0
      %v529 = vadd.f32 %v474, %v528
      %v530 = vpop.f32.mrf.mxu0
      %v531 = vpop.f32.mrf.mxu0
      %v532 = vadd.f32 %v474, %v531
      %v533 = vpop.f32.mrf.mxu0
      %534 = vmatprep.mubr.bf16.mxu0 0
      %535 = vmatmul.mubr.bf16.gmra.mxu0 %v492
      %v536 = vpop.f32.mrf.mxu0
      %v537 = vadd.f32 %v474, %v536
      %v538 = vpop.f32.mrf.mxu0
      %v539 = vpop.f32.mrf.mxu0
      %v540 = vpop.f32.mrf.mxu0
      %541 = vdwg.mxu0
      %v542 = vld [vmem:[%s4] sm:$0xf]
      %v543 = vld [vmem:[%s4 + $0x4] sm:$0xf]
      %v544 = vld [vmem:[%s4 + $0x8] sm:$0xf]
      %v545 = vld [vmem:[%s4 + $0xc] sm:$0xf]
      %v546 = vld [vmem:[%s7] sm:$0x1]
      %v548 = vlaneseq
      %v549 = vshrl.u32 %v548, 7
      %v550 = vsub.s32 0, %v549
      %v551 = vrot.slane %v546, %v550
      %v557 = vunpack.c.l.b16 %v542
      %v558 = vunpack.c.l.b16 %v543
      %v559 = vunpack.c.l.b16 %v544
      %v560 = vunpack.c.l.b16 %v545
      %v561 = vpack.c.b16 %v558, %v557
      %v562 = vpack.c.b16 %v560, %v559
      %565 = vmatprep.subr.bf16.mxu0 0
      %566 = vmatpush1.bf16.msra.mxu0 0
      %567 = vmatprep.subr.bf16.mxu0 0
      %568 = vmatpush1.bf16.msra.mxu0 0
      %569 = vmatprep.subr.bf16.mxu0 0
      %570 = vmatpush1.bf16.msra.mxu0 0
      %571 = vmatprep.subr.bf16.mxu0 0
      %572 = vmatpush1.bf16.msra.mxu0 0
      %573 = vmatprep.subr.bf16.mxu0 0
      %574 = vmatpush1.bf16.msra.mxu0 0
      %575 = vmatprep.subr.bf16.mxu0 0
      %576 = vmatpush1.bf16.msra.mxu0 0
      %577 = vmatprep.subr.bf16.mxu0 0
      %578 = vmatpush1.bf16.msra.mxu0 %v562
      %579 = vmatprep.subr.bf16.mxu0 0
      %580 = vmatpush1.bf16.msra.mxu0 %v561
      %581 = vmatprep.subr.bf16.mxu0 0
      %582 = vmatpush2.bf16.msra.mxu0 0
      %583 = vmatprep.subr.bf16.mxu0 0
      %584 = vmatpush2.bf16.msra.mxu0 0
      %585 = vmatprep.subr.bf16.mxu0 0
      %586 = vmatpush2.bf16.msra.mxu0 0
      %587 = vmatprep.subr.bf16.mxu0 0
      %588 = vmatpush2.bf16.msra.mxu0 0
      %589 = vmatprep.subr.bf16.mxu0 0
      %590 = vmatpush2.bf16.msra.mxu0 0
      %591 = vmatprep.subr.bf16.mxu0 0
      %592 = vmatpush2.bf16.msra.mxu0 0
      %593 = vmatprep.subr.bf16.mxu0 0
      %594 = vmatpush2.bf16.msra.mxu0 0
      %595 = vmatprep.subr.bf16.mxu0 0
      %596 = vmatpush2.bf16.msra.mxu0 0
      %597 = vmatprep.mubr.bf16.mxu0 0
      %598 = vmatmul.mubr.bf16.gmra.mxu0 %v489
      %v599 = vpop.f32.mrf.mxu0
      %v600 = vadd.f32 %v551, %v599
      %v601 = vpop.f32.mrf.mxu0
      %v602 = vpop.f32.mrf.mxu0
      %v603 = vadd.f32 %v551, %v602
      %v604 = vpop.f32.mrf.mxu0
      %605 = vmatprep.mubr.bf16.mxu0 0
      %606 = vmatmul.mubr.bf16.gmra.mxu0 %v492
      %v607 = vpop.f32.mrf.mxu0
      %v608 = vadd.f32 %v551, %v607
      %v609 = vpop.f32.mrf.mxu0
      %v610 = vpop.f32.mrf.mxu0
      %v611 = vpop.f32.mrf.mxu0
      %612 = vdwg.mxu0
      %v613 = vld [vmem:[%s5] sm:$0xf]
      %v614 = vld [vmem:[%s5 + $0x4] sm:$0xf]
      %v615 = vld [vmem:[%s5 + $0x8] sm:$0xf]
      %v616 = vld [vmem:[%s5 + $0xc] sm:$0xf]
      %v617 = vld [vmem:[%s8] sm:$0x1]
      %v619 = vlaneseq
      %v620 = vshrl.u32 %v619, 7
      %v621 = vsub.s32 0, %v620
      %v622 = vrot.slane %v617, %v621
      %v628 = vunpack.c.l.b16 %v613
      %v629 = vunpack.c.l.b16 %v614
      %v630 = vunpack.c.l.b16 %v615
      %v631 = vunpack.c.l.b16 %v616
      %v632 = vpack.c.b16 %v629, %v628
      %v633 = vpack.c.b16 %v631, %v630
      %636 = vmatprep.subr.bf16.mxu0 0
      %637 = vmatpush1.bf16.msra.mxu0 0
      %638 = vmatprep.subr.bf16.mxu0 0
      %639 = vmatpush1.bf16.msra.mxu0 0
      %640 = vmatprep.subr.bf16.mxu0 0
      %641 = vmatpush1.bf16.msra.mxu0 0
      %642 = vmatprep.subr.bf16.mxu0 0
      %643 = vmatpush1.bf16.msra.mxu0 0
      %644 = vmatprep.subr.bf16.mxu0 0
      %645 = vmatpush1.bf16.msra.mxu0 0
      %646 = vmatprep.subr.bf16.mxu0 0
      %647 = vmatpush1.bf16.msra.mxu0 0
      %648 = vmatprep.subr.bf16.mxu0 0
      %649 = vmatpush1.bf16.msra.mxu0 %v633
      %650 = vmatprep.subr.bf16.mxu0 0
      %651 = vmatpush1.bf16.msra.mxu0 %v632
      %652 = vmatprep.subr.bf16.mxu0 0
      %653 = vmatpush2.bf16.msra.mxu0 0
      %654 = vmatprep.subr.bf16.mxu0 0
      %655 = vmatpush2.bf16.msra.mxu0 0
      %656 = vmatprep.subr.bf16.mxu0 0
      %657 = vmatpush2.bf16.msra.mxu0 0
      %658 = vmatprep.subr.bf16.mxu0 0
      %659 = vmatpush2.bf16.msra.mxu0 0
      %660 = vmatprep.subr.bf16.mxu0 0
      %661 = vmatpush2.bf16.msra.mxu0 0
      %662 = vmatprep.subr.bf16.mxu0 0
      %663 = vmatpush2.bf16.msra.mxu0 0
      %664 = vmatprep.subr.bf16.mxu0 0
      %665 = vmatpush2.bf16.msra.mxu0 0
      %666 = vmatprep.subr.bf16.mxu0 0
      %667 = vmatpush2.bf16.msra.mxu0 0
      %668 = vmatprep.mubr.bf16.mxu0 0
      %669 = vmatmul.mubr.bf16.gmra.mxu0 %v489
      %v670 = vpop.f32.mrf.mxu0
      %v671 = vadd.f32 %v622, %v670
      %v672 = vpop.f32.mrf.mxu0
      %v673 = vpop.f32.mrf.mxu0
      %v674 = vadd.f32 %v622, %v673
      %v675 = vpop.f32.mrf.mxu0
      %676 = vmatprep.mubr.bf16.mxu0 0
      %677 = vmatmul.mubr.bf16.gmra.mxu0 %v492
      %v678 = vpop.f32.mrf.mxu0
      %v679 = vadd.f32 %v622, %v678
      %v680 = vpop.f32.mrf.mxu0
      %v681 = vpop.f32.mrf.mxu0
      %v682 = vpop.f32.mrf.mxu0
      %683 = vdwg.mxu0
      %v684 = vpack.c.bf16 %v532, %v529
      %v685 = vpack.c.bf16 %v537, %v537
      %v686 = vpack.c.bf16 %v603, %v600
      %v687 = vpack.c.bf16 %v608, %v608
      %vm688 = vcmask 64512
      %v690 = vsel %vm688, %v684, 0
      %v693 = vsel %vm688, %v685, 0
      %v696 = vsel %vm688, %v686, 0
      %v699 = vsel %vm688, %v687, 0
      %701 = vmatprep.subr.bf16.mxu0 0
      %702 = vmatpush1.bf16.xpose.msra.mxu0 0
      %703 = vmatprep.subr.bf16.mxu0 0
      %704 = vmatpush1.bf16.xpose.msra.mxu0 0
      %705 = vmatprep.subr.bf16.mxu0 0
      %706 = vmatpush1.bf16.xpose.msra.mxu0 0
      %707 = vmatprep.subr.bf16.mxu0 0
      %708 = vmatpush1.bf16.xpose.msra.mxu0 0
      %709 = vmatprep.subr.bf16.mxu0 0
      %710 = vmatpush1.bf16.xpose.msra.mxu0 0
      %711 = vmatprep.subr.bf16.mxu0 0
      %712 = vmatpush1.bf16.xpose.msra.mxu0 0
      %713 = vmatprep.subr.bf16.mxu0 0
      %714 = vmatpush1.bf16.xpose.msra.mxu0 %v699
      %715 = vmatprep.subr.bf16.mxu0 0
      %716 = vmatpush1.bf16.xpose.msra.mxu0 %v696
      %717 = vmatprep.subr.bf16.mxu0 0
      %718 = vmatpush2.bf16.xpose.msra.mxu0 0
      %719 = vmatprep.subr.bf16.mxu0 0
      %720 = vmatpush2.bf16.xpose.msra.mxu0 0
      %721 = vmatprep.subr.bf16.mxu0 0
      %722 = vmatpush2.bf16.xpose.msra.mxu0 0
      %723 = vmatprep.subr.bf16.mxu0 0
      %724 = vmatpush2.bf16.xpose.msra.mxu0 0
      %725 = vmatprep.subr.bf16.mxu0 0
      %726 = vmatpush2.bf16.xpose.msra.mxu0 0
      %727 = vmatprep.subr.bf16.mxu0 0
      %728 = vmatpush2.bf16.xpose.msra.mxu0 0
      %729 = vmatprep.subr.bf16.mxu0 0
      %730 = vmatpush2.bf16.xpose.msra.mxu0 0
      %731 = vmatprep.subr.bf16.mxu0 0
      %732 = vmatpush2.bf16.xpose.msra.mxu0 0
      %733 = vmatprep.mubr.bf16.mxu0 0
      %734 = vmatmul.mubr.bf16.gmra.mxu0 %v690
      %v735 = vpop.f32.mrf.mxu0
      %v736 = vadd.f32 0.0, %v735
      %v737 = vpop.f32.mrf.mxu0
      %v738 = vpop.f32.mrf.mxu0
      %v739 = vadd.f32 0.0, %v738
      %v740 = vpop.f32.mrf.mxu0
      %741 = vmatprep.mubr.bf16.mxu0 0
      %742 = vmatmul.mubr.bf16.gmra.mxu0 %v693
      %v743 = vpop.f32.mrf.mxu0
      %v744 = vadd.f32 0.0, %v743
      %v745 = vpop.f32.mrf.mxu0
      %v746 = vpop.f32.mrf.mxu0
      %v747 = vpop.f32.mrf.mxu0
      %748 = vdwg.mxu0
      %v749 = vmul.f32 %v736, 0.35355338
      %v750 = vmul.f32 %v739, 0.35355338
      %v751 = vmul.f32 %v744, 0.35355338
      %vm752 = vcmask 138240
      %v753 = vsel %vm752, %v749, -inf
      %754 = vmax.xlane.f32.xlu0 %v753
      %v755 = vpop.xlane.xlu0 %754
      %v756 = vsel %vm752, %v750, -inf
      %757 = vmax.xlane.f32.xlu0 %v756
      %v758 = vpop.xlane.xlu0 %757
      %vm759 = vcmask 131072
      %v760 = vsel %vm759, %v751, -inf
      %761 = vmax.xlane.f32.xlu0 %v760
      %v762 = vpop.xlane.xlu0 %761
      %v763 = vsub.f32 %v749, %v755
      %v764 = vsub.f32 %v750, %v758
      %v765 = vsub.f32 %v751, %v762
      %v766 = vmul.f32 %v763, 1.442695
      %v767 = vpow.pop %v766
      %v768 = vmul.f32 %v764, 1.442695
      %v769 = vpow.pop %v768
      %v770 = vmul.f32 %v765, 1.442695
      %v771 = vpow.pop %v770
      %v772 = vsel %vm752, %v767, 0.0
      %773 = vadd.xlane.f32.xlu0 %v772
      %v774 = vpop.xlane.xlu0 %773
      %v775 = vsel %vm752, %v769, 0.0
      %776 = vadd.xlane.f32.xlu0 %v775
      %v777 = vpop.xlane.xlu0 %776
      %v778 = vsel %vm759, %v771, 0.0
      %779 = vadd.xlane.f32.xlu0 %v778
      %v780 = vpop.xlane.xlu0 %779
      %v781 = vrcp.pop %v774
      %v782 = vrcp.pop %v777
      %v783 = vrcp.pop %v780
      %v784 = vmul.f32 %v767, %v781
      %v785 = vmul.f32 %v769, %v782
      %v786 = vmul.f32 %v771, %v783
      %v787 = vpack.c.bf16 %v785, %v784
      %v788 = vpack.c.bf16 %v786, %v786
      %v789 = vpack.c.bf16 %v674, %v671
      %v790 = vpack.c.bf16 %v679, %v679
      %v792 = vsel %vm752, %v787, 0
      %v795 = vsel %vm752, %v788, 0
      %vm797 = vcmask 1040384
      %v798 = vsel 0, 4294967295, 65535
      %v799 = vsel %vm797, %v798, 0
      %v801 = vand.u32 %v790, %v799
      %803 = vmatprep.subr.bf16.mxu0 0
      %804 = vmatpush1.bf16.msra.mxu0 0
      %805 = vmatprep.subr.bf16.mxu0 0
      %806 = vmatpush1.bf16.msra.mxu0 0
      %807 = vmatprep.subr.bf16.mxu0 0
      %808 = vmatpush1.bf16.msra.mxu0 0
      %809 = vmatprep.subr.bf16.mxu0 0
      %810 = vmatpush1.bf16.msra.mxu0 0
      %811 = vmatprep.subr.bf16.mxu0 0
      %812 = vmatpush1.bf16.msra.mxu0 0
      %813 = vmatprep.subr.bf16.mxu0 0
      %814 = vmatpush1.bf16.msra.mxu0 0
      %815 = vmatprep.subr.bf16.mxu0 0
      %816 = vmatpush1.bf16.msra.mxu0 %v801
      %817 = vmatprep.subr.bf16.mxu0 0
      %818 = vmatpush1.bf16.msra.mxu0 %v789
      %819 = vmatprep.subr.bf16.mxu0 0
      %820 = vmatpush2.bf16.msra.mxu0 0
      %821 = vmatprep.subr.bf16.mxu0 0
      %822 = vmatpush2.bf16.msra.mxu0 0
      %823 = vmatprep.subr.bf16.mxu0 0
      %824 = vmatpush2.bf16.msra.mxu0 0
      %825 = vmatprep.subr.bf16.mxu0 0
      %826 = vmatpush2.bf16.msra.mxu0 0
      %827 = vmatprep.subr.bf16.mxu0 0
      %828 = vmatpush2.bf16.msra.mxu0 0
      %829 = vmatprep.subr.bf16.mxu0 0
      %830 = vmatpush2.bf16.msra.mxu0 0
      %831 = vmatprep.subr.bf16.mxu0 0
      %832 = vmatpush2.bf16.msra.mxu0 0
      %833 = vmatprep.subr.bf16.mxu0 0
      %834 = vmatpush2.bf16.msra.mxu0 0
      %835 = vmatprep.mubr.bf16.mxu0 0
      %836 = vmatmul.mubr.bf16.gmra.mxu0 %v792
      %v837 = vpop.f32.mrf.mxu0
      %v838 = vadd.f32 0.0, %v837
      %v839 = vpop.f32.mrf.mxu0
      %v840 = vpop.f32.mrf.mxu0
      %v841 = vadd.f32 0.0, %v840
      %v842 = vpop.f32.mrf.mxu0
      %843 = vmatprep.mubr.bf16.mxu0 0
      %844 = vmatmul.mubr.bf16.gmra.mxu0 %v795
      %v845 = vpop.f32.mrf.mxu0
      %v846 = vadd.f32 0.0, %v845
      %v847 = vpop.f32.mrf.mxu0
      %v848 = vpop.f32.mrf.mxu0
      %v849 = vpop.f32.mrf.mxu0
      %850 = vdwg.mxu0
      %v851 = vpack.c.bf16 %v841, %v838
      %v852 = vpack.c.bf16 %v846, %v846
      %v853 = vld [vmem:[%s9] sm:$0xf]
      %v855 = vsel %vm688, %v851, 0
      %v858 = vsel %vm688, %v852, 0
      %vm860 = vcmask 1043456
      %v862 = vsel %vm860, %v853, 0
      %864 = vmatprep.subr.bf16.mxu0 0
      %865 = vmatpush1.bf16.msra.mxu0 0
      %866 = vmatprep.subr.bf16.mxu0 0
      %867 = vmatpush1.bf16.msra.mxu0 0
      %868 = vmatprep.subr.bf16.mxu0 0
      %869 = vmatpush1.bf16.msra.mxu0 0
      %870 = vmatprep.subr.bf16.mxu0 0
      %871 = vmatpush1.bf16.msra.mxu0 0
      %872 = vmatprep.subr.bf16.mxu0 0
      %873 = vmatpush1.bf16.msra.mxu0 0
      %874 = vmatprep.subr.bf16.mxu0 0
      %875 = vmatpush1.bf16.msra.mxu0 0
      %876 = vmatprep.subr.bf16.mxu0 0
      %877 = vmatpush1.bf16.msra.mxu0 0
      %878 = vmatprep.subr.bf16.mxu0 0
      %879 = vmatpush1.bf16.msra.mxu0 %v862
      %880 = vmatprep.subr.bf16.mxu0 0
      %881 = vmatpush2.bf16.msra.mxu0 0
      %882 = vmatprep.subr.bf16.mxu0 0
      %883 = vmatpush2.bf16.msra.mxu0 0
      %884 = vmatprep.subr.bf16.mxu0 0
      %885 = vmatpush2.bf16.msra.mxu0 0
      %886 = vmatprep.subr.bf16.mxu0 0
      %887 = vmatpush2.bf16.msra.mxu0 0
      %888 = vmatprep.subr.bf16.mxu0 0
      %889 = vmatpush2.bf16.msra.mxu0 0
      %890 = vmatprep.subr.bf16.mxu0 0
      %891 = vmatpush2.bf16.msra.mxu0 0
      %892 = vmatprep.subr.bf16.mxu0 0
      %893 = vmatpush2.bf16.msra.mxu0 0
      %894 = vmatprep.subr.bf16.mxu0 0
      %895 = vmatpush2.bf16.msra.mxu0 0
      %896 = vmatprep.mubr.bf16.mxu0 0
      %897 = vmatmul.mubr.bf16.gmra.mxu0 %v855
      %v898 = vpop.f32.mrf.mxu0
      %v899 = vadd.f32 0.0, %v898
      %v900 = vpop.f32.mrf.mxu0
      %v901 = vpop.f32.mrf.mxu0
      %v902 = vadd.f32 0.0, %v901
      %v903 = vpop.f32.mrf.mxu0
      %904 = vmatprep.mubr.bf16.mxu0 0
      %905 = vmatmul.mubr.bf16.gmra.mxu0 %v858
      %v906 = vpop.f32.mrf.mxu0
      %v907 = vadd.f32 0.0, %v906
      %v908 = vpop.f32.mrf.mxu0
      %v909 = vpop.f32.mrf.mxu0
      %v910 = vpop.f32.mrf.mxu0
      %911 = vdwg.mxu0
      %v912 = vadd.f32 %v462, %v899
      %v913 = vadd.f32 %v463, %v902
      %v914 = vadd.f32 %v464, %v907
      %s915 = scalar_lea.vmem %s3, 16
      %v916 = vld [vmem:[%s915] sm:$0xf]
      %v917 = vld [vmem:[%s915 + $0x4] sm:$0xf]
      %v918 = vld [vmem:[%s915 + $0x8] sm:$0xf]
      %v919 = vld [vmem:[%s915 + $0xc] sm:$0xf]
      %s920 = scalar_lea.vmem %s6, 1
      %v921 = vld [vmem:[%s920] sm:$0x1]
      %v923 = vlaneseq
      %v924 = vshrl.u32 %v923, 7
      %v925 = vsub.s32 0, %v924
      %v926 = vrot.slane %v921, %v925
      %v932 = vunpack.c.l.b16 %v916
      %v933 = vunpack.c.l.b16 %v917
      %v934 = vunpack.c.l.b16 %v918
      %v935 = vunpack.c.l.b16 %v919
      %v936 = vpack.c.b16 %v933, %v932
      %v937 = vpack.c.b16 %v935, %v934
      %940 = vmatprep.subr.bf16.mxu0 0
      %941 = vmatpush1.bf16.msra.mxu0 0
      %942 = vmatprep.subr.bf16.mxu0 0
      %943 = vmatpush1.bf16.msra.mxu0 0
      %944 = vmatprep.subr.bf16.mxu0 0
      %945 = vmatpush1.bf16.msra.mxu0 0
      %946 = vmatprep.subr.bf16.mxu0 0
      %947 = vmatpush1.bf16.msra.mxu0 0
      %948 = vmatprep.subr.bf16.mxu0 0
      %949 = vmatpush1.bf16.msra.mxu0 0
      %950 = vmatprep.subr.bf16.mxu0 0
      %951 = vmatpush1.bf16.msra.mxu0 0
      %952 = vmatprep.subr.bf16.mxu0 0
      %953 = vmatpush1.bf16.msra.mxu0 %v937
      %954 = vmatprep.subr.bf16.mxu0 0
      %955 = vmatpush1.bf16.msra.mxu0 %v936
      %956 = vmatprep.subr.bf16.mxu0 0
      %957 = vmatpush2.bf16.msra.mxu0 0
      %958 = vmatprep.subr.bf16.mxu0 0
      %959 = vmatpush2.bf16.msra.mxu0 0
      %960 = vmatprep.subr.bf16.mxu0 0
      %961 = vmatpush2.bf16.msra.mxu0 0
      %962 = vmatprep.subr.bf16.mxu0 0
      %963 = vmatpush2.bf16.msra.mxu0 0
      %964 = vmatprep.subr.bf16.mxu0 0
      %965 = vmatpush2.bf16.msra.mxu0 0
      %966 = vmatprep.subr.bf16.mxu0 0
      %967 = vmatpush2.bf16.msra.mxu0 0
      %968 = vmatprep.subr.bf16.mxu0 0
      %969 = vmatpush2.bf16.msra.mxu0 0
      %970 = vmatprep.subr.bf16.mxu0 0
      %971 = vmatpush2.bf16.msra.mxu0 0
      %972 = vmatprep.mubr.bf16.mxu0 0
      %973 = vmatmul.mubr.bf16.gmra.mxu0 %v489
      %v974 = vpop.f32.mrf.mxu0
      %v975 = vadd.f32 %v926, %v974
      %v976 = vpop.f32.mrf.mxu0
      %v977 = vpop.f32.mrf.mxu0
      %v978 = vadd.f32 %v926, %v977
      %v979 = vpop.f32.mrf.mxu0
      %980 = vmatprep.mubr.bf16.mxu0 0
      %981 = vmatmul.mubr.bf16.gmra.mxu0 %v492
      %v982 = vpop.f32.mrf.mxu0
      %v983 = vadd.f32 %v926, %v982
      %v984 = vpop.f32.mrf.mxu0
      %v985 = vpop.f32.mrf.mxu0
      %v986 = vpop.f32.mrf.mxu0
      %987 = vdwg.mxu0
      %s988 = scalar_lea.vmem %s4, 16
      %v989 = vld [vmem:[%s988] sm:$0xf]
      %v990 = vld [vmem:[%s988 + $0x4] sm:$0xf]
      %v991 = vld [vmem:[%s988 + $0x8] sm:$0xf]
      %v992 = vld [vmem:[%s988 + $0xc] sm:$0xf]
      %s993 = scalar_lea.vmem %s7, 1
      %v994 = vld [vmem:[%s993] sm:$0x1]
      %v996 = vlaneseq
      %v997 = vshrl.u32 %v996, 7
      %v998 = vsub.s32 0, %v997
      %v999 = vrot.slane %v994, %v998
      %v1005 = vunpack.c.l.b16 %v989
      %v1006 = vunpack.c.l.b16 %v990
      %v1007 = vunpack.c.l.b16 %v991
      %v1008 = vunpack.c.l.b16 %v992
      %v1009 = vpack.c.b16 %v1006, %v1005
      %v1010 = vpack.c.b16 %v1008, %v1007
      %1013 = vmatprep.subr.bf16.mxu0 0
      %1014 = vmatpush1.bf16.msra.mxu0 0
      %1015 = vmatprep.subr.bf16.mxu0 0
      %1016 = vmatpush1.bf16.msra.mxu0 0
      %1017 = vmatprep.subr.bf16.mxu0 0
      %1018 = vmatpush1.bf16.msra.mxu0 0
      %1019 = vmatprep.subr.bf16.mxu0 0
      %1020 = vmatpush1.bf16.msra.mxu0 0
      %1021 = vmatprep.subr.bf16.mxu0 0
      %1022 = vmatpush1.bf16.msra.mxu0 0
      %1023 = vmatprep.subr.bf16.mxu0 0
      %1024 = vmatpush1.bf16.msra.mxu0 0
      %1025 = vmatprep.subr.bf16.mxu0 0
      %1026 = vmatpush1.bf16.msra.mxu0 %v1010
      %1027 = vmatprep.subr.bf16.mxu0 0
      %1028 = vmatpush1.bf16.msra.mxu0 %v1009
      %1029 = vmatprep.subr.bf16.mxu0 0
      %1030 = vmatpush2.bf16.msra.mxu0 0
      %1031 = vmatprep.subr.bf16.mxu0 0
      %1032 = vmatpush2.bf16.msra.mxu0 0
      %1033 = vmatprep.subr.bf16.mxu0 0
      %1034 = vmatpush2.bf16.msra.mxu0 0
      %1035 = vmatprep.subr.bf16.mxu0 0
      %1036 = vmatpush2.bf16.msra.mxu0 0
      %1037 = vmatprep.subr.bf16.mxu0 0
      %1038 = vmatpush2.bf16.msra.mxu0 0
      %1039 = vmatprep.subr.bf16.mxu0 0
      %1040 = vmatpush2.bf16.msra.mxu0 0
      %1041 = vmatprep.subr.bf16.mxu0 0
      %1042 = vmatpush2.bf16.msra.mxu0 0
      %1043 = vmatprep.subr.bf16.mxu0 0
      %1044 = vmatpush2.bf16.msra.mxu0 0
      %1045 = vmatprep.mubr.bf16.mxu0 0
      %1046 = vmatmul.mubr.bf16.gmra.mxu0 %v489
      %v1047 = vpop.f32.mrf.mxu0
      %v1048 = vadd.f32 %v999, %v1047
      %v1049 = vpop.f32.mrf.mxu0
      %v1050 = vpop.f32.mrf.mxu0
      %v1051 = vadd.f32 %v999, %v1050
      %v1052 = vpop.f32.mrf.mxu0
      %1053 = vmatprep.mubr.bf16.mxu0 0
      %1054 = vmatmul.mubr.bf16.gmra.mxu0 %v492
      %v1055 = vpop.f32.mrf.mxu0
      %v1056 = vadd.f32 %v999, %v1055
      %v1057 = vpop.f32.mrf.mxu0
      %v1058 = vpop.f32.mrf.mxu0
      %v1059 = vpop.f32.mrf.mxu0
      %1060 = vdwg.mxu0
      %s1061 = scalar_lea.vmem %s5, 16
      %v1062 = vld [vmem:[%s1061] sm:$0xf]
      %v1063 = vld [vmem:[%s1061 + $0x4] sm:$0xf]
      %v1064 = vld [vmem:[%s1061 + $0x8] sm:$0xf]
      %v1065 = vld [vmem:[%s1061 + $0xc] sm:$0xf]
      %s1066 = scalar_lea.vmem %s8, 1
      %v1067 = vld [vmem:[%s1066] sm:$0x1]
      %v1069 = vlaneseq
      %v1070 = vshrl.u32 %v1069, 7
      %v1071 = vsub.s32 0, %v1070
      %v1072 = vrot.slane %v1067, %v1071
      %v1078 = vunpack.c.l.b16 %v1062
      %v1079 = vunpack.c.l.b16 %v1063
      %v1080 = vunpack.c.l.b16 %v1064
      %v1081 = vunpack.c.l.b16 %v1065
      %v1082 = vpack.c.b16 %v1079, %v1078
      %v1083 = vpack.c.b16 %v1081, %v1080
      %1086 = vmatprep.subr.bf16.mxu0 0
      %1087 = vmatpush1.bf16.msra.mxu0 0
      %1088 = vmatprep.subr.bf16.mxu0 0
      %1089 = vmatpush1.bf16.msra.mxu0 0
      %1090 = vmatprep.subr.bf16.mxu0 0
      %1091 = vmatpush1.bf16.msra.mxu0 0
      %1092 = vmatprep.subr.bf16.mxu0 0
      %1093 = vmatpush1.bf16.msra.mxu0 0
      %1094 = vmatprep.subr.bf16.mxu0 0
      %1095 = vmatpush1.bf16.msra.mxu0 0
      %1096 = vmatprep.subr.bf16.mxu0 0
      %1097 = vmatpush1.bf16.msra.mxu0 0
      %1098 = vmatprep.subr.bf16.mxu0 0
      %1099 = vmatpush1.bf16.msra.mxu0 %v1083
      %1100 = vmatprep.subr.bf16.mxu0 0
      %1101 = vmatpush1.bf16.msra.mxu0 %v1082
      %1102 = vmatprep.subr.bf16.mxu0 0
      %1103 = vmatpush2.bf16.msra.mxu0 0
      %1104 = vmatprep.subr.bf16.mxu0 0
      %1105 = vmatpush2.bf16.msra.mxu0 0
      %1106 = vmatprep.subr.bf16.mxu0 0
      %1107 = vmatpush2.bf16.msra.mxu0 0
      %1108 = vmatprep.subr.bf16.mxu0 0
      %1109 = vmatpush2.bf16.msra.mxu0 0
      %1110 = vmatprep.subr.bf16.mxu0 0
      %1111 = vmatpush2.bf16.msra.mxu0 0
      %1112 = vmatprep.subr.bf16.mxu0 0
      %1113 = vmatpush2.bf16.msra.mxu0 0
      %1114 = vmatprep.subr.bf16.mxu0 0
      %1115 = vmatpush2.bf16.msra.mxu0 0
      %1116 = vmatprep.subr.bf16.mxu0 0
      %1117 = vmatpush2.bf16.msra.mxu0 0
      %1118 = vmatprep.mubr.bf16.mxu0 0
      %1119 = vmatmul.mubr.bf16.gmra.mxu0 %v489
      %v1120 = vpop.f32.mrf.mxu0
      %v1121 = vadd.f32 %v1072, %v1120
      %v1122 = vpop.f32.mrf.mxu0
      %v1123 = vpop.f32.mrf.mxu0
      %v1124 = vadd.f32 %v1072, %v1123
      %v1125 = vpop.f32.mrf.mxu0
      %1126 = vmatprep.mubr.bf16.mxu0 0
      %1127 = vmatmul.mubr.bf16.gmra.mxu0 %v492
      %v1128 = vpop.f32.mrf.mxu0
      %v1129 = vadd.f32 %v1072, %v1128
      %v1130 = vpop.f32.mrf.mxu0
      %v1131 = vpop.f32.mrf.mxu0
      %v1132 = vpop.f32.mrf.mxu0
      %1133 = vdwg.mxu0
      %v1134 = vpack.c.bf16 %v978, %v975
      %v1135 = vpack.c.bf16 %v983, %v983
      %v1136 = vpack.c.bf16 %v1051, %v1048
      %v1137 = vpack.c.bf16 %v1056, %v1056
      %v1139 = vsel %vm688, %v1134, 0
      %v1142 = vsel %vm688, %v1135, 0
      %v1145 = vsel %vm688, %v1136, 0
      %v1148 = vsel %vm688, %v1137, 0
      %1150 = vmatprep.subr.bf16.mxu0 0
      %1151 = vmatpush1.bf16.xpose.msra.mxu0 0
      %1152 = vmatprep.subr.bf16.mxu0 0
      %1153 = vmatpush1.bf16.xpose.msra.mxu0 0
      %1154 = vmatprep.subr.bf16.mxu0 0
      %1155 = vmatpush1.bf16.xpose.msra.mxu0 0
      %1156 = vmatprep.subr.bf16.mxu0 0
      %1157 = vmatpush1.bf16.xpose.msra.mxu0 0
      %1158 = vmatprep.subr.bf16.mxu0 0
      %1159 = vmatpush1.bf16.xpose.msra.mxu0 0
      %1160 = vmatprep.subr.bf16.mxu0 0
      %1161 = vmatpush1.bf16.xpose.msra.mxu0 0
      %1162 = vmatprep.subr.bf16.mxu0 0
      %1163 = vmatpush1.bf16.xpose.msra.mxu0 %v1148
      %1164 = vmatprep.subr.bf16.mxu0 0
      %1165 = vmatpush1.bf16.xpose.msra.mxu0 %v1145
      %1166 = vmatprep.subr.bf16.mxu0 0
      %1167 = vmatpush2.bf16.xpose.msra.mxu0 0
      %1168 = vmatprep.subr.bf16.mxu0 0
      %1169 = vmatpush2.bf16.xpose.msra.mxu0 0
      %1170 = vmatprep.subr.bf16.mxu0 0
      %1171 = vmatpush2.bf16.xpose.msra.mxu0 0
      %1172 = vmatprep.subr.bf16.mxu0 0
      %1173 = vmatpush2.bf16.xpose.msra.mxu0 0
      %1174 = vmatprep.subr.bf16.mxu0 0
      %1175 = vmatpush2.bf16.xpose.msra.mxu0 0
      %1176 = vmatprep.subr.bf16.mxu0 0
      %1177 = vmatpush2.bf16.xpose.msra.mxu0 0
      %1178 = vmatprep.subr.bf16.mxu0 0
      %1179 = vmatpush2.bf16.xpose.msra.mxu0 0
      %1180 = vmatprep.subr.bf16.mxu0 0
      %1181 = vmatpush2.bf16.xpose.msra.mxu0 0
      %1182 = vmatprep.mubr.bf16.mxu0 0
      %1183 = vmatmul.mubr.bf16.gmra.mxu0 %v1139
      %v1184 = vpop.f32.mrf.mxu0
      %v1185 = vadd.f32 0.0, %v1184
      %v1186 = vpop.f32.mrf.mxu0
      %v1187 = vpop.f32.mrf.mxu0
      %v1188 = vadd.f32 0.0, %v1187
      %v1189 = vpop.f32.mrf.mxu0
      %1190 = vmatprep.mubr.bf16.mxu0 0
      %1191 = vmatmul.mubr.bf16.gmra.mxu0 %v1142
      %v1192 = vpop.f32.mrf.mxu0
      %v1193 = vadd.f32 0.0, %v1192
      %v1194 = vpop.f32.mrf.mxu0
      %v1195 = vpop.f32.mrf.mxu0
      %v1196 = vpop.f32.mrf.mxu0
      %1197 = vdwg.mxu0
      %v1198 = vmul.f32 %v1185, 0.35355338
      %v1199 = vmul.f32 %v1188, 0.35355338
      %v1200 = vmul.f32 %v1193, 0.35355338
      %v1201 = vsel %vm752, %v1198, -inf
      %1202 = vmax.xlane.f32.xlu0 %v1201
      %v1203 = vpop.xlane.xlu0 %1202
      %v1204 = vsel %vm752, %v1199, -inf
      %1205 = vmax.xlane.f32.xlu0 %v1204
      %v1206 = vpop.xlane.xlu0 %1205
      %v1207 = vsel %vm759, %v1200, -inf
      %1208 = vmax.xlane.f32.xlu0 %v1207
      %v1209 = vpop.xlane.xlu0 %1208
      %v1210 = vsub.f32 %v1198, %v1203
      %v1211 = vsub.f32 %v1199, %v1206
      %v1212 = vsub.f32 %v1200, %v1209
      %v1213 = vmul.f32 %v1210, 1.442695
      %v1214 = vpow.pop %v1213
      %v1215 = vmul.f32 %v1211, 1.442695
      %v1216 = vpow.pop %v1215
      %v1217 = vmul.f32 %v1212, 1.442695
      %v1218 = vpow.pop %v1217
      %v1219 = vsel %vm752, %v1214, 0.0
      %1220 = vadd.xlane.f32.xlu0 %v1219
      %v1221 = vpop.xlane.xlu0 %1220
      %v1222 = vsel %vm752, %v1216, 0.0
      %1223 = vadd.xlane.f32.xlu0 %v1222
      %v1224 = vpop.xlane.xlu0 %1223
      %v1225 = vsel %vm759, %v1218, 0.0
      %1226 = vadd.xlane.f32.xlu0 %v1225
      %v1227 = vpop.xlane.xlu0 %1226
      %v1228 = vrcp.pop %v1221
      %v1229 = vrcp.pop %v1224
      %v1230 = vrcp.pop %v1227
      %v1231 = vmul.f32 %v1214, %v1228
      %v1232 = vmul.f32 %v1216, %v1229
      %v1233 = vmul.f32 %v1218, %v1230
      %v1234 = vpack.c.bf16 %v1232, %v1231
      %v1235 = vpack.c.bf16 %v1233, %v1233
      %v1236 = vpack.c.bf16 %v1124, %v1121
      %v1237 = vpack.c.bf16 %v1129, %v1129
      %v1239 = vsel %vm752, %v1234, 0
      %v1242 = vsel %vm752, %v1235, 0
      %v1245 = vand.u32 %v1237, %v799
      %1247 = vmatprep.subr.bf16.mxu0 0
      %1248 = vmatpush1.bf16.msra.mxu0 0
      %1249 = vmatprep.subr.bf16.mxu0 0
      %1250 = vmatpush1.bf16.msra.mxu0 0
      %1251 = vmatprep.subr.bf16.mxu0 0
      %1252 = vmatpush1.bf16.msra.mxu0 0
      %1253 = vmatprep.subr.bf16.mxu0 0
      %1254 = vmatpush1.bf16.msra.mxu0 0
      %1255 = vmatprep.subr.bf16.mxu0 0
      %1256 = vmatpush1.bf16.msra.mxu0 0
      %1257 = vmatprep.subr.bf16.mxu0 0
      %1258 = vmatpush1.bf16.msra.mxu0 0
      %1259 = vmatprep.subr.bf16.mxu0 0
      %1260 = vmatpush1.bf16.msra.mxu0 %v1245
      %1261 = vmatprep.subr.bf16.mxu0 0
      %1262 = vmatpush1.bf16.msra.mxu0 %v1236
      %1263 = vmatprep.subr.bf16.mxu0 0
      %1264 = vmatpush2.bf16.msra.mxu0 0
      %1265 = vmatprep.subr.bf16.mxu0 0
      %1266 = vmatpush2.bf16.msra.mxu0 0
      %1267 = vmatprep.subr.bf16.mxu0 0
      %1268 = vmatpush2.bf16.msra.mxu0 0
      %1269 = vmatprep.subr.bf16.mxu0 0
      %1270 = vmatpush2.bf16.msra.mxu0 0
      %1271 = vmatprep.subr.bf16.mxu0 0
      %1272 = vmatpush2.bf16.msra.mxu0 0
      %1273 = vmatprep.subr.bf16.mxu0 0
      %1274 = vmatpush2.bf16.msra.mxu0 0
      %1275 = vmatprep.subr.bf16.mxu0 0
      %1276 = vmatpush2.bf16.msra.mxu0 0
      %1277 = vmatprep.subr.bf16.mxu0 0
      %1278 = vmatpush2.bf16.msra.mxu0 0
      %1279 = vmatprep.mubr.bf16.mxu0 0
      %1280 = vmatmul.mubr.bf16.gmra.mxu0 %v1239
      %v1281 = vpop.f32.mrf.mxu0
      %v1282 = vadd.f32 0.0, %v1281
      %v1283 = vpop.f32.mrf.mxu0
      %v1284 = vpop.f32.mrf.mxu0
      %v1285 = vadd.f32 0.0, %v1284
      %v1286 = vpop.f32.mrf.mxu0
      %1287 = vmatprep.mubr.bf16.mxu0 0
      %1288 = vmatmul.mubr.bf16.gmra.mxu0 %v1242
      %v1289 = vpop.f32.mrf.mxu0
      %v1290 = vadd.f32 0.0, %v1289
      %v1291 = vpop.f32.mrf.mxu0
      %v1292 = vpop.f32.mrf.mxu0
      %v1293 = vpop.f32.mrf.mxu0
      %1294 = vdwg.mxu0
      %v1295 = vpack.c.bf16 %v1285, %v1282
      %v1296 = vpack.c.bf16 %v1290, %v1290
      %s1297 = scalar_lea.vmem %s9, 4
      %v1298 = vld [vmem:[%s1297] sm:$0xf]
      %v1300 = vsel %vm688, %v1295, 0
      %v1303 = vsel %vm688, %v1296, 0
      %v1306 = vsel %vm860, %v1298, 0
      %1308 = vmatprep.subr.bf16.mxu0 0
      %1309 = vmatpush1.bf16.msra.mxu0 0
      %1310 = vmatprep.subr.bf16.mxu0 0
      %1311 = vmatpush1.bf16.msra.mxu0 0
      %1312 = vmatprep.subr.bf16.mxu0 0
      %1313 = vmatpush1.bf16.msra.mxu0 0
      %1314 = vmatprep.subr.bf16.mxu0 0
      %1315 = vmatpush1.bf16.msra.mxu0 0
      %1316 = vmatprep.subr.bf16.mxu0 0
      %1317 = vmatpush1.bf16.msra.mxu0 0
      %1318 = vmatprep.subr.bf16.mxu0 0
      %1319 = vmatpush1.bf16.msra.mxu0 0
      %1320 = vmatprep.subr.bf16.mxu0 0
      %1321 = vmatpush1.bf16.msra.mxu0 0
      %1322 = vmatprep.subr.bf16.mxu0 0
      %1323 = vmatpush1.bf16.msra.mxu0 %v1306
      %1324 = vmatprep.subr.bf16.mxu0 0
      %1325 = vmatpush2.bf16.msra.mxu0 0
      %1326 = vmatprep.subr.bf16.mxu0 0
      %1327 = vmatpush2.bf16.msra.mxu0 0
      %1328 = vmatprep.subr.bf16.mxu0 0
      %1329 = vmatpush2.bf16.msra.mxu0 0
      %1330 = vmatprep.subr.bf16.mxu0 0
      %1331 = vmatpush2.bf16.msra.mxu0 0
      %1332 = vmatprep.subr.bf16.mxu0 0
      %1333 = vmatpush2.bf16.msra.mxu0 0
      %1334 = vmatprep.subr.bf16.mxu0 0
      %1335 = vmatpush2.bf16.msra.mxu0 0
      %1336 = vmatprep.subr.bf16.mxu0 0
      %1337 = vmatpush2.bf16.msra.mxu0 0
      %1338 = vmatprep.subr.bf16.mxu0 0
      %1339 = vmatpush2.bf16.msra.mxu0 0
      %1340 = vmatprep.mubr.bf16.mxu0 0
      %1341 = vmatmul.mubr.bf16.gmra.mxu0 %v1300
      %v1342 = vpop.f32.mrf.mxu0
      %v1343 = vadd.f32 0.0, %v1342
      %v1344 = vpop.f32.mrf.mxu0
      %v1345 = vpop.f32.mrf.mxu0
      %v1346 = vadd.f32 0.0, %v1345
      %v1347 = vpop.f32.mrf.mxu0
      %1348 = vmatprep.mubr.bf16.mxu0 0
      %1349 = vmatmul.mubr.bf16.gmra.mxu0 %v1303
      %v1350 = vpop.f32.mrf.mxu0
      %v1351 = vadd.f32 0.0, %v1350
      %v1352 = vpop.f32.mrf.mxu0
      %v1353 = vpop.f32.mrf.mxu0
      %v1354 = vpop.f32.mrf.mxu0
      %1355 = vdwg.mxu0
      %v1356 = vadd.f32 %v912, %v1343
      %v1357 = vadd.f32 %v913, %v1346
      %v1358 = vadd.f32 %v914, %v1351
      %s1359 = scalar_lea.vmem %s3, 32
      %v1360 = vld [vmem:[%s1359] sm:$0xf]
      %v1361 = vld [vmem:[%s1359 + $0x4] sm:$0xf]
      %v1362 = vld [vmem:[%s1359 + $0x8] sm:$0xf]
      %v1363 = vld [vmem:[%s1359 + $0xc] sm:$0xf]
      %s1364 = scalar_lea.vmem %s6, 2
      %v1365 = vld [vmem:[%s1364] sm:$0x1]
      %v1367 = vlaneseq
      %v1368 = vshrl.u32 %v1367, 7
      %v1369 = vsub.s32 0, %v1368
      %v1370 = vrot.slane %v1365, %v1369
      %v1376 = vunpack.c.l.b16 %v1360
      %v1377 = vunpack.c.l.b16 %v1361
      %v1378 = vunpack.c.l.b16 %v1362
      %v1379 = vunpack.c.l.b16 %v1363
      %v1380 = vpack.c.b16 %v1377, %v1376
      %v1381 = vpack.c.b16 %v1379, %v1378
      %1384 = vmatprep.subr.bf16.mxu0 0
      %1385 = vmatpush1.bf16.msra.mxu0 0
      %1386 = vmatprep.subr.bf16.mxu0 0
      %1387 = vmatpush1.bf16.msra.mxu0 0
      %1388 = vmatprep.subr.bf16.mxu0 0
      %1389 = vmatpush1.bf16.msra.mxu0 0
      %1390 = vmatprep.subr.bf16.mxu0 0
      %1391 = vmatpush1.bf16.msra.mxu0 0
      %1392 = vmatprep.subr.bf16.mxu0 0
      %1393 = vmatpush1.bf16.msra.mxu0 0
      %1394 = vmatprep.subr.bf16.mxu0 0
      %1395 = vmatpush1.bf16.msra.mxu0 0
      %1396 = vmatprep.subr.bf16.mxu0 0
      %1397 = vmatpush1.bf16.msra.mxu0 %v1381
      %1398 = vmatprep.subr.bf16.mxu0 0
      %1399 = vmatpush1.bf16.msra.mxu0 %v1380
      %1400 = vmatprep.subr.bf16.mxu0 0
      %1401 = vmatpush2.bf16.msra.mxu0 0
      %1402 = vmatprep.subr.bf16.mxu0 0
      %1403 = vmatpush2.bf16.msra.mxu0 0
      %1404 = vmatprep.subr.bf16.mxu0 0
      %1405 = vmatpush2.bf16.msra.mxu0 0
      %1406 = vmatprep.subr.bf16.mxu0 0
      %1407 = vmatpush2.bf16.msra.mxu0 0
      %1408 = vmatprep.subr.bf16.mxu0 0
      %1409 = vmatpush2.bf16.msra.mxu0 0
      %1410 = vmatprep.subr.bf16.mxu0 0
      %1411 = vmatpush2.bf16.msra.mxu0 0
      %1412 = vmatprep.subr.bf16.mxu0 0
      %1413 = vmatpush2.bf16.msra.mxu0 0
      %1414 = vmatprep.subr.bf16.mxu0 0
      %1415 = vmatpush2.bf16.msra.mxu0 0
      %1416 = vmatprep.mubr.bf16.mxu0 0
      %1417 = vmatmul.mubr.bf16.gmra.mxu0 %v489
      %v1418 = vpop.f32.mrf.mxu0
      %v1419 = vadd.f32 %v1370, %v1418
      %v1420 = vpop.f32.mrf.mxu0
      %v1421 = vpop.f32.mrf.mxu0
      %v1422 = vadd.f32 %v1370, %v1421
      %v1423 = vpop.f32.mrf.mxu0
      %1424 = vmatprep.mubr.bf16.mxu0 0
      %1425 = vmatmul.mubr.bf16.gmra.mxu0 %v492
      %v1426 = vpop.f32.mrf.mxu0
      %v1427 = vadd.f32 %v1370, %v1426
      %v1428 = vpop.f32.mrf.mxu0
      %v1429 = vpop.f32.mrf.mxu0
      %v1430 = vpop.f32.mrf.mxu0
      %1431 = vdwg.mxu0
      %s1432 = scalar_lea.vmem %s4, 32
      %v1433 = vld [vmem:[%s1432] sm:$0xf]
      %v1434 = vld [vmem:[%s1432 + $0x4] sm:$0xf]
      %v1435 = vld [vmem:[%s1432 + $0x8] sm:$0xf]
      %v1436 = vld [vmem:[%s1432 + $0xc] sm:$0xf]
      %s1437 = scalar_lea.vmem %s7, 2
      %v1438 = vld [vmem:[%s1437] sm:$0x1]
      %v1440 = vlaneseq
      %v1441 = vshrl.u32 %v1440, 7
      %v1442 = vsub.s32 0, %v1441
      %v1443 = vrot.slane %v1438, %v1442
      %v1449 = vunpack.c.l.b16 %v1433
      %v1450 = vunpack.c.l.b16 %v1434
      %v1451 = vunpack.c.l.b16 %v1435
      %v1452 = vunpack.c.l.b16 %v1436
      %v1453 = vpack.c.b16 %v1450, %v1449
      %v1454 = vpack.c.b16 %v1452, %v1451
      %1457 = vmatprep.subr.bf16.mxu0 0
      %1458 = vmatpush1.bf16.msra.mxu0 0
      %1459 = vmatprep.subr.bf16.mxu0 0
      %1460 = vmatpush1.bf16.msra.mxu0 0
      %1461 = vmatprep.subr.bf16.mxu0 0
      %1462 = vmatpush1.bf16.msra.mxu0 0
      %1463 = vmatprep.subr.bf16.mxu0 0
      %1464 = vmatpush1.bf16.msra.mxu0 0
      %1465 = vmatprep.subr.bf16.mxu0 0
      %1466 = vmatpush1.bf16.msra.mxu0 0
      %1467 = vmatprep.subr.bf16.mxu0 0
      %1468 = vmatpush1.bf16.msra.mxu0 0
      %1469 = vmatprep.subr.bf16.mxu0 0
      %1470 = vmatpush1.bf16.msra.mxu0 %v1454
      %1471 = vmatprep.subr.bf16.mxu0 0
      %1472 = vmatpush1.bf16.msra.mxu0 %v1453
      %1473 = vmatprep.subr.bf16.mxu0 0
      %1474 = vmatpush2.bf16.msra.mxu0 0
      %1475 = vmatprep.subr.bf16.mxu0 0
      %1476 = vmatpush2.bf16.msra.mxu0 0
      %1477 = vmatprep.subr.bf16.mxu0 0
      %1478 = vmatpush2.bf16.msra.mxu0 0
      %1479 = vmatprep.subr.bf16.mxu0 0
      %1480 = vmatpush2.bf16.msra.mxu0 0
      %1481 = vmatprep.subr.bf16.mxu0 0
      %1482 = vmatpush2.bf16.msra.mxu0 0
      %1483 = vmatprep.subr.bf16.mxu0 0
      %1484 = vmatpush2.bf16.msra.mxu0 0
      %1485 = vmatprep.subr.bf16.mxu0 0
      %1486 = vmatpush2.bf16.msra.mxu0 0
      %1487 = vmatprep.subr.bf16.mxu0 0
      %1488 = vmatpush2.bf16.msra.mxu0 0
      %1489 = vmatprep.mubr.bf16.mxu0 0
      %1490 = vmatmul.mubr.bf16.gmra.mxu0 %v489
      %v1491 = vpop.f32.mrf.mxu0
      %v1492 = vadd.f32 %v1443, %v1491
      %v1493 = vpop.f32.mrf.mxu0
      %v1494 = vpop.f32.mrf.mxu0
      %v1495 = vadd.f32 %v1443, %v1494
      %v1496 = vpop.f32.mrf.mxu0
      %1497 = vmatprep.mubr.bf16.mxu0 0
      %1498 = vmatmul.mubr.bf16.gmra.mxu0 %v492
      %v1499 = vpop.f32.mrf.mxu0
      %v1500 = vadd.f32 %v1443, %v1499
      %v1501 = vpop.f32.mrf.mxu0
      %v1502 = vpop.f32.mrf.mxu0
      %v1503 = vpop.f32.mrf.mxu0
      %1504 = vdwg.mxu0
      %s1505 = scalar_lea.vmem %s5, 32
      %v1506 = vld [vmem:[%s1505] sm:$0xf]
      %v1507 = vld [vmem:[%s1505 + $0x4] sm:$0xf]
      %v1508 = vld [vmem:[%s1505 + $0x8] sm:$0xf]
      %v1509 = vld [vmem:[%s1505 + $0xc] sm:$0xf]
      %s1510 = scalar_lea.vmem %s8, 2
      %v1511 = vld [vmem:[%s1510] sm:$0x1]
      %v1513 = vlaneseq
      %v1514 = vshrl.u32 %v1513, 7
      %v1515 = vsub.s32 0, %v1514
      %v1516 = vrot.slane %v1511, %v1515
      %v1522 = vunpack.c.l.b16 %v1506
      %v1523 = vunpack.c.l.b16 %v1507
      %v1524 = vunpack.c.l.b16 %v1508
      %v1525 = vunpack.c.l.b16 %v1509
      %v1526 = vpack.c.b16 %v1523, %v1522
      %v1527 = vpack.c.b16 %v1525, %v1524
      %1530 = vmatprep.subr.bf16.mxu0 0
      %1531 = vmatpush1.bf16.msra.mxu0 0
      %1532 = vmatprep.subr.bf16.mxu0 0
      %1533 = vmatpush1.bf16.msra.mxu0 0
      %1534 = vmatprep.subr.bf16.mxu0 0
      %1535 = vmatpush1.bf16.msra.mxu0 0
      %1536 = vmatprep.subr.bf16.mxu0 0
      %1537 = vmatpush1.bf16.msra.mxu0 0
      %1538 = vmatprep.subr.bf16.mxu0 0
      %1539 = vmatpush1.bf16.msra.mxu0 0
      %1540 = vmatprep.subr.bf16.mxu0 0
      %1541 = vmatpush1.bf16.msra.mxu0 0
      %1542 = vmatprep.subr.bf16.mxu0 0
      %1543 = vmatpush1.bf16.msra.mxu0 %v1527
      %1544 = vmatprep.subr.bf16.mxu0 0
      %1545 = vmatpush1.bf16.msra.mxu0 %v1526
      %1546 = vmatprep.subr.bf16.mxu0 0
      %1547 = vmatpush2.bf16.msra.mxu0 0
      %1548 = vmatprep.subr.bf16.mxu0 0
      %1549 = vmatpush2.bf16.msra.mxu0 0
      %1550 = vmatprep.subr.bf16.mxu0 0
      %1551 = vmatpush2.bf16.msra.mxu0 0
      %1552 = vmatprep.subr.bf16.mxu0 0
      %1553 = vmatpush2.bf16.msra.mxu0 0
      %1554 = vmatprep.subr.bf16.mxu0 0
      %1555 = vmatpush2.bf16.msra.mxu0 0
      %1556 = vmatprep.subr.bf16.mxu0 0
      %1557 = vmatpush2.bf16.msra.mxu0 0
      %1558 = vmatprep.subr.bf16.mxu0 0
      %1559 = vmatpush2.bf16.msra.mxu0 0
      %1560 = vmatprep.subr.bf16.mxu0 0
      %1561 = vmatpush2.bf16.msra.mxu0 0
      %1562 = vmatprep.mubr.bf16.mxu0 0
      %1563 = vmatmul.mubr.bf16.gmra.mxu0 %v489
      %v1564 = vpop.f32.mrf.mxu0
      %v1565 = vadd.f32 %v1516, %v1564
      %v1566 = vpop.f32.mrf.mxu0
      %v1567 = vpop.f32.mrf.mxu0
      %v1568 = vadd.f32 %v1516, %v1567
      %v1569 = vpop.f32.mrf.mxu0
      %1570 = vmatprep.mubr.bf16.mxu0 0
      %1571 = vmatmul.mubr.bf16.gmra.mxu0 %v492
      %v1572 = vpop.f32.mrf.mxu0
      %v1573 = vadd.f32 %v1516, %v1572
      %v1574 = vpop.f32.mrf.mxu0
      %v1575 = vpop.f32.mrf.mxu0
      %v1576 = vpop.f32.mrf.mxu0
      %1577 = vdwg.mxu0
      %v1578 = vpack.c.bf16 %v1422, %v1419
      %v1579 = vpack.c.bf16 %v1427, %v1427
      %v1580 = vpack.c.bf16 %v1495, %v1492
      %v1581 = vpack.c.bf16 %v1500, %v1500
      %v1583 = vsel %vm688, %v1578, 0
      %v1586 = vsel %vm688, %v1579, 0
      %v1589 = vsel %vm688, %v1580, 0
      %v1592 = vsel %vm688, %v1581, 0
      %1594 = vmatprep.subr.bf16.mxu0 0
      %1595 = vmatpush1.bf16.xpose.msra.mxu0 0
      %1596 = vmatprep.subr.bf16.mxu0 0
      %1597 = vmatpush1.bf16.xpose.msra.mxu0 0
      %1598 = vmatprep.subr.bf16.mxu0 0
      %1599 = vmatpush1.bf16.xpose.msra.mxu0 0
      %1600 = vmatprep.subr.bf16.mxu0 0
      %1601 = vmatpush1.bf16.xpose.msra.mxu0 0
      %1602 = vmatprep.subr.bf16.mxu0 0
      %1603 = vmatpush1.bf16.xpose.msra.mxu0 0
      %1604 = vmatprep.subr.bf16.mxu0 0
      %1605 = vmatpush1.bf16.xpose.msra.mxu0 0
      %1606 = vmatprep.subr.bf16.mxu0 0
      %1607 = vmatpush1.bf16.xpose.msra.mxu0 %v1592
      %1608 = vmatprep.subr.bf16.mxu0 0
      %1609 = vmatpush1.bf16.xpose.msra.mxu0 %v1589
      %1610 = vmatprep.subr.bf16.mxu0 0
      %1611 = vmatpush2.bf16.xpose.msra.mxu0 0
      %1612 = vmatprep.subr.bf16.mxu0 0
      %1613 = vmatpush2.bf16.xpose.msra.mxu0 0
      %1614 = vmatprep.subr.bf16.mxu0 0
      %1615 = vmatpush2.bf16.xpose.msra.mxu0 0
      %1616 = vmatprep.subr.bf16.mxu0 0
      %1617 = vmatpush2.bf16.xpose.msra.mxu0 0
      %1618 = vmatprep.subr.bf16.mxu0 0
      %1619 = vmatpush2.bf16.xpose.msra.mxu0 0
      %1620 = vmatprep.subr.bf16.mxu0 0
      %1621 = vmatpush2.bf16.xpose.msra.mxu0 0
      %1622 = vmatprep.subr.bf16.mxu0 0
      %1623 = vmatpush2.bf16.xpose.msra.mxu0 0
      %1624 = vmatprep.subr.bf16.mxu0 0
      %1625 = vmatpush2.bf16.xpose.msra.mxu0 0
      %1626 = vmatprep.mubr.bf16.mxu0 0
      %1627 = vmatmul.mubr.bf16.gmra.mxu0 %v1583
      %v1628 = vpop.f32.mrf.mxu0
      %v1629 = vadd.f32 0.0, %v1628
      %v1630 = vpop.f32.mrf.mxu0
      %v1631 = vpop.f32.mrf.mxu0
      %v1632 = vadd.f32 0.0, %v1631
      %v1633 = vpop.f32.mrf.mxu0
      %1634 = vmatprep.mubr.bf16.mxu0 0
      %1635 = vmatmul.mubr.bf16.gmra.mxu0 %v1586
      %v1636 = vpop.f32.mrf.mxu0
      %v1637 = vadd.f32 0.0, %v1636
      %v1638 = vpop.f32.mrf.mxu0
      %v1639 = vpop.f32.mrf.mxu0
      %v1640 = vpop.f32.mrf.mxu0
      %1641 = vdwg.mxu0
      %v1642 = vmul.f32 %v1629, 0.35355338
      %v1643 = vmul.f32 %v1632, 0.35355338
      %v1644 = vmul.f32 %v1637, 0.35355338
      %v1645 = vsel %vm752, %v1642, -inf
      %1646 = vmax.xlane.f32.xlu0 %v1645
      %v1647 = vpop.xlane.xlu0 %1646
      %v1648 = vsel %vm752, %v1643, -inf
      %1649 = vmax.xlane.f32.xlu0 %v1648
      %v1650 = vpop.xlane.xlu0 %1649
      %v1651 = vsel %vm759, %v1644, -inf
      %1652 = vmax.xlane.f32.xlu0 %v1651
      %v1653 = vpop.xlane.xlu0 %1652
      %v1654 = vsub.f32 %v1642, %v1647
      %v1655 = vsub.f32 %v1643, %v1650
      %v1656 = vsub.f32 %v1644, %v1653
      %v1657 = vmul.f32 %v1654, 1.442695
      %v1658 = vpow.pop %v1657
      %v1659 = vmul.f32 %v1655, 1.442695
      %v1660 = vpow.pop %v1659
      %v1661 = vmul.f32 %v1656, 1.442695
      %v1662 = vpow.pop %v1661
      %v1663 = vsel %vm752, %v1658, 0.0
      %1664 = vadd.xlane.f32.xlu0 %v1663
      %v1665 = vpop.xlane.xlu0 %1664
      %v1666 = vsel %vm752, %v1660, 0.0
      %1667 = vadd.xlane.f32.xlu0 %v1666
      %v1668 = vpop.xlane.xlu0 %1667
      %v1669 = vsel %vm759, %v1662, 0.0
      %1670 = vadd.xlane.f32.xlu0 %v1669
      %v1671 = vpop.xlane.xlu0 %1670
      %v1672 = vrcp.pop %v1665
      %v1673 = vrcp.pop %v1668
      %v1674 = vrcp.pop %v1671
      %v1675 = vmul.f32 %v1658, %v1672
      %v1676 = vmul.f32 %v1660, %v1673
      %v1677 = vmul.f32 %v1662, %v1674
      %v1678 = vpack.c.bf16 %v1676, %v1675
      %v1679 = vpack.c.bf16 %v1677, %v1677
      %v1680 = vpack.c.bf16 %v1568, %v1565
      %v1681 = vpack.c.bf16 %v1573, %v1573
      %v1683 = vsel %vm752, %v1678, 0
      %v1686 = vsel %vm752, %v1679, 0
      %v1689 = vand.u32 %v1681, %v799
      %1691 = vmatprep.subr.bf16.mxu0 0
      %1692 = vmatpush1.bf16.msra.mxu0 0
      %1693 = vmatprep.subr.bf16.mxu0 0
      %1694 = vmatpush1.bf16.msra.mxu0 0
      %1695 = vmatprep.subr.bf16.mxu0 0
      %1696 = vmatpush1.bf16.msra.mxu0 0
      %1697 = vmatprep.subr.bf16.mxu0 0
      %1698 = vmatpush1.bf16.msra.mxu0 0
      %1699 = vmatprep.subr.bf16.mxu0 0
      %1700 = vmatpush1.bf16.msra.mxu0 0
      %1701 = vmatprep.subr.bf16.mxu0 0
      %1702 = vmatpush1.bf16.msra.mxu0 0
      %1703 = vmatprep.subr.bf16.mxu0 0
      %1704 = vmatpush1.bf16.msra.mxu0 %v1689
      %1705 = vmatprep.subr.bf16.mxu0 0
      %1706 = vmatpush1.bf16.msra.mxu0 %v1680
      %1707 = vmatprep.subr.bf16.mxu0 0
      %1708 = vmatpush2.bf16.msra.mxu0 0
      %1709 = vmatprep.subr.bf16.mxu0 0
      %1710 = vmatpush2.bf16.msra.mxu0 0
      %1711 = vmatprep.subr.bf16.mxu0 0
      %1712 = vmatpush2.bf16.msra.mxu0 0
      %1713 = vmatprep.subr.bf16.mxu0 0
      %1714 = vmatpush2.bf16.msra.mxu0 0
      %1715 = vmatprep.subr.bf16.mxu0 0
      %1716 = vmatpush2.bf16.msra.mxu0 0
      %1717 = vmatprep.subr.bf16.mxu0 0
      %1718 = vmatpush2.bf16.msra.mxu0 0
      %1719 = vmatprep.subr.bf16.mxu0 0
      %1720 = vmatpush2.bf16.msra.mxu0 0
      %1721 = vmatprep.subr.bf16.mxu0 0
      %1722 = vmatpush2.bf16.msra.mxu0 0
      %1723 = vmatprep.mubr.bf16.mxu0 0
      %1724 = vmatmul.mubr.bf16.gmra.mxu0 %v1683
      %v1725 = vpop.f32.mrf.mxu0
      %v1726 = vadd.f32 0.0, %v1725
      %v1727 = vpop.f32.mrf.mxu0
      %v1728 = vpop.f32.mrf.mxu0
      %v1729 = vadd.f32 0.0, %v1728
      %v1730 = vpop.f32.mrf.mxu0
      %1731 = vmatprep.mubr.bf16.mxu0 0
      %1732 = vmatmul.mubr.bf16.gmra.mxu0 %v1686
      %v1733 = vpop.f32.mrf.mxu0
      %v1734 = vadd.f32 0.0, %v1733
      %v1735 = vpop.f32.mrf.mxu0
      %v1736 = vpop.f32.mrf.mxu0
      %v1737 = vpop.f32.mrf.mxu0
      %1738 = vdwg.mxu0
      %v1739 = vpack.c.bf16 %v1729, %v1726
      %v1740 = vpack.c.bf16 %v1734, %v1734
      %s1741 = scalar_lea.vmem %s9, 8
      %v1742 = vld [vmem:[%s1741] sm:$0xf]
      %v1744 = vsel %vm688, %v1739, 0
      %v1747 = vsel %vm688, %v1740, 0
      %v1750 = vsel %vm860, %v1742, 0
      %1752 = vmatprep.subr.bf16.mxu0 0
      %1753 = vmatpush1.bf16.msra.mxu0 0
      %1754 = vmatprep.subr.bf16.mxu0 0
      %1755 = vmatpush1.bf16.msra.mxu0 0
      %1756 = vmatprep.subr.bf16.mxu0 0
      %1757 = vmatpush1.bf16.msra.mxu0 0
      %1758 = vmatprep.subr.bf16.mxu0 0
      %1759 = vmatpush1.bf16.msra.mxu0 0
      %1760 = vmatprep.subr.bf16.mxu0 0
      %1761 = vmatpush1.bf16.msra.mxu0 0
      %1762 = vmatprep.subr.bf16.mxu0 0
      %1763 = vmatpush1.bf16.msra.mxu0 0
      %1764 = vmatprep.subr.bf16.mxu0 0
      %1765 = vmatpush1.bf16.msra.mxu0 0
      %1766 = vmatprep.subr.bf16.mxu0 0
      %1767 = vmatpush1.bf16.msra.mxu0 %v1750
      %1768 = vmatprep.subr.bf16.mxu0 0
      %1769 = vmatpush2.bf16.msra.mxu0 0
      %1770 = vmatprep.subr.bf16.mxu0 0
      %1771 = vmatpush2.bf16.msra.mxu0 0
      %1772 = vmatprep.subr.bf16.mxu0 0
      %1773 = vmatpush2.bf16.msra.mxu0 0
      %1774 = vmatprep.subr.bf16.mxu0 0
      %1775 = vmatpush2.bf16.msra.mxu0 0
      %1776 = vmatprep.subr.bf16.mxu0 0
      %1777 = vmatpush2.bf16.msra.mxu0 0
      %1778 = vmatprep.subr.bf16.mxu0 0
      %1779 = vmatpush2.bf16.msra.mxu0 0
      %1780 = vmatprep.subr.bf16.mxu0 0
      %1781 = vmatpush2.bf16.msra.mxu0 0
      %1782 = vmatprep.subr.bf16.mxu0 0
      %1783 = vmatpush2.bf16.msra.mxu0 0
      %1784 = vmatprep.mubr.bf16.mxu0 0
      %1785 = vmatmul.mubr.bf16.gmra.mxu0 %v1744
      %v1786 = vpop.f32.mrf.mxu0
      %v1787 = vadd.f32 0.0, %v1786
      %v1788 = vpop.f32.mrf.mxu0
      %v1789 = vpop.f32.mrf.mxu0
      %v1790 = vadd.f32 0.0, %v1789
      %v1791 = vpop.f32.mrf.mxu0
      %1792 = vmatprep.mubr.bf16.mxu0 0
      %1793 = vmatmul.mubr.bf16.gmra.mxu0 %v1747
      %v1794 = vpop.f32.mrf.mxu0
      %v1795 = vadd.f32 0.0, %v1794
      %v1796 = vpop.f32.mrf.mxu0
      %v1797 = vpop.f32.mrf.mxu0
      %v1798 = vpop.f32.mrf.mxu0
      %1799 = vdwg.mxu0
      %v1800 = vadd.f32 %v1356, %v1787
      %v1801 = vadd.f32 %v1357, %v1790
      %v1802 = vadd.f32 %v1358, %v1795
      %s1803 = scalar_lea.vmem %s3, 48
      %v1804 = vld [vmem:[%s1803] sm:$0xf]
      %v1805 = vld [vmem:[%s1803 + $0x4] sm:$0xf]
      %v1806 = vld [vmem:[%s1803 + $0x8] sm:$0xf]
      %v1807 = vld [vmem:[%s1803 + $0xc] sm:$0xf]
      %s1808 = scalar_lea.vmem %s6, 3
      %v1809 = vld [vmem:[%s1808] sm:$0x1]
      %v1811 = vlaneseq
      %v1812 = vshrl.u32 %v1811, 7
      %v1813 = vsub.s32 0, %v1812
      %v1814 = vrot.slane %v1809, %v1813
      %v1820 = vunpack.c.l.b16 %v1804
      %v1821 = vunpack.c.l.b16 %v1805
      %v1822 = vunpack.c.l.b16 %v1806
      %v1823 = vunpack.c.l.b16 %v1807
      %v1824 = vpack.c.b16 %v1821, %v1820
      %v1825 = vpack.c.b16 %v1823, %v1822
      %1828 = vmatprep.subr.bf16.mxu0 0
      %1829 = vmatpush1.bf16.msra.mxu0 0
      %1830 = vmatprep.subr.bf16.mxu0 0
      %1831 = vmatpush1.bf16.msra.mxu0 0
      %1832 = vmatprep.subr.bf16.mxu0 0
      %1833 = vmatpush1.bf16.msra.mxu0 0
      %1834 = vmatprep.subr.bf16.mxu0 0
      %1835 = vmatpush1.bf16.msra.mxu0 0
      %1836 = vmatprep.subr.bf16.mxu0 0
      %1837 = vmatpush1.bf16.msra.mxu0 0
      %1838 = vmatprep.subr.bf16.mxu0 0
      %1839 = vmatpush1.bf16.msra.mxu0 0
      %1840 = vmatprep.subr.bf16.mxu0 0
      %1841 = vmatpush1.bf16.msra.mxu0 %v1825
      %1842 = vmatprep.subr.bf16.mxu0 0
      %1843 = vmatpush1.bf16.msra.mxu0 %v1824
      %1844 = vmatprep.subr.bf16.mxu0 0
      %1845 = vmatpush2.bf16.msra.mxu0 0
      %1846 = vmatprep.subr.bf16.mxu0 0
      %1847 = vmatpush2.bf16.msra.mxu0 0
      %1848 = vmatprep.subr.bf16.mxu0 0
      %1849 = vmatpush2.bf16.msra.mxu0 0
      %1850 = vmatprep.subr.bf16.mxu0 0
      %1851 = vmatpush2.bf16.msra.mxu0 0
      %1852 = vmatprep.subr.bf16.mxu0 0
      %1853 = vmatpush2.bf16.msra.mxu0 0
      %1854 = vmatprep.subr.bf16.mxu0 0
      %1855 = vmatpush2.bf16.msra.mxu0 0
      %1856 = vmatprep.subr.bf16.mxu0 0
      %1857 = vmatpush2.bf16.msra.mxu0 0
      %1858 = vmatprep.subr.bf16.mxu0 0
      %1859 = vmatpush2.bf16.msra.mxu0 0
      %1860 = vmatprep.mubr.bf16.mxu0 0
      %1861 = vmatmul.mubr.bf16.gmra.mxu0 %v489
      %v1862 = vpop.f32.mrf.mxu0
      %v1863 = vadd.f32 %v1814, %v1862
      %v1864 = vpop.f32.mrf.mxu0
      %v1865 = vpop.f32.mrf.mxu0
      %v1866 = vadd.f32 %v1814, %v1865
      %v1867 = vpop.f32.mrf.mxu0
      %1868 = vmatprep.mubr.bf16.mxu0 0
      %1869 = vmatmul.mubr.bf16.gmra.mxu0 %v492
      %v1870 = vpop.f32.mrf.mxu0
      %v1871 = vadd.f32 %v1814, %v1870
      %v1872 = vpop.f32.mrf.mxu0
      %v1873 = vpop.f32.mrf.mxu0
      %v1874 = vpop.f32.mrf.mxu0
      %1875 = vdwg.mxu0
      %s1876 = scalar_lea.vmem %s4, 48
      %v1877 = vld [vmem:[%s1876] sm:$0xf]
      %v1878 = vld [vmem:[%s1876 + $0x4] sm:$0xf]
      %v1879 = vld [vmem:[%s1876 + $0x8] sm:$0xf]
      %v1880 = vld [vmem:[%s1876 + $0xc] sm:$0xf]
      %s1881 = scalar_lea.vmem %s7, 3
      %v1882 = vld [vmem:[%s1881] sm:$0x1]
      %v1884 = vlaneseq
      %v1885 = vshrl.u32 %v1884, 7
      %v1886 = vsub.s32 0, %v1885
      %v1887 = vrot.slane %v1882, %v1886
      %v1893 = vunpack.c.l.b16 %v1877
      %v1894 = vunpack.c.l.b16 %v1878
      %v1895 = vunpack.c.l.b16 %v1879
      %v1896 = vunpack.c.l.b16 %v1880
      %v1897 = vpack.c.b16 %v1894, %v1893
      %v1898 = vpack.c.b16 %v1896, %v1895
      %1901 = vmatprep.subr.bf16.mxu0 0
      %1902 = vmatpush1.bf16.msra.mxu0 0
      %1903 = vmatprep.subr.bf16.mxu0 0
      %1904 = vmatpush1.bf16.msra.mxu0 0
      %1905 = vmatprep.subr.bf16.mxu0 0
      %1906 = vmatpush1.bf16.msra.mxu0 0
      %1907 = vmatprep.subr.bf16.mxu0 0
      %1908 = vmatpush1.bf16.msra.mxu0 0
      %1909 = vmatprep.subr.bf16.mxu0 0
      %1910 = vmatpush1.bf16.msra.mxu0 0
      %1911 = vmatprep.subr.bf16.mxu0 0
      %1912 = vmatpush1.bf16.msra.mxu0 0
      %1913 = vmatprep.subr.bf16.mxu0 0
      %1914 = vmatpush1.bf16.msra.mxu0 %v1898
      %1915 = vmatprep.subr.bf16.mxu0 0
      %1916 = vmatpush1.bf16.msra.mxu0 %v1897
      %1917 = vmatprep.subr.bf16.mxu0 0
      %1918 = vmatpush2.bf16.msra.mxu0 0
      %1919 = vmatprep.subr.bf16.mxu0 0
      %1920 = vmatpush2.bf16.msra.mxu0 0
      %1921 = vmatprep.subr.bf16.mxu0 0
      %1922 = vmatpush2.bf16.msra.mxu0 0
      %1923 = vmatprep.subr.bf16.mxu0 0
      %1924 = vmatpush2.bf16.msra.mxu0 0
      %1925 = vmatprep.subr.bf16.mxu0 0
      %1926 = vmatpush2.bf16.msra.mxu0 0
      %1927 = vmatprep.subr.bf16.mxu0 0
      %1928 = vmatpush2.bf16.msra.mxu0 0
      %1929 = vmatprep.subr.bf16.mxu0 0
      %1930 = vmatpush2.bf16.msra.mxu0 0
      %1931 = vmatprep.subr.bf16.mxu0 0
      %1932 = vmatpush2.bf16.msra.mxu0 0
      %1933 = vmatprep.mubr.bf16.mxu0 0
      %1934 = vmatmul.mubr.bf16.gmra.mxu0 %v489
      %v1935 = vpop.f32.mrf.mxu0
      %v1936 = vadd.f32 %v1887, %v1935
      %v1937 = vpop.f32.mrf.mxu0
      %v1938 = vpop.f32.mrf.mxu0
      %v1939 = vadd.f32 %v1887, %v1938
      %v1940 = vpop.f32.mrf.mxu0
      %1941 = vmatprep.mubr.bf16.mxu0 0
      %1942 = vmatmul.mubr.bf16.gmra.mxu0 %v492
      %v1943 = vpop.f32.mrf.mxu0
      %v1944 = vadd.f32 %v1887, %v1943
      %v1945 = vpop.f32.mrf.mxu0
      %v1946 = vpop.f32.mrf.mxu0
      %v1947 = vpop.f32.mrf.mxu0
      %1948 = vdwg.mxu0
      %s1949 = scalar_lea.vmem %s5, 48
      %v1950 = vld [vmem:[%s1949] sm:$0xf]
      %v1951 = vld [vmem:[%s1949 + $0x4] sm:$0xf]
      %v1952 = vld [vmem:[%s1949 + $0x8] sm:$0xf]
      %v1953 = vld [vmem:[%s1949 + $0xc] sm:$0xf]
      %s1954 = scalar_lea.vmem %s8, 3
      %v1955 = vld [vmem:[%s1954] sm:$0x1]
      %v1957 = vlaneseq
      %v1958 = vshrl.u32 %v1957, 7
      %v1959 = vsub.s32 0, %v1958
      %v1960 = vrot.slane %v1955, %v1959
      %v1966 = vunpack.c.l.b16 %v1950
      %v1967 = vunpack.c.l.b16 %v1951
      %v1968 = vunpack.c.l.b16 %v1952
      %v1969 = vunpack.c.l.b16 %v1953
      %v1970 = vpack.c.b16 %v1967, %v1966
      %v1971 = vpack.c.b16 %v1969, %v1968
      %1974 = vmatprep.subr.bf16.mxu0 0
      %1975 = vmatpush1.bf16.msra.mxu0 0
      %1976 = vmatprep.subr.bf16.mxu0 0
      %1977 = vmatpush1.bf16.msra.mxu0 0
      %1978 = vmatprep.subr.bf16.mxu0 0
      %1979 = vmatpush1.bf16.msra.mxu0 0
      %1980 = vmatprep.subr.bf16.mxu0 0
      %1981 = vmatpush1.bf16.msra.mxu0 0
      %1982 = vmatprep.subr.bf16.mxu0 0
      %1983 = vmatpush1.bf16.msra.mxu0 0
      %1984 = vmatprep.subr.bf16.mxu0 0
      %1985 = vmatpush1.bf16.msra.mxu0 0
      %1986 = vmatprep.subr.bf16.mxu0 0
      %1987 = vmatpush1.bf16.msra.mxu0 %v1971
      %1988 = vmatprep.subr.bf16.mxu0 0
      %1989 = vmatpush1.bf16.msra.mxu0 %v1970
      %1990 = vmatprep.subr.bf16.mxu0 0
      %1991 = vmatpush2.bf16.msra.mxu0 0
      %1992 = vmatprep.subr.bf16.mxu0 0
      %1993 = vmatpush2.bf16.msra.mxu0 0
      %1994 = vmatprep.subr.bf16.mxu0 0
      %1995 = vmatpush2.bf16.msra.mxu0 0
      %1996 = vmatprep.subr.bf16.mxu0 0
      %1997 = vmatpush2.bf16.msra.mxu0 0
      %1998 = vmatprep.subr.bf16.mxu0 0
      %1999 = vmatpush2.bf16.msra.mxu0 0
      %2000 = vmatprep.subr.bf16.mxu0 0
      %2001 = vmatpush2.bf16.msra.mxu0 0
      %2002 = vmatprep.subr.bf16.mxu0 0
      %2003 = vmatpush2.bf16.msra.mxu0 0
      %2004 = vmatprep.subr.bf16.mxu0 0
      %2005 = vmatpush2.bf16.msra.mxu0 0
      %2006 = vmatprep.mubr.bf16.mxu0 0
      %2007 = vmatmul.mubr.bf16.gmra.mxu0 %v489
      %v2008 = vpop.f32.mrf.mxu0
      %v2009 = vadd.f32 %v1960, %v2008
      %v2010 = vpop.f32.mrf.mxu0
      %v2011 = vpop.f32.mrf.mxu0
      %v2012 = vadd.f32 %v1960, %v2011
      %v2013 = vpop.f32.mrf.mxu0
      %2014 = vmatprep.mubr.bf16.mxu0 0
      %2015 = vmatmul.mubr.bf16.gmra.mxu0 %v492
      %v2016 = vpop.f32.mrf.mxu0
      %v2017 = vadd.f32 %v1960, %v2016
      %v2018 = vpop.f32.mrf.mxu0
      %v2019 = vpop.f32.mrf.mxu0
      %v2020 = vpop.f32.mrf.mxu0
      %2021 = vdwg.mxu0
      %v2022 = vpack.c.bf16 %v1866, %v1863
      %v2023 = vpack.c.bf16 %v1871, %v1871
      %v2024 = vpack.c.bf16 %v1939, %v1936
      %v2025 = vpack.c.bf16 %v1944, %v1944
      %v2027 = vsel %vm688, %v2022, 0
      %v2030 = vsel %vm688, %v2023, 0
      %v2033 = vsel %vm688, %v2024, 0
      %v2036 = vsel %vm688, %v2025, 0
      %2038 = vmatprep.subr.bf16.mxu0 0
      %2039 = vmatpush1.bf16.xpose.msra.mxu0 0
      %2040 = vmatprep.subr.bf16.mxu0 0
      %2041 = vmatpush1.bf16.xpose.msra.mxu0 0
      %2042 = vmatprep.subr.bf16.mxu0 0
      %2043 = vmatpush1.bf16.xpose.msra.mxu0 0
      %2044 = vmatprep.subr.bf16.mxu0 0
      %2045 = vmatpush1.bf16.xpose.msra.mxu0 0
      %2046 = vmatprep.subr.bf16.mxu0 0
      %2047 = vmatpush1.bf16.xpose.msra.mxu0 0
      %2048 = vmatprep.subr.bf16.mxu0 0
      %2049 = vmatpush1.bf16.xpose.msra.mxu0 0
      %2050 = vmatprep.subr.bf16.mxu0 0
      %2051 = vmatpush1.bf16.xpose.msra.mxu0 %v2036
      %2052 = vmatprep.subr.bf16.mxu0 0
      %2053 = vmatpush1.bf16.xpose.msra.mxu0 %v2033
      %2054 = vmatprep.subr.bf16.mxu0 0
      %2055 = vmatpush2.bf16.xpose.msra.mxu0 0
      %2056 = vmatprep.subr.bf16.mxu0 0
      %2057 = vmatpush2.bf16.xpose.msra.mxu0 0
      %2058 = vmatprep.subr.bf16.mxu0 0
      %2059 = vmatpush2.bf16.xpose.msra.mxu0 0
      %2060 = vmatprep.subr.bf16.mxu0 0
      %2061 = vmatpush2.bf16.xpose.msra.mxu0 0
      %2062 = vmatprep.subr.bf16.mxu0 0
      %2063 = vmatpush2.bf16.xpose.msra.mxu0 0
      %2064 = vmatprep.subr.bf16.mxu0 0
      %2065 = vmatpush2.bf16.xpose.msra.mxu0 0
      %2066 = vmatprep.subr.bf16.mxu0 0
      %2067 = vmatpush2.bf16.xpose.msra.mxu0 0
      %2068 = vmatprep.subr.bf16.mxu0 0
      %2069 = vmatpush2.bf16.xpose.msra.mxu0 0
      %2070 = vmatprep.mubr.bf16.mxu0 0
      %2071 = vmatmul.mubr.bf16.gmra.mxu0 %v2027
      %v2072 = vpop.f32.mrf.mxu0
      %v2073 = vadd.f32 0.0, %v2072
      %v2074 = vpop.f32.mrf.mxu0
      %v2075 = vpop.f32.mrf.mxu0
      %v2076 = vadd.f32 0.0, %v2075
      %v2077 = vpop.f32.mrf.mxu0
      %2078 = vmatprep.mubr.bf16.mxu0 0
      %2079 = vmatmul.mubr.bf16.gmra.mxu0 %v2030
      %v2080 = vpop.f32.mrf.mxu0
      %v2081 = vadd.f32 0.0, %v2080
      %v2082 = vpop.f32.mrf.mxu0
      %v2083 = vpop.f32.mrf.mxu0
      %v2084 = vpop.f32.mrf.mxu0
      %2085 = vdwg.mxu0
      %v2086 = vmul.f32 %v2073, 0.35355338
      %v2087 = vmul.f32 %v2076, 0.35355338
      %v2088 = vmul.f32 %v2081, 0.35355338
      %v2089 = vsel %vm752, %v2086, -inf
      %2090 = vmax.xlane.f32.xlu0 %v2089
      %v2091 = vpop.xlane.xlu0 %2090
      %v2092 = vsel %vm752, %v2087, -inf
      %2093 = vmax.xlane.f32.xlu0 %v2092
      %v2094 = vpop.xlane.xlu0 %2093
      %v2095 = vsel %vm759, %v2088, -inf
      %2096 = vmax.xlane.f32.xlu0 %v2095
      %v2097 = vpop.xlane.xlu0 %2096
      %v2098 = vsub.f32 %v2086, %v2091
      %v2099 = vsub.f32 %v2087, %v2094
      %v2100 = vsub.f32 %v2088, %v2097
      %v2101 = vmul.f32 %v2098, 1.442695
      %v2102 = vpow.pop %v2101
      %v2103 = vmul.f32 %v2099, 1.442695
      %v2104 = vpow.pop %v2103
      %v2105 = vmul.f32 %v2100, 1.442695
      %v2106 = vpow.pop %v2105
      %v2107 = vsel %vm752, %v2102, 0.0
      %2108 = vadd.xlane.f32.xlu0 %v2107
      %v2109 = vpop.xlane.xlu0 %2108
      %v2110 = vsel %vm752, %v2104, 0.0
      %2111 = vadd.xlane.f32.xlu0 %v2110
      %v2112 = vpop.xlane.xlu0 %2111
      %v2113 = vsel %vm759, %v2106, 0.0
      %2114 = vadd.xlane.f32.xlu0 %v2113
      %v2115 = vpop.xlane.xlu0 %2114
      %v2116 = vrcp.pop %v2109
      %v2117 = vrcp.pop %v2112
      %v2118 = vrcp.pop %v2115
      %v2119 = vmul.f32 %v2102, %v2116
      %v2120 = vmul.f32 %v2104, %v2117
      %v2121 = vmul.f32 %v2106, %v2118
      %v2122 = vpack.c.bf16 %v2120, %v2119
      %v2123 = vpack.c.bf16 %v2121, %v2121
      %v2124 = vpack.c.bf16 %v2012, %v2009
      %v2125 = vpack.c.bf16 %v2017, %v2017
      %v2127 = vsel %vm752, %v2122, 0
      %v2130 = vsel %vm752, %v2123, 0
      %v2133 = vand.u32 %v2125, %v799
      %2135 = vmatprep.subr.bf16.mxu0 0
      %2136 = vmatpush1.bf16.msra.mxu0 0
      %2137 = vmatprep.subr.bf16.mxu0 0
      %2138 = vmatpush1.bf16.msra.mxu0 0
      %2139 = vmatprep.subr.bf16.mxu0 0
      %2140 = vmatpush1.bf16.msra.mxu0 0
      %2141 = vmatprep.subr.bf16.mxu0 0
      %2142 = vmatpush1.bf16.msra.mxu0 0
      %2143 = vmatprep.subr.bf16.mxu0 0
      %2144 = vmatpush1.bf16.msra.mxu0 0
      %2145 = vmatprep.subr.bf16.mxu0 0
      %2146 = vmatpush1.bf16.msra.mxu0 0
      %2147 = vmatprep.subr.bf16.mxu0 0
      %2148 = vmatpush1.bf16.msra.mxu0 %v2133
      %2149 = vmatprep.subr.bf16.mxu0 0
      %2150 = vmatpush1.bf16.msra.mxu0 %v2124
      %2151 = vmatprep.subr.bf16.mxu0 0
      %2152 = vmatpush2.bf16.msra.mxu0 0
      %2153 = vmatprep.subr.bf16.mxu0 0
      %2154 = vmatpush2.bf16.msra.mxu0 0
      %2155 = vmatprep.subr.bf16.mxu0 0
      %2156 = vmatpush2.bf16.msra.mxu0 0
      %2157 = vmatprep.subr.bf16.mxu0 0
      %2158 = vmatpush2.bf16.msra.mxu0 0
      %2159 = vmatprep.subr.bf16.mxu0 0
      %2160 = vmatpush2.bf16.msra.mxu0 0
      %2161 = vmatprep.subr.bf16.mxu0 0
      %2162 = vmatpush2.bf16.msra.mxu0 0
      %2163 = vmatprep.subr.bf16.mxu0 0
      %2164 = vmatpush2.bf16.msra.mxu0 0
      %2165 = vmatprep.subr.bf16.mxu0 0
      %2166 = vmatpush2.bf16.msra.mxu0 0
      %2167 = vmatprep.mubr.bf16.mxu0 0
      %2168 = vmatmul.mubr.bf16.gmra.mxu0 %v2127
      %v2169 = vpop.f32.mrf.mxu0
      %v2170 = vadd.f32 0.0, %v2169
      %v2171 = vpop.f32.mrf.mxu0
      %v2172 = vpop.f32.mrf.mxu0
      %v2173 = vadd.f32 0.0, %v2172
      %v2174 = vpop.f32.mrf.mxu0
      %2175 = vmatprep.mubr.bf16.mxu0 0
      %2176 = vmatmul.mubr.bf16.gmra.mxu0 %v2130
      %v2177 = vpop.f32.mrf.mxu0
      %v2178 = vadd.f32 0.0, %v2177
      %v2179 = vpop.f32.mrf.mxu0
      %v2180 = vpop.f32.mrf.mxu0
      %v2181 = vpop.f32.mrf.mxu0
      %2182 = vdwg.mxu0
      %v2183 = vpack.c.bf16 %v2173, %v2170
      %v2184 = vpack.c.bf16 %v2178, %v2178
      %s2185 = scalar_lea.vmem %s9, 12
      %v2186 = vld [vmem:[%s2185] sm:$0xf]
      %v2188 = vsel %vm688, %v2183, 0
      %v2191 = vsel %vm688, %v2184, 0
      %v2194 = vsel %vm860, %v2186, 0
      %2196 = vmatprep.subr.bf16.mxu0 0
      %2197 = vmatpush1.bf16.msra.mxu0 0
      %2198 = vmatprep.subr.bf16.mxu0 0
      %2199 = vmatpush1.bf16.msra.mxu0 0
      %2200 = vmatprep.subr.bf16.mxu0 0
      %2201 = vmatpush1.bf16.msra.mxu0 0
      %2202 = vmatprep.subr.bf16.mxu0 0
      %2203 = vmatpush1.bf16.msra.mxu0 0
      %2204 = vmatprep.subr.bf16.mxu0 0
      %2205 = vmatpush1.bf16.msra.mxu0 0
      %2206 = vmatprep.subr.bf16.mxu0 0
      %2207 = vmatpush1.bf16.msra.mxu0 0
      %2208 = vmatprep.subr.bf16.mxu0 0
      %2209 = vmatpush1.bf16.msra.mxu0 0
      %2210 = vmatprep.subr.bf16.mxu0 0
      %2211 = vmatpush1.bf16.msra.mxu0 %v2194
      %2212 = vmatprep.subr.bf16.mxu0 0
      %2213 = vmatpush2.bf16.msra.mxu0 0
      %2214 = vmatprep.subr.bf16.mxu0 0
      %2215 = vmatpush2.bf16.msra.mxu0 0
      %2216 = vmatprep.subr.bf16.mxu0 0
      %2217 = vmatpush2.bf16.msra.mxu0 0
      %2218 = vmatprep.subr.bf16.mxu0 0
      %2219 = vmatpush2.bf16.msra.mxu0 0
      %2220 = vmatprep.subr.bf16.mxu0 0
      %2221 = vmatpush2.bf16.msra.mxu0 0
      %2222 = vmatprep.subr.bf16.mxu0 0
      %2223 = vmatpush2.bf16.msra.mxu0 0
      %2224 = vmatprep.subr.bf16.mxu0 0
      %2225 = vmatpush2.bf16.msra.mxu0 0
      %2226 = vmatprep.subr.bf16.mxu0 0
      %2227 = vmatpush2.bf16.msra.mxu0 0
      %2228 = vmatprep.mubr.bf16.mxu0 0
      %2229 = vmatmul.mubr.bf16.gmra.mxu0 %v2188
      %v2230 = vpop.f32.mrf.mxu0
      %v2231 = vadd.f32 0.0, %v2230
      %v2232 = vpop.f32.mrf.mxu0
      %v2233 = vpop.f32.mrf.mxu0
      %v2234 = vadd.f32 0.0, %v2233
      %v2235 = vpop.f32.mrf.mxu0
      %2236 = vmatprep.mubr.bf16.mxu0 0
      %2237 = vmatmul.mubr.bf16.gmra.mxu0 %v2191
      %v2238 = vpop.f32.mrf.mxu0
      %v2239 = vadd.f32 0.0, %v2238
      %v2240 = vpop.f32.mrf.mxu0
      %v2241 = vpop.f32.mrf.mxu0
      %v2242 = vpop.f32.mrf.mxu0
      %2243 = vdwg.mxu0
      %v2244 = vadd.f32 %v1800, %v2231
      %v2245 = vadd.f32 %v1801, %v2234
      %v2246 = vadd.f32 %v1802, %v2239
      %2247 = vst.msk [vmem:[%s386] sm:$0xff] %vm391, %v2244
      %2248 = vst.msk [vmem:[%s386 + $0x8] sm:$0xff] %vm391, %v2245
      %2249 = vst.msk [vmem:[%s386 + $0x10] sm:$0x1] %vm398, %v2246
      %p2250 = scmp.lt.s32.totalorder %s22, 1
      %s2251 = scalar_select %p2250, %s22, 1
      %s2252 = smul.addr %s2251, 3
      %s2253 = smul.addr %s2252, 8
      %s2254 = scalar_lea.vmem %s11, %s2253
      // Predicated region
      $region65: #{custom_model_forward.7} parent=63 // pred_check
        %p2255 = pneg %p276
      $region66: #{custom_model_forward.7} parent=63 // pred_check_branch
        %2257 = sbr.rel (%p2255) target = $region68
      $region67: #{custom_model_forward.7} parent=63 // pred_region
        _
      $region68: #{custom_model_forward.7} parent=63 // pred_fallthru
        _
    $region64: #{custom_model_forward.7} parent=5 // pred_fallthru
      _
    %p2258 = scmp.le.s32.totalorder 2, %s17
    // Predicated region
    $region69: #{custom_model_forward.7} parent=5 // pred_check
      %p2259 = pneg %p2258
    $region70: #{custom_model_forward.7} parent=5 // pred_check_branch
      %2261 = sbr.rel (%p2259) target = $region72
    $region71: #{custom_model_forward.7} parent=5 // pred_region
      %s2262 = ssub.s32 %s17, 2
      // Predicated region
      $region73: #{custom_model_forward.7} parent=71 // pred_check
        %p2263 = pneg %p282
      $region74: #{custom_model_forward.7} parent=71 // pred_check_branch
        %2265 = sbr.rel (%p2263) target = $region76
      $region75: #{custom_model_forward.7} parent=71 // pred_region
        %p2266 = scmp.lt.s32.totalorder %s23, 1
        %s2267 = scalar_select %p2266, %s23, 1
        %s2268 = smul.addr %s2267, 3
        %s2269 = smul.addr %s2268, 8
        %s2270 = scalar_lea.vmem %s11, %s2269
      $region76: #{custom_model_forward.7} parent=71 // pred_fallthru
        _
    $region72: #{custom_model_forward.7} parent=5 // pred_fallthru
      _
  $region6: #{custom_model_forward.7} parent=0 // loop_footer
    %s21 = sadd.s32 1, %s17
  $region7: #{custom_model_forward.7} parent=0 // loop_footer_branch
    %16 = sbr.rel target = $region3
  $region8: #{custom_model_forward.7} parent=0 // loop_exit
    _

// kernel: custom_model_forward.11
$region0: #{custom_model_forward.11}
  #allocation0 [shape = 'u32[]', space=smem, size = 0x4, offset = 0x4, fixed_abs, tag = 'smem constant byte address 0x4 - core index']
  #allocation1 [shape = 'u32[144,128]{1,0:T(1,128)}', space=vmem, size = 0x12000, scoped, tag = 'internal scratch']
  #allocation2 [shape = 'f32[32,128]{1,0:T(8,128)}', space=vmem, size = 0x4000, scoped, tag = 'scratch operand']
  %s0 = inlined_call_operand.vmem [shape: f32[32,32], index: 0, kind: input, shape index: {}]
  %s1 = inlined_call_operand.vmem [shape: bf16[32,128], index: 1, kind: input, shape index: {}]
  %s2 = inlined_call_operand.vmem [shape: f32[1,128], index: 2, kind: input, shape index: {}]
  %s3 = inlined_call_operand.vmem [shape: f32[32,128], index: 3, kind: output, shape index: {}]
  %s4 = sld [smem:[#allocation0]]
  $region30: #{custom_model_forward.11} parent=0
    _
  %s6 = ssub.s32 1, %s4
  %s7 = scalar_select 0, %s6, %s4
  // Predicated region
  $region2: #{custom_model_forward.11} parent=0 // pred_check
    _
  $region3: #{custom_model_forward.11} parent=0 // pred_check_branch
    %9 = sbr.rel (0) target = $region5
  $region4: #{custom_model_forward.11} parent=0 // pred_region
    _
  $region5: #{custom_model_forward.11} parent=0 // pred_fallthru
    _
  // Predicated region
  $region6: #{custom_model_forward.11} parent=0 // pred_check
    _
  $region7: #{custom_model_forward.11} parent=0 // pred_check_branch
    %11 = sbr.rel (0) target = $region9
  $region8: #{custom_model_forward.11} parent=0 // pred_region
    _
  $region9: #{custom_model_forward.11} parent=0 // pred_fallthru
    _
  // Predicated region
  $region10: #{custom_model_forward.11} parent=0 // pred_check
    _
  $region11: #{custom_model_forward.11} parent=0 // pred_check_branch
    %13 = sbr.rel (0) target = $region13
  $region12: #{custom_model_forward.11} parent=0 // pred_region
    _
  $region13: #{custom_model_forward.11} parent=0 // pred_fallthru
    _
  %p15 = scmp.eq.s32.totalorder 0, 0
  // Predicated region
  $region14: #{custom_model_forward.11} parent=0 // pred_check
    %p16 = pneg %p15
  $region15: #{custom_model_forward.11} parent=0 // pred_check_branch
    %18 = sbr.rel (%p16) target = $region17
  $region16: #{custom_model_forward.11} parent=0 // pred_region
    %19 = vst [vmem:[#allocation2] sm:$0xff] 0.0
    %20 = vst [vmem:[#allocation2 + $0x8] sm:$0xff] 0.0
    %21 = vst [vmem:[#allocation2 + $0x10] sm:$0xff] 0.0
    %22 = vst [vmem:[#allocation2 + $0x18] sm:$0xff] 0.0
  $region17: #{custom_model_forward.11} parent=0 // pred_fallthru
    _
  %v23 = vld [vmem:[#allocation2] sm:$0xff]
  %v24 = vld [vmem:[#allocation2 + $0x8] sm:$0xff]
  %v25 = vld [vmem:[#allocation2 + $0x10] sm:$0xff]
  %v26 = vld [vmem:[#allocation2 + $0x18] sm:$0xff]
  %v27 = vld [vmem:[%s0] sm:$0xff]
  %v28 = vld [vmem:[%s0 + $0x8] sm:$0xff]
  %v29 = vld [vmem:[%s0 + $0x10] sm:$0xff]
  %v30 = vld [vmem:[%s0 + $0x18] sm:$0xff]
  %v31 = vpack.c.bf16 %v28, %v27
  %v32 = vpack.c.bf16 %v30, %v29
  %v33 = vld [vmem:[%s1] sm:$0xf]
  %v34 = vld [vmem:[%s1 + $0x4] sm:$0xf]
  %v35 = vld [vmem:[%s1 + $0x8] sm:$0xf]
  %v36 = vld [vmem:[%s1 + $0xc] sm:$0xf]
  %v41 = vunpack.c.l.b16 %v33
  %v42 = vunpack.c.l.b16 %v34
  %v43 = vunpack.c.l.b16 %v35
  %v44 = vunpack.c.l.b16 %v36
  %v45 = vpack.c.b16 %v42, %v41
  %v46 = vpack.c.b16 %v44, %v43
  %vm49 = vcmask 261120
  %v51 = vsel %vm49, %v31, 0
  %v54 = vsel %vm49, %v32, 0
  %56 = vmatprep.subr.bf16.mxu0 0
  %57 = vmatpush1.bf16.msra.mxu0 0
  %58 = vmatprep.subr.bf16.mxu0 0
  %59 = vmatpush1.bf16.msra.mxu0 0
  %60 = vmatprep.subr.bf16.mxu0 0
  %61 = vmatpush1.bf16.msra.mxu0 0
  %62 = vmatprep.subr.bf16.mxu0 0
  %63 = vmatpush1.bf16.msra.mxu0 0
  %64 = vmatprep.subr.bf16.mxu0 0
  %65 = vmatpush1.bf16.msra.mxu0 0
  %66 = vmatprep.subr.bf16.mxu0 0
  %67 = vmatpush1.bf16.msra.mxu0 0
  %68 = vmatprep.subr.bf16.mxu0 0
  %69 = vmatpush1.bf16.msra.mxu0 %v46
  %70 = vmatprep.subr.bf16.mxu0 0
  %71 = vmatpush1.bf16.msra.mxu0 %v45
  %72 = vmatprep.subr.bf16.mxu0 0
  %73 = vmatpush2.bf16.msra.mxu0 0
  %74 = vmatprep.subr.bf16.mxu0 0
  %75 = vmatpush2.bf16.msra.mxu0 0
  %76 = vmatprep.subr.bf16.mxu0 0
  %77 = vmatpush2.bf16.msra.mxu0 0
  %78 = vmatprep.subr.bf16.mxu0 0
  %79 = vmatpush2.bf16.msra.mxu0 0
  %80 = vmatprep.subr.bf16.mxu0 0
  %81 = vmatpush2.bf16.msra.mxu0 0
  %82 = vmatprep.subr.bf16.mxu0 0
  %83 = vmatpush2.bf16.msra.mxu0 0
  %84 = vmatprep.subr.bf16.mxu0 0
  %85 = vmatpush2.bf16.msra.mxu0 0
  %86 = vmatprep.subr.bf16.mxu0 0
  %87 = vmatpush2.bf16.msra.mxu0 0
  %88 = vmatprep.mubr.bf16.mxu0 0
  %89 = vmatmul.mubr.bf16.gmra.mxu0 %v51
  %v90 = vpop.f32.mrf.mxu0
  %v91 = vadd.f32 0.0, %v90
  %v92 = vpop.f32.mrf.mxu0
  %v93 = vpop.f32.mrf.mxu0
  %v94 = vadd.f32 0.0, %v93
  %v95 = vpop.f32.mrf.mxu0
  %96 = vmatprep.mubr.bf16.mxu0 0
  %97 = vmatmul.mubr.bf16.gmra.mxu0 %v54
  %v98 = vpop.f32.mrf.mxu0
  %v99 = vadd.f32 0.0, %v98
  %v100 = vpop.f32.mrf.mxu0
  %v101 = vpop.f32.mrf.mxu0
  %v102 = vadd.f32 0.0, %v101
  %v103 = vpop.f32.mrf.mxu0
  %104 = vdwg.mxu0
  %v105 = vadd.f32 %v23, %v91
  %v106 = vadd.f32 %v24, %v94
  %v107 = vadd.f32 %v25, %v99
  %v108 = vadd.f32 %v26, %v102
  %109 = vst [vmem:[#allocation2] sm:$0xff] %v105
  %110 = vst [vmem:[#allocation2 + $0x8] sm:$0xff] %v106
  %111 = vst [vmem:[#allocation2 + $0x10] sm:$0xff] %v107
  %112 = vst [vmem:[#allocation2 + $0x18] sm:$0xff] %v108
  // Predicated region
  $region18: #{custom_model_forward.11} parent=0 // pred_check
    %p113 = pneg %p15
  $region19: #{custom_model_forward.11} parent=0 // pred_check_branch
    %115 = sbr.rel (%p113) target = $region21
  $region20: #{custom_model_forward.11} parent=0 // pred_region
    %v116 = vld [vmem:[#allocation2] sm:$0xff]
    %v117 = vld [vmem:[#allocation2 + $0x8] sm:$0xff]
    %v118 = vld [vmem:[#allocation2 + $0x10] sm:$0xff]
    %v119 = vld [vmem:[#allocation2 + $0x18] sm:$0xff]
    %v120 = vld [vmem:[%s2] sm:$0x1]
    %v122 = vlaneseq
    %v123 = vshrl.u32 %v122, 7
    %v124 = vsub.s32 0, %v123
    %v125 = vrot.slane %v120, %v124
    %v127 = vadd.f32 %v116, %v125
    %v128 = vadd.f32 %v117, %v125
    %v129 = vadd.f32 %v118, %v125
    %v130 = vadd.f32 %v119, %v125
    %131 = vst [vmem:[%s3] sm:$0xff] %v127
    %132 = vst [vmem:[%s3 + $0x8] sm:$0xff] %v128
    %133 = vst [vmem:[%s3 + $0x10] sm:$0xff] %v129
    %134 = vst [vmem:[%s3 + $0x18] sm:$0xff] %v130
  $region21: #{custom_model_forward.11} parent=0 // pred_fallthru
    _
  // Predicated region
  $region22: #{custom_model_forward.11} parent=0 // pred_check
    _
  $region23: #{custom_model_forward.11} parent=0 // pred_check_branch
    %136 = sbr.rel (0) target = $region25
  $region24: #{custom_model_forward.11} parent=0 // pred_region
    _
  $region25: #{custom_model_forward.11} parent=0 // pred_fallthru
    _
  // Predicated region
  $region26: #{custom_model_forward.11} parent=0 // pred_check
    _
  $region27: #{custom_model_forward.11} parent=0 // pred_check_branch
    %138 = sbr.rel (0) target = $region29
  $region28: #{custom_model_forward.11} parent=0 // pred_region
    _
  $region29: #{custom_model_forward.11} parent=0 // pred_fallthru
    _

</llo_original>
